<compile_context>
chip_gen: v7x
topology: tpu7x:2x2x1
jax: 0.10.0
libtpu: 0.0.40
codegen_flags: <defaults>
</compile_context>

<pallas_src>
import functools
import math

import jax
import jax.numpy as jnp
from jax.experimental import pallas as pl
from jax.experimental.pallas import tpu as pltpu

LANES = 128          # padded lane width for d_model (32) and n_features (4)
DFF = 256            # transformer dim_feedforward
_MM_DTYPE = jnp.bfloat16   # MXU operand dtype (f32 accumulate); use jnp.float32 on v5e
                           # if bit-closeness to the f32 PyTorch reference matters.

# --------------------- static slab layouts (host + kernel share these) ---------------------

_SQ_NAMES = ("lin", "se_lin", "sg", "enc0_o", "enc1_o",
             "dec_sa_o", "dec_ca_q", "dec_ca_o", "end")
_SQ = {n: i for i, n in enumerate(_SQ_NAMES)}

_WIDE_NAMES = (("conv_a", 2 * LANES), ("conv_b", 2 * LANES),
               ("enc0_qkv", 3 * LANES), ("enc0_ff1", DFF),
               ("enc1_qkv", 3 * LANES), ("enc1_ff1", DFF),
               ("dec_sa_qkv", 3 * LANES), ("dec_ca_kv", 2 * LANES),
               ("dec_ff1", DFF), ("mulv", 2 * LANES))
_WIDE = {n: (i, w) for i, (n, w) in enumerate(_WIDE_NAMES)}
_WIDE_MAX = 3 * LANES

_TALL_NAMES = ("enc0_ff2", "enc1_ff2", "dec_ff2")
_TALL = {n: i for i, n in enumerate(_TALL_NAMES)}

_BIAS_NAMES = (
    ("lin_b", LANES), ("se_lin_b", LANES), ("ba", LANES), ("bb", LANES), ("sg_b", LANES),
    ("enc0_qkv_b", 3 * LANES), ("enc0_o_b", LANES), ("enc0_ln1_g", LANES), ("enc0_ln1_b", LANES),
    ("enc0_ff1_b", DFF), ("enc0_ff2_b", LANES), ("enc0_ln2_g", LANES), ("enc0_ln2_b", LANES),
    ("enc1_qkv_b", 3 * LANES), ("enc1_o_b", LANES), ("enc1_ln1_g", LANES), ("enc1_ln1_b", LANES),
    ("enc1_ff1_b", DFF), ("enc1_ff2_b", LANES), ("enc1_ln2_g", LANES), ("enc1_ln2_b", LANES),
    ("dec_sa_qkv_b", 3 * LANES), ("dec_sa_o_b", LANES), ("dec_ln1_g", LANES), ("dec_ln1_b", LANES),
    ("dec_ca_q_b", LANES), ("dec_ca_kv_b", 2 * LANES), ("dec_ca_o_b", LANES),
    ("dec_ln2_g", LANES), ("dec_ln2_b", LANES),
    ("dec_ff1_b", DFF), ("dec_ff2_b", LANES), ("dec_ln3_g", LANES), ("dec_ln3_b", LANES),
    ("mulv_b", 2 * LANES), ("end_b", LANES))
_BIAS = {n: (i, w) for i, (n, w) in enumerate(_BIAS_NAMES)}
_BIAS_W = 3 * LANES


# ------------------------------------ fused kernel ------------------------------------

def _stad_kernel(x_ref, pe_ref, eps_ref, wsq_ref, wwide_ref, wtall_ref, bias_ref,
                 out_ref, *, d_real):
    B, T, D = x_ref.shape
    scale = 1.0 / math.sqrt(d_real)

    # ---- slab accessors (all indices/slices are static Python values) ----
    def W(name):                       # (128, 128) weight
        return wsq_ref[_SQ[name]]

    def WW(name):                      # wide weight, sliced to its real width
        i, w = _WIDE[name]
        return wwide_ref[i][:, :w]

    def WT(name):                      # (256, 128) FF2 weight
        return wtall_ref[_TALL[name]]

    def BV(name):                      # (1, width) bias / LN gamma / LN beta
        r, w = _BIAS[name]
        return bias_ref[r:r + 1, :w]

    def mm(a, w):                      # MXU matmul, bf16 operands, f32 accumulate
        return jnp.dot(a.astype(_MM_DTYPE), w.astype(_MM_DTYPE),
                       preferred_element_type=jnp.float32)

    def attn(q3, k3, v3):              # single-head attention, q3 (B,Tq,D), k3/v3 (B,Tk,D)
        s = jnp.einsum("bqd,bkd->bqk", q3.astype(_MM_DTYPE), k3.astype(_MM_DTYPE),
                       preferred_element_type=jnp.float32) * scale
        m = jnp.max(s, axis=-1, keepdims=True)
        p = jnp.exp(s - m)
        p = p * pl.reciprocal(jnp.sum(p, axis=-1, keepdims=True), approx=True)
        return jnp.einsum("bqk,bkd->bqd", p.astype(_MM_DTYPE), v3.astype(_MM_DTYPE),
                          preferred_element_type=jnp.float32)

    def layernorm(x2, gname, bname):
        # padded lanes (>= d_real) are exactly zero, so full-width sums / d_real are exact
        inv_d = 1.0 / d_real
        mean = jnp.sum(x2, axis=-1, keepdims=True) * inv_d
        var = jnp.sum(x2 * x2, axis=-1, keepdims=True) * inv_d - mean * mean
        return (x2 - mean) * jax.lax.rsqrt(var + 1e-5) * BV(gname) + BV(bname)

    # ------------------------------------ stem ------------------------------------
    x2 = x_ref[...].reshape(B * T, D)
    h2 = jnp.maximum(mm(x2, W("lin")) + BV("lin_b"), 0.0)         # STAD.linear + relu
    h2 = jnp.maximum(mm(h2, W("se_lin")) + BV("se_lin_b"), 0.0)   # ST_encoder.linear + relu
    h3 = h2.reshape(B, T, D)

    # causal-shift mask (t > 0), built ONCE for both convs; it also zeroes the rows that
    # pick up cross-batch wraparound from the flattened roll below.
    tmask = (jax.lax.broadcasted_iota(jnp.int32, (B, T, D), 1) > 0).astype(jnp.float32)

    # TODO(synk): TemporalConvNet/TemporalBlock source (weight_norm, attention branch,
    # dropout) not provided; approximated by two causal k=2 convs with ReLU + ReLU residual.
    def causal_conv(z3, wname, bname):
        # one merged matmul: [z @ w0 | z @ w1]; the causal shift is applied to the result
        # (shift commutes with the per-timestep matmul).
        u = mm(z3.reshape(B * T, D), WW(wname))                   # (B*T, 2D)
        shifted = pltpu.roll(u[:, :D], 1, 0).reshape(B, T, D) * tmask   # row t <- row t-1
        y3 = shifted + u[:, D:].reshape(B, T, D) + BV(bname).reshape(1, 1, D)
        return jnp.maximum(y3, 0.0)

    c3 = causal_conv(h3, "conv_a", "ba")
    c3 = causal_conv(c3, "conv_b", "bb")
    y3 = jnp.maximum(c3 + h3, 0.0)

    # reference uses tcna for both branches: tanh(x_b) * sigmoid(x_a) with x_a == x_b
    g3 = jnp.tanh(y3) * jax.nn.sigmoid(y3)

    # TODO(synk): SGNN source not provided; approximated by attention over the time axis
    # followed by a linear + ReLU residual.
    a3 = attn(g3, g3, g3)
    g2 = g3.reshape(B * T, D)
    sg2 = jnp.maximum(mm(a3.reshape(B * T, D), W("sg")) + BV("sg_b") + g2, 0.0)

    # TODO(synk): PositionalEncoding source not provided; standard sinusoidal PE
    # (precomputed on host), dropout off.
    h2 = (sg2.reshape(B, T, D) + pe_ref[...][None, :, :]).reshape(B * T, D)

    # ---------------- transformer encoder: 2 post-norm layers, nhead=1, eval ----------------
    for l in range(2):
        p = f"enc{l}_"
        qkv = mm(h2, WW(p + "qkv")) + BV(p + "qkv_b")
        q3 = qkv[:, 0 * D:1 * D].reshape(B, T, D)
        k3 = qkv[:, 1 * D:2 * D].reshape(B, T, D)
        v3 = qkv[:, 2 * D:3 * D].reshape(B, T, D)
        sa = mm(attn(q3, k3, v3).reshape(B * T, D), W(p + "o")) + BV(p + "o_b")
        h2 = layernorm(h2 + sa, p + "ln1_g", p + "ln1_b")
        ff = jnp.maximum(mm(h2, WW(p + "ff1")) + BV(p + "ff1_b"), 0.0)
        ff = mm(ff, WT(p + "ff2")) + BV(p + "ff2_b")
        h2 = layernorm(h2 + ff, p + "ln2_g", p + "ln2_b")

    # ---------------- transformer decoder (1 post-norm layer) + heads ----------------
    mem3 = h2.reshape(B, T, D)
    tgt2 = mem3[:, T - 1:T, :].reshape(B, D)          # x[-1, :, :] of the seq-first reference

    # decoder self-attention (single target token)
    qkv = mm(tgt2, WW("dec_sa_qkv")) + BV("dec_sa_qkv_b")
    q3 = qkv[:, 0 * D:1 * D].reshape(B, 1, D)
    k3 = qkv[:, 1 * D:2 * D].reshape(B, 1, D)
    v3 = qkv[:, 2 * D:3 * D].reshape(B, 1, D)
    sa = mm(attn(q3, k3, v3).reshape(B, D), W("dec_sa_o")) + BV("dec_sa_o_b")
    hd = layernorm(tgt2 + sa, "dec_ln1_g", "dec_ln1_b")

    # cross-attention against the encoder memory (concatenated K/V projection)
    q3 = (mm(hd, W("dec_ca_q")) + BV("dec_ca_q_b")).reshape(B, 1, D)
    kv = mm(h2, WW("dec_ca_kv")) + BV("dec_ca_kv_b")
    k3 = kv[:, :D].reshape(B, T, D)
    v3 = kv[:, D:].reshape(B, T, D)
    ca = mm(attn(q3, k3, v3).reshape(B, D), W("dec_ca_o")) + BV("dec_ca_o_b")
    hd = layernorm(hd + ca, "dec_ln2_g", "dec_ln2_b")

    # feed-forward
    ff = jnp.maximum(mm(hd, WW("dec_ff1")) + BV("dec_ff1_b"), 0.0)
    ff = mm(ff, WT("dec_ff2")) + BV("dec_ff2_b")
    hd = layernorm(hd + ff, "dec_ln3_g", "dec_ln3_b")

    # reference calls transformer_decoder1 twice with identical inputs & params -> the two
    # decoder outputs are bit-identical; computed once, mu/logvar via one merged matmul.
    mulv = mm(hd, WW("mulv")) + BV("mulv_b")
    mu = mulv[:, :D]
    lv = mulv[:, D:]
    z = mu + eps_ref[...] * jnp.exp(0.5 * lv)
    out = jax.nn.sigmoid(mm(z, W("end")) + BV("end_b"))

    # pack [out | mu | logvar] into one lane-dense output tile (single writeback DMA)
    out_ref[0:B, :] = out
    out_ref[B:2 * B, :] = mu
    out_ref[2 * B:3 * B, :] = lv
    rows = out_ref.shape[0]
    if rows > 3 * B:
        out_ref[3 * B:rows, :] = jnp.zeros((rows - 3 * B, D), jnp.float32)


# ------------------------------------ pallas wrapper ------------------------------------

def stad_forward(x, pp, eps, d_real):
    B, T, F = x.shape
    xp = jnp.pad(x, ((0, 0), (0, 0), (0, LANES - F)))
    epsp = jnp.pad(eps, ((0, 0), (0, LANES - F)))
    rows = max(8, -(-3 * B // 8) * 8)

    args = [xp, pp["pe"], epsp, pp["wsq"], pp["wwide"], pp["wtall"], pp["bias"]]
    res = pl.pallas_call(
        functools.partial(_stad_kernel, d_real=d_real),
        grid=(1,),
        in_specs=[pl.BlockSpec(a.shape, lambda i, n=a.ndim: (0,) * n) for a in args],
        out_specs=pl.BlockSpec((rows, LANES), lambda i: (0, 0)),
        out_shape=jax.ShapeDtypeStruct((rows, LANES), jnp.float32),
        compiler_params=pltpu.CompilerParams(dimension_semantics=("arbitrary",)),
    )(*args)
    return res[0:B, :F], res[B:2 * B, :F], res[2 * B:3 * B, :F]


# ------------------------------------ parameter init ------------------------------------

def _dense(key, fan_in, fan_out):
    kw, kb = jax.random.split(key)
    w = jax.random.normal(kw, (fan_in, fan_out), jnp.float32) / math.sqrt(fan_in)
    b = jax.random.normal(kb, (fan_out,), jnp.float32) * 0.01
    return w, b


def _mha_params(key, d):
    ks = jax.random.split(key, 4)
    wq, bq = _dense(ks[0], d, d)
    wk, bk = _dense(ks[1], d, d)
    wv, bv = _dense(ks[2], d, d)
    wo, bo = _dense(ks[3], d, d)
    return dict(wq=wq, bq=bq, wk=wk, bk=bk, wv=wv, bv=bv, wo=wo, bo=bo)


def _enc_layer_params(key, d, dff):
    ks = jax.random.split(key, 3)
    ff1_w, ff1_b = _dense(ks[1], d, dff)
    ff2_w, ff2_b = _dense(ks[2], dff, d)
    return dict(attn=_mha_params(ks[0], d),
                ff1_w=ff1_w, ff1_b=ff1_b, ff2_w=ff2_w, ff2_b=ff2_b,
                ln1_g=jnp.ones((d,)), ln1_b=jnp.zeros((d,)),
                ln2_g=jnp.ones((d,)), ln2_b=jnp.zeros((d,)))


def _dec_layer_params(key, d, dff):
    ks = jax.random.split(key, 4)
    ff1_w, ff1_b = _dense(ks[2], d, dff)
    ff2_w, ff2_b = _dense(ks[3], dff, d)
    return dict(self_attn=_mha_params(ks[0], d),
                cross_attn=_mha_params(ks[1], d),
                ff1_w=ff1_w, ff1_b=ff1_b, ff2_w=ff2_w, ff2_b=ff2_b,
                ln1_g=jnp.ones((d,)), ln1_b=jnp.zeros((d,)),
                ln2_g=jnp.ones((d,)), ln2_b=jnp.zeros((d,)),
                ln3_g=jnp.ones((d,)), ln3_b=jnp.zeros((d,)))


def init_params(key, n_features, window, d_model):
    ks = jax.random.split(key, 12)
    lin_w, lin_b = _dense(ks[0], n_features, d_model)
    se_lin_w, se_lin_b = _dense(ks[1], d_model, d_model)   # ST_encoder(d_model, d_model)
    w0a, ba = _dense(ks[2], d_model, d_model)
    w1a, _ = _dense(ks[3], d_model, d_model)
    w0b, bb = _dense(ks[4], d_model, d_model)
    w1b, _ = _dense(ks[5], d_model, d_model)
    sgnn_w, sgnn_b = _dense(ks[6], d_model, d_model)
    enc_layers = [_enc_layer_params(k, d_model, DFF) for k in jax.random.split(ks[7], 2)]
    dec1 = _dec_layer_params(ks[8], d_model, DFF)
    lin2_w, lin2_b = _dense(ks[9], d_model, n_features)
    lin3_w, lin3_b = _dense(ks[10], d_model, n_features)
    end_w, end_b = _dense(ks[11], n_features, n_features)
    return dict(
        lin_w=lin_w, lin_b=lin_b,
        st_enc=dict(lin_w=se_lin_w, lin_b=se_lin_b,
                    tcna=dict(w0a=w0a, w1a=w1a, ba=ba, w0b=w0b, w1b=w1b, bb=bb),
                    sgnn=dict(w=sgnn_w, b=sgnn_b),
                    enc_layers=enc_layers, dec1=dec1),
        lin2_w=lin2_w, lin2_b=lin2_b, lin3_w=lin3_w, lin3_b=lin3_b,
        end_w=end_w, end_b=end_b)


# -------------------- pack parameters into lane-dense VMEM slabs --------------------

def _padw(w, rows, cols):
    r, c = w.shape
    return jnp.pad(w, ((0, rows - r), (0, cols - c)))


def _padv(b, n):
    return jnp.pad(b, (0, n - b.shape[0]))


def _make_positional_encoding(T, d):
    pos = jnp.arange(T, dtype=jnp.float32)[:, None]
    div = jnp.exp(jnp.arange(0, d, 2, dtype=jnp.float32) * (-math.log(10000.0) / d))
    pe = jnp.zeros((T, d), jnp.float32)
    pe = pe.at[:, 0::2].set(jnp.sin(pos * div))
    pe = pe.at[:, 1::2].set(jnp.cos(pos * div))
    return pe


def prepare_params(params, window, d_model):
    se = params["st_enc"]
    tc = se["tcna"]
    enc = se["enc_layers"]
    dec = se["dec1"]
    D = LANES

    def p128(w):
        return _padw(w, D, D)

    def qkv_cat(a):
        return jnp.concatenate([p128(a["wq"]), p128(a["wk"]), p128(a["wv"])], axis=1)

    sq = {
        "lin": p128(params["lin_w"]), "se_lin": p128(se["lin_w"]), "sg": p128(se["sgnn"]["w"]),
        "enc0_o": p128(enc[0]["attn"]["wo"]), "enc1_o": p128(enc[1]["attn"]["wo"]),
        "dec_sa_o": p128(dec["self_attn"]["wo"]), "dec_ca_q": p128(dec["cross_attn"]["wq"]),
        "dec_ca_o": p128(dec["cross_attn"]["wo"]), "end": p128(params["end_w"]),
    }
    wide = {
        "conv_a": jnp.concatenate([p128(tc["w0a"]), p128(tc["w1a"])], axis=1),
        "conv_b": jnp.concatenate([p128(tc["w0b"]), p128(tc["w1b"])], axis=1),
        "enc0_qkv": qkv_cat(enc[0]["attn"]), "enc0_ff1": _padw(enc[0]["ff1_w"], D, DFF),
        "enc1_qkv": qkv_cat(enc[1]["attn"]), "enc1_ff1": _padw(enc[1]["ff1_w"], D, DFF),
        "dec_sa_qkv": qkv_cat(dec["self_attn"]),
        "dec_ca_kv": jnp.concatenate([p128(dec["cross_attn"]["wk"]),
                                      p128(dec["cross_attn"]["wv"])], axis=1),
        "dec_ff1": _padw(dec["ff1_w"], D, DFF),
        "mulv": jnp.concatenate([p128(params["lin2_w"]), p128(params["lin3_w"])], axis=1),
    }
    tall = {
        "enc0_ff2": _padw(enc[0]["ff2_w"], DFF, D),
        "enc1_ff2": _padw(enc[1]["ff2_w"], DFF, D),
        "dec_ff2": _padw(dec["ff2_w"], DFF, D),
    }

    def b128(b):
        return _padv(b, D)

    bias = {
        "lin_b": b128(params["lin_b"]), "se_lin_b": b128(se["lin_b"]),
        "ba": b128(tc["ba"]), "bb": b128(tc["bb"]), "sg_b": b128(se["sgnn"]["b"]),
        "mulv_b": jnp.concatenate([b128(params["lin2_b"]), b128(params["lin3_b"])]),
        "end_b": b128(params["end_b"]),
    }
    for l in range(2):
        a = enc[l]["attn"]
        bias.update({
            f"enc{l}_qkv_b": jnp.concatenate([b128(a["bq"]), b128(a["bk"]), b128(a["bv"])]),
            f"enc{l}_o_b": b128(a["bo"]),
            f"enc{l}_ln1_g": b128(enc[l]["ln1_g"]), f"enc{l}_ln1_b": b128(enc[l]["ln1_b"]),
            f"enc{l}_ff1_b": _padv(enc[l]["ff1_b"], DFF),
            f"enc{l}_ff2_b": b128(enc[l]["ff2_b"]),
            f"enc{l}_ln2_g": b128(enc[l]["ln2_g"]), f"enc{l}_ln2_b": b128(enc[l]["ln2_b"]),
        })
    sa, ca = dec["self_attn"], dec["cross_attn"]
    bias.update({
        "dec_sa_qkv_b": jnp.concatenate([b128(sa["bq"]), b128(sa["bk"]), b128(sa["bv"])]),
        "dec_sa_o_b": b128(sa["bo"]),
        "dec_ln1_g": b128(dec["ln1_g"]), "dec_ln1_b": b128(dec["ln1_b"]),
        "dec_ca_q_b": b128(ca["bq"]),
        "dec_ca_kv_b": jnp.concatenate([b128(ca["bk"]), b128(ca["bv"])]),
        "dec_ca_o_b": b128(ca["bo"]),
        "dec_ln2_g": b128(dec["ln2_g"]), "dec_ln2_b": b128(dec["ln2_b"]),
        "dec_ff1_b": _padv(dec["ff1_b"], DFF),
        "dec_ff2_b": b128(dec["ff2_b"]),
        "dec_ln3_g": b128(dec["ln3_g"]), "dec_ln3_b": b128(dec["ln3_b"]),
    })

    wsq = jnp.stack([sq[n] for n in _SQ_NAMES]).astype(_MM_DTYPE)
    wwide = jnp.stack([_padw(wide[n], D, _WIDE_MAX) for n, _ in _WIDE_NAMES]).astype(_MM_DTYPE)
    wtall = jnp.stack([tall[n] for n in _TALL_NAMES]).astype(_MM_DTYPE)
    bslab = jnp.stack([_padv(bias[n], _BIAS_W) for n, _ in _BIAS_NAMES]).astype(jnp.float32)

    pe = _make_positional_encoding(window, d_model)
    pep = jnp.pad(pe, ((0, 0), (0, LANES - d_model)))
    return dict(wsq=wsq, wwide=wwide, wtall=wtall, bias=bslab, pe=pep)


# ------------------------------------------ main ------------------------------------------

if __name__ == "__main__":
    B, window, n_features, d_model = 2, 8, 4, 32

    key = jax.random.PRNGKey(0)
    k_x, k_p, k_eps = jax.random.split(key, 3)

    x = jax.random.normal(k_x, (B, window, n_features), jnp.float32)
    raw_params = init_params(k_p, n_features, window, d_model)
    params = prepare_params(raw_params, window, d_model)
    eps = jax.random.normal(k_eps, (B, n_features), jnp.float32)   # randn_like(std)

    stad_jit = jax.jit(stad_forward, static_argnums=(3,))
    out, mu, logvar = stad_jit(x, params, eps, d_model)
    jax.block_until_ready((out, mu, logvar))

    assert out.shape == (B, n_features)
    assert mu.shape == (B, n_features)
    assert logvar.shape == (B, n_features)
    assert bool(jnp.all(jnp.isfinite(out))) and bool(jnp.all(jnp.isfinite(mu))) \
        and bool(jnp.all(jnp.isfinite(logvar)))
    print("KERNEL_OK")
</pallas_src>

<mosaic_0001>
module attributes {stable_mosaic.version = 11 : i64} {
  func.func @_stad_kernel(%arg0: i32, %arg1: memref<2x8x128xf32, #tpu.memory_space<vmem>>, %arg2: memref<8x128xf32, #tpu.memory_space<vmem>>, %arg3: memref<2x128xf32, #tpu.memory_space<vmem>>, %arg4: memref<9x128x128xbf16, #tpu.memory_space<vmem>>, %arg5: memref<10x128x384xbf16, #tpu.memory_space<vmem>>, %arg6: memref<3x256x128xbf16, #tpu.memory_space<vmem>>, %arg7: memref<36x384xf32, #tpu.memory_space<vmem>>, %arg8: memref<8x128xf32, #tpu.memory_space<vmem>>) attributes {dimension_semantics = [#tpu.dimension_semantics<arbitrary>], iteration_bounds = array<i64: 1>, scalar_prefetch = 0 : i64, scratch_operands = 0 : i64, tpu.core_type = #tpu.core_type<tc>, window_params = [{pipeline_mode = #tpu.pipeline_mode<synchronous>, transform_indices = @transform_0, window_bounds = array<i64: 2, 8, 128>}, {pipeline_mode = #tpu.pipeline_mode<synchronous>, transform_indices = @transform_1, window_bounds = array<i64: 8, 128>}, {pipeline_mode = #tpu.pipeline_mode<synchronous>, transform_indices = @transform_2, window_bounds = array<i64: 2, 128>}, {pipeline_mode = #tpu.pipeline_mode<synchronous>, transform_indices = @transform_3, window_bounds = array<i64: 9, 128, 128>}, {pipeline_mode = #tpu.pipeline_mode<synchronous>, transform_indices = @transform_4, window_bounds = array<i64: 10, 128, 384>}, {pipeline_mode = #tpu.pipeline_mode<synchronous>, transform_indices = @transform_5, window_bounds = array<i64: 3, 256, 128>}, {pipeline_mode = #tpu.pipeline_mode<synchronous>, transform_indices = @transform_6, window_bounds = array<i64: 36, 384>}, {pipeline_mode = #tpu.pipeline_mode<synchronous>, transform_indices = @transform_7, window_bounds = array<i64: 8, 128>}]} {
    %c0 = arith.constant 0 : index
    %c0_0 = arith.constant 0 : index
    %c0_1 = arith.constant 0 : index
    %0 = vector.load %arg1[%c0, %c0_0, %c0_1] : memref<2x8x128xf32, #tpu.memory_space<vmem>>, vector<2x8x128xf32>
    %1 = vector.shape_cast %0 : vector<2x8x128xf32> to vector<16x128xf32>
    %c0_2 = arith.constant 0 : index
    %c0_3 = arith.constant 0 : index
    %c0_4 = arith.constant 0 : index
    %2 = vector.load %arg4[%c0_2, %c0_3, %c0_4] : memref<9x128x128xbf16, #tpu.memory_space<vmem>>, vector<1x128x128xbf16>
    %3 = vector.shape_cast %2 : vector<1x128x128xbf16> to vector<128x128xbf16>
    %4 = arith.truncf %1 : vector<16x128xf32> to vector<16x128xbf16>
    %cst = arith.constant dense<0.000000e+00> : vector<16x128xf32>
    %5 = tpu.matmul %4, %3, %cst {dimension_numbers = #tpu.dot_dimension_numbers<[1], [0], [0], [1], [0, 0, 1, 1], [], []>} : vector<16x128xbf16>, vector<128x128xbf16>, vector<16x128xf32> -> vector<16x128xf32>
    %c0_5 = arith.constant 0 : index
    %c0_6 = arith.constant 0 : index
    %6 = vector.load %arg7[%c0_5, %c0_6] : memref<36x384xf32, #tpu.memory_space<vmem>>, vector<1x128xf32>
    %7 = vector.broadcast %6 : vector<1x128xf32> to vector<16x128xf32>
    %8 = arith.addf %5, %7 : vector<16x128xf32>
    %cst_7 = arith.constant 0.000000e+00 : f32
    %9 = vector.broadcast %cst_7 : f32 to vector<16x128xf32>
    %10 = arith.maximumf %8, %9 : vector<16x128xf32>
    %c1 = arith.constant 1 : index
    %c0_8 = arith.constant 0 : index
    %c0_9 = arith.constant 0 : index
    %11 = vector.load %arg4[%c1, %c0_8, %c0_9] : memref<9x128x128xbf16, #tpu.memory_space<vmem>>, vector<1x128x128xbf16>
    %12 = vector.shape_cast %11 : vector<1x128x128xbf16> to vector<128x128xbf16>
    %13 = arith.truncf %10 : vector<16x128xf32> to vector<16x128xbf16>
    %cst_10 = arith.constant dense<0.000000e+00> : vector<16x128xf32>
    %14 = tpu.matmul %13, %12, %cst_10 {dimension_numbers = #tpu.dot_dimension_numbers<[1], [0], [0], [1], [0, 0, 1, 1], [], []>} : vector<16x128xbf16>, vector<128x128xbf16>, vector<16x128xf32> -> vector<16x128xf32>
    %c1_11 = arith.constant 1 : index
    %c0_12 = arith.constant 0 : index
    %15 = vector.load %arg7[%c1_11, %c0_12] : memref<36x384xf32, #tpu.memory_space<vmem>>, vector<1x128xf32>
    %16 = vector.broadcast %15 : vector<1x128xf32> to vector<16x128xf32>
    %17 = arith.addf %14, %16 : vector<16x128xf32>
    %cst_13 = arith.constant 0.000000e+00 : f32
    %18 = vector.broadcast %cst_13 : f32 to vector<16x128xf32>
    %19 = arith.maximumf %17, %18 : vector<16x128xf32>
    %20 = vector.shape_cast %19 : vector<16x128xf32> to vector<2x8x128xf32>
    %21 = tpu.iota {dimensions = array<i32: 1>} : vector<2x8x128xi32>
    %c0_i32 = arith.constant 0 : i32
    %22 = vector.broadcast %c0_i32 : i32 to vector<2x8x128xi32>
    %23 = arith.cmpi sgt, %21, %22 : vector<2x8x128xi32>
    %24 = arith.extui %23 : vector<2x8x128xi1> to vector<2x8x128xi32>
    %25 = arith.sitofp %24 : vector<2x8x128xi32> to vector<2x8x128xf32>
    %26 = vector.shape_cast %20 : vector<2x8x128xf32> to vector<16x128xf32>
    %c0_14 = arith.constant 0 : index
    %c0_15 = arith.constant 0 : index
    %c0_16 = arith.constant 0 : index
    %27 = vector.load %arg5[%c0_14, %c0_15, %c0_16] : memref<10x128x384xbf16, #tpu.memory_space<vmem>>, vector<1x128x384xbf16>
    %28 = vector.shape_cast %27 : vector<1x128x384xbf16> to vector<128x384xbf16>
    %29 = vector.extract_strided_slice %28 {offsets = [0, 0], sizes = [128, 256], strides = [1, 1]} : vector<128x384xbf16> to vector<128x256xbf16>
    %30 = arith.truncf %26 : vector<16x128xf32> to vector<16x128xbf16>
    %cst_17 = arith.constant dense<0.000000e+00> : vector<16x256xf32>
    %31 = tpu.matmul %30, %29, %cst_17 {dimension_numbers = #tpu.dot_dimension_numbers<[1], [0], [0], [1], [0, 0, 1, 1], [], []>} : vector<16x128xbf16>, vector<128x256xbf16>, vector<16x256xf32> -> vector<16x256xf32>
    %32 = vector.extract_strided_slice %31 {offsets = [0, 0], sizes = [16, 128], strides = [1, 1]} : vector<16x256xf32> to vector<16x128xf32>
    %c1_i32 = arith.constant 1 : i32
    %33 = tpu.dynamic_rotate %32 by %c1_i32 dim 0 : vector<16x128xf32>, i32 -> vector<16x128xf32>
    %34 = vector.shape_cast %33 : vector<16x128xf32> to vector<2x8x128xf32>
    %35 = arith.mulf %34, %25 : vector<2x8x128xf32>
    %36 = vector.extract_strided_slice %31 {offsets = [0, 128], sizes = [16, 128], strides = [1, 1]} : vector<16x256xf32> to vector<16x128xf32>
    %37 = vector.shape_cast %36 : vector<16x128xf32> to vector<2x8x128xf32>
    %38 = arith.addf %35, %37 : vector<2x8x128xf32>
    %c2 = arith.constant 2 : index
    %c0_18 = arith.constant 0 : index
    %39 = vector.load %arg7[%c2, %c0_18] : memref<36x384xf32, #tpu.memory_space<vmem>>, vector<1x128xf32>
    %40 = vector.shape_cast %39 : vector<1x128xf32> to vector<1x1x128xf32>
    %41 = vector.broadcast %40 : vector<1x1x128xf32> to vector<2x8x128xf32>
    %42 = arith.addf %38, %41 : vector<2x8x128xf32>
    %cst_19 = arith.constant 0.000000e+00 : f32
    %43 = vector.broadcast %cst_19 : f32 to vector<2x8x128xf32>
    %44 = arith.maximumf %42, %43 : vector<2x8x128xf32>
    %45 = vector.shape_cast %44 : vector<2x8x128xf32> to vector<16x128xf32>
    %c1_20 = arith.constant 1 : index
    %c0_21 = arith.constant 0 : index
    %c0_22 = arith.constant 0 : index
    %46 = vector.load %arg5[%c1_20, %c0_21, %c0_22] : memref<10x128x384xbf16, #tpu.memory_space<vmem>>, vector<1x128x384xbf16>
    %47 = vector.shape_cast %46 : vector<1x128x384xbf16> to vector<128x384xbf16>
    %48 = vector.extract_strided_slice %47 {offsets = [0, 0], sizes = [128, 256], strides = [1, 1]} : vector<128x384xbf16> to vector<128x256xbf16>
    %49 = arith.truncf %45 : vector<16x128xf32> to vector<16x128xbf16>
    %cst_23 = arith.constant dense<0.000000e+00> : vector<16x256xf32>
    %50 = tpu.matmul %49, %48, %cst_23 {dimension_numbers = #tpu.dot_dimension_numbers<[1], [0], [0], [1], [0, 0, 1, 1], [], []>} : vector<16x128xbf16>, vector<128x256xbf16>, vector<16x256xf32> -> vector<16x256xf32>
    %51 = vector.extract_strided_slice %50 {offsets = [0, 0], sizes = [16, 128], strides = [1, 1]} : vector<16x256xf32> to vector<16x128xf32>
    %c1_i32_24 = arith.constant 1 : i32
    %52 = tpu.dynamic_rotate %51 by %c1_i32_24 dim 0 : vector<16x128xf32>, i32 -> vector<16x128xf32>
    %53 = vector.shape_cast %52 : vector<16x128xf32> to vector<2x8x128xf32>
    %54 = arith.mulf %53, %25 : vector<2x8x128xf32>
    %55 = vector.extract_strided_slice %50 {offsets = [0, 128], sizes = [16, 128], strides = [1, 1]} : vector<16x256xf32> to vector<16x128xf32>
    %56 = vector.shape_cast %55 : vector<16x128xf32> to vector<2x8x128xf32>
    %57 = arith.addf %54, %56 : vector<2x8x128xf32>
    %c3 = arith.constant 3 : index
    %c0_25 = arith.constant 0 : index
    %58 = vector.load %arg7[%c3, %c0_25] : memref<36x384xf32, #tpu.memory_space<vmem>>, vector<1x128xf32>
    %59 = vector.shape_cast %58 : vector<1x128xf32> to vector<1x1x128xf32>
    %60 = vector.broadcast %59 : vector<1x1x128xf32> to vector<2x8x128xf32>
    %61 = arith.addf %57, %60 : vector<2x8x128xf32>
    %cst_26 = arith.constant 0.000000e+00 : f32
    %62 = vector.broadcast %cst_26 : f32 to vector<2x8x128xf32>
    %63 = arith.maximumf %61, %62 : vector<2x8x128xf32>
    %64 = arith.addf %63, %20 : vector<2x8x128xf32>
    %cst_27 = arith.constant 0.000000e+00 : f32
    %65 = vector.broadcast %cst_27 : f32 to vector<2x8x128xf32>
    %66 = arith.maximumf %64, %65 : vector<2x8x128xf32>
    %67 = math.tanh %66 : vector<2x8x128xf32>
    %68 = arith.negf %66 : vector<2x8x128xf32>
    %69 = math.exp %68 : vector<2x8x128xf32>
    %cst_28 = arith.constant 1.000000e+00 : f32
    %70 = vector.broadcast %cst_28 : f32 to vector<2x8x128xf32>
    %71 = arith.addf %70, %69 : vector<2x8x128xf32>
    %72 = arith.divf %70, %71 : vector<2x8x128xf32>
    %73 = arith.mulf %67, %72 : vector<2x8x128xf32>
    %74 = arith.truncf %73 : vector<2x8x128xf32> to vector<2x8x128xbf16>
    %75 = arith.truncf %73 : vector<2x8x128xf32> to vector<2x8x128xbf16>
    "tpu.trace_start"() <{level = 10 : i32, message = "bqd,bkd->bqk"}> : () -> ()
    %cst_29 = arith.constant dense<0.000000e+00> : vector<2x8x8xf32>
    %76 = tpu.matmul %74, %75, %cst_29 {dimension_numbers = #tpu.dot_dimension_numbers<[2], [2], [1], [1], [0, 0, 0, 1, 1, 1], [0], [0]>} : vector<2x8x128xbf16>, vector<2x8x128xbf16>, vector<2x8x8xf32> -> vector<2x8x8xf32>
    "tpu.trace_stop"() : () -> ()
    %cst_30 = arith.constant 0.176776692 : f32
    %77 = vector.broadcast %cst_30 : f32 to vector<2x8x8xf32>
    %78 = arith.mulf %76, %77 : vector<2x8x8xf32>
    %cst_31 = arith.constant dense<0xFF800000> : vector<2x8xf32>
    %79 = vector.multi_reduction <maximumf>, %78, %cst_31 [2] : vector<2x8x8xf32> to vector<2x8xf32>
    %80 = vector.shape_cast %79 : vector<2x8xf32> to vector<2x8x1xf32>
    %81 = vector.broadcast %80 : vector<2x8x1xf32> to vector<2x8x8xf32>
    %82 = arith.subf %78, %81 : vector<2x8x8xf32>
    %83 = math.exp %82 : vector<2x8x8xf32>
    %cst_32 = arith.constant dense<0.000000e+00> : vector<2x8xf32>
    %84 = vector.multi_reduction <add>, %83, %cst_32 [2] : vector<2x8x8xf32> to vector<2x8xf32>
    %85 = vector.shape_cast %84 : vector<2x8xf32> to vector<2x8x1xf32>
    %86 = tpu.reciprocal %85 {approx = true} : vector<2x8x1xf32> -> vector<2x8x1xf32>
    %87 = vector.broadcast %86 : vector<2x8x1xf32> to vector<2x8x8xf32>
    %88 = arith.mulf %83, %87 : vector<2x8x8xf32>
    %89 = arith.truncf %88 : vector<2x8x8xf32> to vector<2x8x8xbf16>
    %90 = arith.truncf %73 : vector<2x8x128xf32> to vector<2x8x128xbf16>
    "tpu.trace_start"() <{level = 10 : i32, message = "bqk,bkd->bqd"}> : () -> ()
    %cst_33 = arith.constant dense<0.000000e+00> : vector<2x8x128xf32>
    %91 = tpu.matmul %89, %90, %cst_33 {dimension_numbers = #tpu.dot_dimension_numbers<[2], [1], [1], [2], [0, 0, 0, 1, 1, 2], [0], [0]>} : vector<2x8x8xbf16>, vector<2x8x128xbf16>, vector<2x8x128xf32> -> vector<2x8x128xf32>
    "tpu.trace_stop"() : () -> ()
    %92 = vector.shape_cast %73 : vector<2x8x128xf32> to vector<16x128xf32>
    %93 = vector.shape_cast %91 : vector<2x8x128xf32> to vector<16x128xf32>
    %c2_34 = arith.constant 2 : index
    %c0_35 = arith.constant 0 : index
    %c0_36 = arith.constant 0 : index
    %94 = vector.load %arg4[%c2_34, %c0_35, %c0_36] : memref<9x128x128xbf16, #tpu.memory_space<vmem>>, vector<1x128x128xbf16>
    %95 = vector.shape_cast %94 : vector<1x128x128xbf16> to vector<128x128xbf16>
    %96 = arith.truncf %93 : vector<16x128xf32> to vector<16x128xbf16>
    %cst_37 = arith.constant dense<0.000000e+00> : vector<16x128xf32>
    %97 = tpu.matmul %96, %95, %cst_37 {dimension_numbers = #tpu.dot_dimension_numbers<[1], [0], [0], [1], [0, 0, 1, 1], [], []>} : vector<16x128xbf16>, vector<128x128xbf16>, vector<16x128xf32> -> vector<16x128xf32>
    %c4 = arith.constant 4 : index
    %c0_38 = arith.constant 0 : index
    %98 = vector.load %arg7[%c4, %c0_38] : memref<36x384xf32, #tpu.memory_space<vmem>>, vector<1x128xf32>
    %99 = vector.broadcast %98 : vector<1x128xf32> to vector<16x128xf32>
    %100 = arith.addf %97, %99 : vector<16x128xf32>
    %101 = arith.addf %100, %92 : vector<16x128xf32>
    %cst_39 = arith.constant 0.000000e+00 : f32
    %102 = vector.broadcast %cst_39 : f32 to vector<16x128xf32>
    %103 = arith.maximumf %101, %102 : vector<16x128xf32>
    %104 = vector.shape_cast %103 : vector<16x128xf32> to vector<2x8x128xf32>
    %c0_40 = arith.constant 0 : index
    %c0_41 = arith.constant 0 : index
    %105 = vector.load %arg2[%c0_40, %c0_41] : memref<8x128xf32, #tpu.memory_space<vmem>>, vector<8x128xf32>
    %106 = vector.shape_cast %105 : vector<8x128xf32> to vector<1x8x128xf32>
    %107 = vector.broadcast %106 : vector<1x8x128xf32> to vector<2x8x128xf32>
    %108 = arith.addf %104, %107 : vector<2x8x128xf32>
    %109 = vector.shape_cast %108 : vector<2x8x128xf32> to vector<16x128xf32>
    %c2_42 = arith.constant 2 : index
    %c0_43 = arith.constant 0 : index
    %c0_44 = arith.constant 0 : index
    %110 = vector.load %arg5[%c2_42, %c0_43, %c0_44] : memref<10x128x384xbf16, #tpu.memory_space<vmem>>, vector<1x128x384xbf16>
    %111 = vector.shape_cast %110 : vector<1x128x384xbf16> to vector<128x384xbf16>
    %112 = arith.truncf %109 : vector<16x128xf32> to vector<16x128xbf16>
    %cst_45 = arith.constant dense<0.000000e+00> : vector<16x384xf32>
    %113 = tpu.matmul %112, %111, %cst_45 {dimension_numbers = #tpu.dot_dimension_numbers<[1], [0], [0], [1], [0, 0, 1, 1], [], []>} : vector<16x128xbf16>, vector<128x384xbf16>, vector<16x384xf32> -> vector<16x384xf32>
    %c5 = arith.constant 5 : index
    %c0_46 = arith.constant 0 : index
    %114 = vector.load %arg7[%c5, %c0_46] : memref<36x384xf32, #tpu.memory_space<vmem>>, vector<1x384xf32>
    %115 = vector.broadcast %114 : vector<1x384xf32> to vector<16x384xf32>
    %116 = arith.addf %113, %115 : vector<16x384xf32>
    %117 = vector.extract_strided_slice %116 {offsets = [0, 0], sizes = [16, 128], strides = [1, 1]} : vector<16x384xf32> to vector<16x128xf32>
    %118 = vector.shape_cast %117 : vector<16x128xf32> to vector<2x8x128xf32>
    %119 = vector.extract_strided_slice %116 {offsets = [0, 128], sizes = [16, 128], strides = [1, 1]} : vector<16x384xf32> to vector<16x128xf32>
    %120 = vector.shape_cast %119 : vector<16x128xf32> to vector<2x8x128xf32>
    %121 = vector.extract_strided_slice %116 {offsets = [0, 256], sizes = [16, 128], strides = [1, 1]} : vector<16x384xf32> to vector<16x128xf32>
    %122 = vector.shape_cast %121 : vector<16x128xf32> to vector<2x8x128xf32>
    %123 = arith.truncf %118 : vector<2x8x128xf32> to vector<2x8x128xbf16>
    %124 = arith.truncf %120 : vector<2x8x128xf32> to vector<2x8x128xbf16>
    "tpu.trace_start"() <{level = 10 : i32, message = "bqd,bkd->bqk"}> : () -> ()
    %cst_47 = arith.constant dense<0.000000e+00> : vector<2x8x8xf32>
    %125 = tpu.matmul %123, %124, %cst_47 {dimension_numbers = #tpu.dot_dimension_numbers<[2], [2], [1], [1], [0, 0, 0, 1, 1, 1], [0], [0]>} : vector<2x8x128xbf16>, vector<2x8x128xbf16>, vector<2x8x8xf32> -> vector<2x8x8xf32>
    "tpu.trace_stop"() : () -> ()
    %cst_48 = arith.constant 0.176776692 : f32
    %126 = vector.broadcast %cst_48 : f32 to vector<2x8x8xf32>
    %127 = arith.mulf %125, %126 : vector<2x8x8xf32>
    %cst_49 = arith.constant dense<0xFF800000> : vector<2x8xf32>
    %128 = vector.multi_reduction <maximumf>, %127, %cst_49 [2] : vector<2x8x8xf32> to vector<2x8xf32>
    %129 = vector.shape_cast %128 : vector<2x8xf32> to vector<2x8x1xf32>
    %130 = vector.broadcast %129 : vector<2x8x1xf32> to vector<2x8x8xf32>
    %131 = arith.subf %127, %130 : vector<2x8x8xf32>
    %132 = math.exp %131 : vector<2x8x8xf32>
    %cst_50 = arith.constant dense<0.000000e+00> : vector<2x8xf32>
    %133 = vector.multi_reduction <add>, %132, %cst_50 [2] : vector<2x8x8xf32> to vector<2x8xf32>
    %134 = vector.shape_cast %133 : vector<2x8xf32> to vector<2x8x1xf32>
    %135 = tpu.reciprocal %134 {approx = true} : vector<2x8x1xf32> -> vector<2x8x1xf32>
    %136 = vector.broadcast %135 : vector<2x8x1xf32> to vector<2x8x8xf32>
    %137 = arith.mulf %132, %136 : vector<2x8x8xf32>
    %138 = arith.truncf %137 : vector<2x8x8xf32> to vector<2x8x8xbf16>
    %139 = arith.truncf %122 : vector<2x8x128xf32> to vector<2x8x128xbf16>
    "tpu.trace_start"() <{level = 10 : i32, message = "bqk,bkd->bqd"}> : () -> ()
    %cst_51 = arith.constant dense<0.000000e+00> : vector<2x8x128xf32>
    %140 = tpu.matmul %138, %139, %cst_51 {dimension_numbers = #tpu.dot_dimension_numbers<[2], [1], [1], [2], [0, 0, 0, 1, 1, 2], [0], [0]>} : vector<2x8x8xbf16>, vector<2x8x128xbf16>, vector<2x8x128xf32> -> vector<2x8x128xf32>
    "tpu.trace_stop"() : () -> ()
    %141 = vector.shape_cast %140 : vector<2x8x128xf32> to vector<16x128xf32>
    %c3_52 = arith.constant 3 : index
    %c0_53 = arith.constant 0 : index
    %c0_54 = arith.constant 0 : index
    %142 = vector.load %arg4[%c3_52, %c0_53, %c0_54] : memref<9x128x128xbf16, #tpu.memory_space<vmem>>, vector<1x128x128xbf16>
    %143 = vector.shape_cast %142 : vector<1x128x128xbf16> to vector<128x128xbf16>
    %144 = arith.truncf %141 : vector<16x128xf32> to vector<16x128xbf16>
    %cst_55 = arith.constant dense<0.000000e+00> : vector<16x128xf32>
    %145 = tpu.matmul %144, %143, %cst_55 {dimension_numbers = #tpu.dot_dimension_numbers<[1], [0], [0], [1], [0, 0, 1, 1], [], []>} : vector<16x128xbf16>, vector<128x128xbf16>, vector<16x128xf32> -> vector<16x128xf32>
    %c6 = arith.constant 6 : index
    %c0_56 = arith.constant 0 : index
    %146 = vector.load %arg7[%c6, %c0_56] : memref<36x384xf32, #tpu.memory_space<vmem>>, vector<1x128xf32>
    %147 = vector.broadcast %146 : vector<1x128xf32> to vector<16x128xf32>
    %148 = arith.addf %145, %147 : vector<16x128xf32>
    %149 = arith.addf %109, %148 : vector<16x128xf32>
    %cst_57 = arith.constant dense<0.000000e+00> : vector<16xf32>
    %150 = vector.multi_reduction <add>, %149, %cst_57 [1] : vector<16x128xf32> to vector<16xf32>
    %151 = vector.shape_cast %150 : vector<16xf32> to vector<16x1xf32>
    %cst_58 = arith.constant 3.125000e-02 : f32
    %152 = vector.broadcast %cst_58 : f32 to vector<16x1xf32>
    %153 = arith.mulf %151, %152 : vector<16x1xf32>
    %154 = arith.mulf %149, %149 : vector<16x128xf32>
    %cst_59 = arith.constant dense<0.000000e+00> : vector<16xf32>
    %155 = vector.multi_reduction <add>, %154, %cst_59 [1] : vector<16x128xf32> to vector<16xf32>
    %156 = vector.shape_cast %155 : vector<16xf32> to vector<16x1xf32>
    %cst_60 = arith.constant 3.125000e-02 : f32
    %157 = vector.broadcast %cst_60 : f32 to vector<16x1xf32>
    %158 = arith.mulf %156, %157 : vector<16x1xf32>
    %159 = arith.mulf %153, %153 : vector<16x1xf32>
    %160 = arith.subf %158, %159 : vector<16x1xf32>
    %161 = vector.broadcast %153 : vector<16x1xf32> to vector<16x128xf32>
    %162 = arith.subf %149, %161 : vector<16x128xf32>
    %cst_61 = arith.constant 9.99999974E-6 : f32
    %163 = vector.broadcast %cst_61 : f32 to vector<16x1xf32>
    %164 = arith.addf %160, %163 : vector<16x1xf32>
    %165 = math.rsqrt %164 : vector<16x1xf32>
    %166 = vector.broadcast %165 : vector<16x1xf32> to vector<16x128xf32>
    %167 = arith.mulf %162, %166 : vector<16x128xf32>
    %c7 = arith.constant 7 : index
    %c0_62 = arith.constant 0 : index
    %168 = vector.load %arg7[%c7, %c0_62] : memref<36x384xf32, #tpu.memory_space<vmem>>, vector<1x128xf32>
    %169 = vector.broadcast %168 : vector<1x128xf32> to vector<16x128xf32>
    %170 = arith.mulf %167, %169 : vector<16x128xf32>
    %c8 = arith.constant 8 : index
    %c0_63 = arith.constant 0 : index
    %171 = vector.load %arg7[%c8, %c0_63] : memref<36x384xf32, #tpu.memory_space<vmem>>, vector<1x128xf32>
    %172 = vector.broadcast %171 : vector<1x128xf32> to vector<16x128xf32>
    %173 = arith.addf %170, %172 : vector<16x128xf32>
    %c3_64 = arith.constant 3 : index
    %c0_65 = arith.constant 0 : index
    %c0_66 = arith.constant 0 : index
    %174 = vector.load %arg5[%c3_64, %c0_65, %c0_66] : memref<10x128x384xbf16, #tpu.memory_space<vmem>>, vector<1x128x384xbf16>
    %175 = vector.shape_cast %174 : vector<1x128x384xbf16> to vector<128x384xbf16>
    %176 = vector.extract_strided_slice %175 {offsets = [0, 0], sizes = [128, 256], strides = [1, 1]} : vector<128x384xbf16> to vector<128x256xbf16>
    %177 = arith.truncf %173 : vector<16x128xf32> to vector<16x128xbf16>
    %cst_67 = arith.constant dense<0.000000e+00> : vector<16x256xf32>
    %178 = tpu.matmul %177, %176, %cst_67 {dimension_numbers = #tpu.dot_dimension_numbers<[1], [0], [0], [1], [0, 0, 1, 1], [], []>} : vector<16x128xbf16>, vector<128x256xbf16>, vector<16x256xf32> -> vector<16x256xf32>
    %c9 = arith.constant 9 : index
    %c0_68 = arith.constant 0 : index
    %179 = vector.load %arg7[%c9, %c0_68] : memref<36x384xf32, #tpu.memory_space<vmem>>, vector<1x256xf32>
    %180 = vector.broadcast %179 : vector<1x256xf32> to vector<16x256xf32>
    %181 = arith.addf %178, %180 : vector<16x256xf32>
    %cst_69 = arith.constant 0.000000e+00 : f32
    %182 = vector.broadcast %cst_69 : f32 to vector<16x256xf32>
    %183 = arith.maximumf %181, %182 : vector<16x256xf32>
    %c0_70 = arith.constant 0 : index
    %c0_71 = arith.constant 0 : index
    %c0_72 = arith.constant 0 : index
    %184 = vector.load %arg6[%c0_70, %c0_71, %c0_72] : memref<3x256x128xbf16, #tpu.memory_space<vmem>>, vector<1x256x128xbf16>
    %185 = vector.shape_cast %184 : vector<1x256x128xbf16> to vector<256x128xbf16>
    %186 = arith.truncf %183 : vector<16x256xf32> to vector<16x256xbf16>
    %cst_73 = arith.constant dense<0.000000e+00> : vector<16x128xf32>
    %187 = tpu.matmul %186, %185, %cst_73 {dimension_numbers = #tpu.dot_dimension_numbers<[1], [0], [0], [1], [0, 0, 1, 1], [], []>} : vector<16x256xbf16>, vector<256x128xbf16>, vector<16x128xf32> -> vector<16x128xf32>
    %c10 = arith.constant 10 : index
    %c0_74 = arith.constant 0 : index
    %188 = vector.load %arg7[%c10, %c0_74] : memref<36x384xf32, #tpu.memory_space<vmem>>, vector<1x128xf32>
    %189 = vector.broadcast %188 : vector<1x128xf32> to vector<16x128xf32>
    %190 = arith.addf %187, %189 : vector<16x128xf32>
    %191 = arith.addf %173, %190 : vector<16x128xf32>
    %cst_75 = arith.constant dense<0.000000e+00> : vector<16xf32>
    %192 = vector.multi_reduction <add>, %191, %cst_75 [1] : vector<16x128xf32> to vector<16xf32>
    %193 = vector.shape_cast %192 : vector<16xf32> to vector<16x1xf32>
    %cst_76 = arith.constant 3.125000e-02 : f32
    %194 = vector.broadcast %cst_76 : f32 to vector<16x1xf32>
    %195 = arith.mulf %193, %194 : vector<16x1xf32>
    %196 = arith.mulf %191, %191 : vector<16x128xf32>
    %cst_77 = arith.constant dense<0.000000e+00> : vector<16xf32>
    %197 = vector.multi_reduction <add>, %196, %cst_77 [1] : vector<16x128xf32> to vector<16xf32>
    %198 = vector.shape_cast %197 : vector<16xf32> to vector<16x1xf32>
    %cst_78 = arith.constant 3.125000e-02 : f32
    %199 = vector.broadcast %cst_78 : f32 to vector<16x1xf32>
    %200 = arith.mulf %198, %199 : vector<16x1xf32>
    %201 = arith.mulf %195, %195 : vector<16x1xf32>
    %202 = arith.subf %200, %201 : vector<16x1xf32>
    %203 = vector.broadcast %195 : vector<16x1xf32> to vector<16x128xf32>
    %204 = arith.subf %191, %203 : vector<16x128xf32>
    %cst_79 = arith.constant 9.99999974E-6 : f32
    %205 = vector.broadcast %cst_79 : f32 to vector<16x1xf32>
    %206 = arith.addf %202, %205 : vector<16x1xf32>
    %207 = math.rsqrt %206 : vector<16x1xf32>
    %208 = vector.broadcast %207 : vector<16x1xf32> to vector<16x128xf32>
    %209 = arith.mulf %204, %208 : vector<16x128xf32>
    %c11 = arith.constant 11 : index
    %c0_80 = arith.constant 0 : index
    %210 = vector.load %arg7[%c11, %c0_80] : memref<36x384xf32, #tpu.memory_space<vmem>>, vector<1x128xf32>
    %211 = vector.broadcast %210 : vector<1x128xf32> to vector<16x128xf32>
    %212 = arith.mulf %209, %211 : vector<16x128xf32>
    %c12 = arith.constant 12 : index
    %c0_81 = arith.constant 0 : index
    %213 = vector.load %arg7[%c12, %c0_81] : memref<36x384xf32, #tpu.memory_space<vmem>>, vector<1x128xf32>
    %214 = vector.broadcast %213 : vector<1x128xf32> to vector<16x128xf32>
    %215 = arith.addf %212, %214 : vector<16x128xf32>
    %c4_82 = arith.constant 4 : index
    %c0_83 = arith.constant 0 : index
    %c0_84 = arith.constant 0 : index
    %216 = vector.load %arg5[%c4_82, %c0_83, %c0_84] : memref<10x128x384xbf16, #tpu.memory_space<vmem>>, vector<1x128x384xbf16>
    %217 = vector.shape_cast %216 : vector<1x128x384xbf16> to vector<128x384xbf16>
    %218 = arith.truncf %215 : vector<16x128xf32> to vector<16x128xbf16>
    %cst_85 = arith.constant dense<0.000000e+00> : vector<16x384xf32>
    %219 = tpu.matmul %218, %217, %cst_85 {dimension_numbers = #tpu.dot_dimension_numbers<[1], [0], [0], [1], [0, 0, 1, 1], [], []>} : vector<16x128xbf16>, vector<128x384xbf16>, vector<16x384xf32> -> vector<16x384xf32>
    %c13 = arith.constant 13 : index
    %c0_86 = arith.constant 0 : index
    %220 = vector.load %arg7[%c13, %c0_86] : memref<36x384xf32, #tpu.memory_space<vmem>>, vector<1x384xf32>
    %221 = vector.broadcast %220 : vector<1x384xf32> to vector<16x384xf32>
    %222 = arith.addf %219, %221 : vector<16x384xf32>
    %223 = vector.extract_strided_slice %222 {offsets = [0, 0], sizes = [16, 128], strides = [1, 1]} : vector<16x384xf32> to vector<16x128xf32>
    %224 = vector.shape_cast %223 : vector<16x128xf32> to vector<2x8x128xf32>
    %225 = vector.extract_strided_slice %222 {offsets = [0, 128], sizes = [16, 128], strides = [1, 1]} : vector<16x384xf32> to vector<16x128xf32>
    %226 = vector.shape_cast %225 : vector<16x128xf32> to vector<2x8x128xf32>
    %227 = vector.extract_strided_slice %222 {offsets = [0, 256], sizes = [16, 128], strides = [1, 1]} : vector<16x384xf32> to vector<16x128xf32>
    %228 = vector.shape_cast %227 : vector<16x128xf32> to vector<2x8x128xf32>
    %229 = arith.truncf %224 : vector<2x8x128xf32> to vector<2x8x128xbf16>
    %230 = arith.truncf %226 : vector<2x8x128xf32> to vector<2x8x128xbf16>
    "tpu.trace_start"() <{level = 10 : i32, message = "bqd,bkd->bqk"}> : () -> ()
    %cst_87 = arith.constant dense<0.000000e+00> : vector<2x8x8xf32>
    %231 = tpu.matmul %229, %230, %cst_87 {dimension_numbers = #tpu.dot_dimension_numbers<[2], [2], [1], [1], [0, 0, 0, 1, 1, 1], [0], [0]>} : vector<2x8x128xbf16>, vector<2x8x128xbf16>, vector<2x8x8xf32> -> vector<2x8x8xf32>
    "tpu.trace_stop"() : () -> ()
    %cst_88 = arith.constant 0.176776692 : f32
    %232 = vector.broadcast %cst_88 : f32 to vector<2x8x8xf32>
    %233 = arith.mulf %231, %232 : vector<2x8x8xf32>
    %cst_89 = arith.constant dense<0xFF800000> : vector<2x8xf32>
    %234 = vector.multi_reduction <maximumf>, %233, %cst_89 [2] : vector<2x8x8xf32> to vector<2x8xf32>
    %235 = vector.shape_cast %234 : vector<2x8xf32> to vector<2x8x1xf32>
    %236 = vector.broadcast %235 : vector<2x8x1xf32> to vector<2x8x8xf32>
    %237 = arith.subf %233, %236 : vector<2x8x8xf32>
    %238 = math.exp %237 : vector<2x8x8xf32>
    %cst_90 = arith.constant dense<0.000000e+00> : vector<2x8xf32>
    %239 = vector.multi_reduction <add>, %238, %cst_90 [2] : vector<2x8x8xf32> to vector<2x8xf32>
    %240 = vector.shape_cast %239 : vector<2x8xf32> to vector<2x8x1xf32>
    %241 = tpu.reciprocal %240 {approx = true} : vector<2x8x1xf32> -> vector<2x8x1xf32>
    %242 = vector.broadcast %241 : vector<2x8x1xf32> to vector<2x8x8xf32>
    %243 = arith.mulf %238, %242 : vector<2x8x8xf32>
    %244 = arith.truncf %243 : vector<2x8x8xf32> to vector<2x8x8xbf16>
    %245 = arith.truncf %228 : vector<2x8x128xf32> to vector<2x8x128xbf16>
    "tpu.trace_start"() <{level = 10 : i32, message = "bqk,bkd->bqd"}> : () -> ()
    %cst_91 = arith.constant dense<0.000000e+00> : vector<2x8x128xf32>
    %246 = tpu.matmul %244, %245, %cst_91 {dimension_numbers = #tpu.dot_dimension_numbers<[2], [1], [1], [2], [0, 0, 0, 1, 1, 2], [0], [0]>} : vector<2x8x8xbf16>, vector<2x8x128xbf16>, vector<2x8x128xf32> -> vector<2x8x128xf32>
    "tpu.trace_stop"() : () -> ()
    %247 = vector.shape_cast %246 : vector<2x8x128xf32> to vector<16x128xf32>
    %c4_92 = arith.constant 4 : index
    %c0_93 = arith.constant 0 : index
    %c0_94 = arith.constant 0 : index
    %248 = vector.load %arg4[%c4_92, %c0_93, %c0_94] : memref<9x128x128xbf16, #tpu.memory_space<vmem>>, vector<1x128x128xbf16>
    %249 = vector.shape_cast %248 : vector<1x128x128xbf16> to vector<128x128xbf16>
    %250 = arith.truncf %247 : vector<16x128xf32> to vector<16x128xbf16>
    %cst_95 = arith.constant dense<0.000000e+00> : vector<16x128xf32>
    %251 = tpu.matmul %250, %249, %cst_95 {dimension_numbers = #tpu.dot_dimension_numbers<[1], [0], [0], [1], [0, 0, 1, 1], [], []>} : vector<16x128xbf16>, vector<128x128xbf16>, vector<16x128xf32> -> vector<16x128xf32>
    %c14 = arith.constant 14 : index
    %c0_96 = arith.constant 0 : index
    %252 = vector.load %arg7[%c14, %c0_96] : memref<36x384xf32, #tpu.memory_space<vmem>>, vector<1x128xf32>
    %253 = vector.broadcast %252 : vector<1x128xf32> to vector<16x128xf32>
    %254 = arith.addf %251, %253 : vector<16x128xf32>
    %255 = arith.addf %215, %254 : vector<16x128xf32>
    %cst_97 = arith.constant dense<0.000000e+00> : vector<16xf32>
    %256 = vector.multi_reduction <add>, %255, %cst_97 [1] : vector<16x128xf32> to vector<16xf32>
    %257 = vector.shape_cast %256 : vector<16xf32> to vector<16x1xf32>
    %cst_98 = arith.constant 3.125000e-02 : f32
    %258 = vector.broadcast %cst_98 : f32 to vector<16x1xf32>
    %259 = arith.mulf %257, %258 : vector<16x1xf32>
    %260 = arith.mulf %255, %255 : vector<16x128xf32>
    %cst_99 = arith.constant dense<0.000000e+00> : vector<16xf32>
    %261 = vector.multi_reduction <add>, %260, %cst_99 [1] : vector<16x128xf32> to vector<16xf32>
    %262 = vector.shape_cast %261 : vector<16xf32> to vector<16x1xf32>
    %cst_100 = arith.constant 3.125000e-02 : f32
    %263 = vector.broadcast %cst_100 : f32 to vector<16x1xf32>
    %264 = arith.mulf %262, %263 : vector<16x1xf32>
    %265 = arith.mulf %259, %259 : vector<16x1xf32>
    %266 = arith.subf %264, %265 : vector<16x1xf32>
    %267 = vector.broadcast %259 : vector<16x1xf32> to vector<16x128xf32>
    %268 = arith.subf %255, %267 : vector<16x128xf32>
    %cst_101 = arith.constant 9.99999974E-6 : f32
    %269 = vector.broadcast %cst_101 : f32 to vector<16x1xf32>
    %270 = arith.addf %266, %269 : vector<16x1xf32>
    %271 = math.rsqrt %270 : vector<16x1xf32>
    %272 = vector.broadcast %271 : vector<16x1xf32> to vector<16x128xf32>
    %273 = arith.mulf %268, %272 : vector<16x128xf32>
    %c15 = arith.constant 15 : index
    %c0_102 = arith.constant 0 : index
    %274 = vector.load %arg7[%c15, %c0_102] : memref<36x384xf32, #tpu.memory_space<vmem>>, vector<1x128xf32>
    %275 = vector.broadcast %274 : vector<1x128xf32> to vector<16x128xf32>
    %276 = arith.mulf %273, %275 : vector<16x128xf32>
    %c16 = arith.constant 16 : index
    %c0_103 = arith.constant 0 : index
    %277 = vector.load %arg7[%c16, %c0_103] : memref<36x384xf32, #tpu.memory_space<vmem>>, vector<1x128xf32>
    %278 = vector.broadcast %277 : vector<1x128xf32> to vector<16x128xf32>
    %279 = arith.addf %276, %278 : vector<16x128xf32>
    %c5_104 = arith.constant 5 : index
    %c0_105 = arith.constant 0 : index
    %c0_106 = arith.constant 0 : index
    %280 = vector.load %arg5[%c5_104, %c0_105, %c0_106] : memref<10x128x384xbf16, #tpu.memory_space<vmem>>, vector<1x128x384xbf16>
    %281 = vector.shape_cast %280 : vector<1x128x384xbf16> to vector<128x384xbf16>
    %282 = vector.extract_strided_slice %281 {offsets = [0, 0], sizes = [128, 256], strides = [1, 1]} : vector<128x384xbf16> to vector<128x256xbf16>
    %283 = arith.truncf %279 : vector<16x128xf32> to vector<16x128xbf16>
    %cst_107 = arith.constant dense<0.000000e+00> : vector<16x256xf32>
    %284 = tpu.matmul %283, %282, %cst_107 {dimension_numbers = #tpu.dot_dimension_numbers<[1], [0], [0], [1], [0, 0, 1, 1], [], []>} : vector<16x128xbf16>, vector<128x256xbf16>, vector<16x256xf32> -> vector<16x256xf32>
    %c17 = arith.constant 17 : index
    %c0_108 = arith.constant 0 : index
    %285 = vector.load %arg7[%c17, %c0_108] : memref<36x384xf32, #tpu.memory_space<vmem>>, vector<1x256xf32>
    %286 = vector.broadcast %285 : vector<1x256xf32> to vector<16x256xf32>
    %287 = arith.addf %284, %286 : vector<16x256xf32>
    %cst_109 = arith.constant 0.000000e+00 : f32
    %288 = vector.broadcast %cst_109 : f32 to vector<16x256xf32>
    %289 = arith.maximumf %287, %288 : vector<16x256xf32>
    %c1_110 = arith.constant 1 : index
    %c0_111 = arith.constant 0 : index
    %c0_112 = arith.constant 0 : index
    %290 = vector.load %arg6[%c1_110, %c0_111, %c0_112] : memref<3x256x128xbf16, #tpu.memory_space<vmem>>, vector<1x256x128xbf16>
    %291 = vector.shape_cast %290 : vector<1x256x128xbf16> to vector<256x128xbf16>
    %292 = arith.truncf %289 : vector<16x256xf32> to vector<16x256xbf16>
    %cst_113 = arith.constant dense<0.000000e+00> : vector<16x128xf32>
    %293 = tpu.matmul %292, %291, %cst_113 {dimension_numbers = #tpu.dot_dimension_numbers<[1], [0], [0], [1], [0, 0, 1, 1], [], []>} : vector<16x256xbf16>, vector<256x128xbf16>, vector<16x128xf32> -> vector<16x128xf32>
    %c18 = arith.constant 18 : index
    %c0_114 = arith.constant 0 : index
    %294 = vector.load %arg7[%c18, %c0_114] : memref<36x384xf32, #tpu.memory_space<vmem>>, vector<1x128xf32>
    %295 = vector.broadcast %294 : vector<1x128xf32> to vector<16x128xf32>
    %296 = arith.addf %293, %295 : vector<16x128xf32>
    %297 = arith.addf %279, %296 : vector<16x128xf32>
    %cst_115 = arith.constant dense<0.000000e+00> : vector<16xf32>
    %298 = vector.multi_reduction <add>, %297, %cst_115 [1] : vector<16x128xf32> to vector<16xf32>
    %299 = vector.shape_cast %298 : vector<16xf32> to vector<16x1xf32>
    %cst_116 = arith.constant 3.125000e-02 : f32
    %300 = vector.broadcast %cst_116 : f32 to vector<16x1xf32>
    %301 = arith.mulf %299, %300 : vector<16x1xf32>
    %302 = arith.mulf %297, %297 : vector<16x128xf32>
    %cst_117 = arith.constant dense<0.000000e+00> : vector<16xf32>
    %303 = vector.multi_reduction <add>, %302, %cst_117 [1] : vector<16x128xf32> to vector<16xf32>
    %304 = vector.shape_cast %303 : vector<16xf32> to vector<16x1xf32>
    %cst_118 = arith.constant 3.125000e-02 : f32
    %305 = vector.broadcast %cst_118 : f32 to vector<16x1xf32>
    %306 = arith.mulf %304, %305 : vector<16x1xf32>
    %307 = arith.mulf %301, %301 : vector<16x1xf32>
    %308 = arith.subf %306, %307 : vector<16x1xf32>
    %309 = vector.broadcast %301 : vector<16x1xf32> to vector<16x128xf32>
    %310 = arith.subf %297, %309 : vector<16x128xf32>
    %cst_119 = arith.constant 9.99999974E-6 : f32
    %311 = vector.broadcast %cst_119 : f32 to vector<16x1xf32>
    %312 = arith.addf %308, %311 : vector<16x1xf32>
    %313 = math.rsqrt %312 : vector<16x1xf32>
    %314 = vector.broadcast %313 : vector<16x1xf32> to vector<16x128xf32>
    %315 = arith.mulf %310, %314 : vector<16x128xf32>
    %c19 = arith.constant 19 : index
    %c0_120 = arith.constant 0 : index
    %316 = vector.load %arg7[%c19, %c0_120] : memref<36x384xf32, #tpu.memory_space<vmem>>, vector<1x128xf32>
    %317 = vector.broadcast %316 : vector<1x128xf32> to vector<16x128xf32>
    %318 = arith.mulf %315, %317 : vector<16x128xf32>
    %c20 = arith.constant 20 : index
    %c0_121 = arith.constant 0 : index
    %319 = vector.load %arg7[%c20, %c0_121] : memref<36x384xf32, #tpu.memory_space<vmem>>, vector<1x128xf32>
    %320 = vector.broadcast %319 : vector<1x128xf32> to vector<16x128xf32>
    %321 = arith.addf %318, %320 : vector<16x128xf32>
    %322 = vector.shape_cast %321 : vector<16x128xf32> to vector<2x8x128xf32>
    %323 = vector.extract_strided_slice %322 {offsets = [0, 7, 0], sizes = [2, 1, 128], strides = [1, 1, 1]} : vector<2x8x128xf32> to vector<2x1x128xf32>
    %324 = vector.shape_cast %323 : vector<2x1x128xf32> to vector<2x128xf32>
    %c6_122 = arith.constant 6 : index
    %c0_123 = arith.constant 0 : index
    %c0_124 = arith.constant 0 : index
    %325 = vector.load %arg5[%c6_122, %c0_123, %c0_124] : memref<10x128x384xbf16, #tpu.memory_space<vmem>>, vector<1x128x384xbf16>
    %326 = vector.shape_cast %325 : vector<1x128x384xbf16> to vector<128x384xbf16>
    %327 = arith.truncf %324 : vector<2x128xf32> to vector<2x128xbf16>
    %cst_125 = arith.constant dense<0.000000e+00> : vector<2x384xf32>
    %328 = tpu.matmul %327, %326, %cst_125 {dimension_numbers = #tpu.dot_dimension_numbers<[1], [0], [0], [1], [0, 0, 1, 1], [], []>} : vector<2x128xbf16>, vector<128x384xbf16>, vector<2x384xf32> -> vector<2x384xf32>
    %c21 = arith.constant 21 : index
    %c0_126 = arith.constant 0 : index
    %329 = vector.load %arg7[%c21, %c0_126] : memref<36x384xf32, #tpu.memory_space<vmem>>, vector<1x384xf32>
    %330 = vector.broadcast %329 : vector<1x384xf32> to vector<2x384xf32>
    %331 = arith.addf %328, %330 : vector<2x384xf32>
    %332 = vector.extract_strided_slice %331 {offsets = [0, 0], sizes = [2, 128], strides = [1, 1]} : vector<2x384xf32> to vector<2x128xf32>
    %333 = vector.shape_cast %332 : vector<2x128xf32> to vector<2x1x128xf32>
    %334 = vector.extract_strided_slice %331 {offsets = [0, 128], sizes = [2, 128], strides = [1, 1]} : vector<2x384xf32> to vector<2x128xf32>
    %335 = vector.shape_cast %334 : vector<2x128xf32> to vector<2x1x128xf32>
    %336 = vector.extract_strided_slice %331 {offsets = [0, 256], sizes = [2, 128], strides = [1, 1]} : vector<2x384xf32> to vector<2x128xf32>
    %337 = vector.shape_cast %336 : vector<2x128xf32> to vector<2x1x128xf32>
    %338 = arith.truncf %333 : vector<2x1x128xf32> to vector<2x1x128xbf16>
    %339 = arith.truncf %335 : vector<2x1x128xf32> to vector<2x1x128xbf16>
    "tpu.trace_start"() <{level = 10 : i32, message = "bqd,bkd->bqk"}> : () -> ()
    %cst_127 = arith.constant dense<0.000000e+00> : vector<2x1x1xf32>
    %340 = tpu.matmul %338, %339, %cst_127 {dimension_numbers = #tpu.dot_dimension_numbers<[2], [2], [1], [1], [0, 0, 0, 1, 1, 1], [0], [0]>} : vector<2x1x128xbf16>, vector<2x1x128xbf16>, vector<2x1x1xf32> -> vector<2x1x1xf32>
    "tpu.trace_stop"() : () -> ()
    %cst_128 = arith.constant 0.176776692 : f32
    %341 = vector.broadcast %cst_128 : f32 to vector<2x1x1xf32>
    %342 = arith.mulf %340, %341 : vector<2x1x1xf32>
    %cst_129 = arith.constant dense<0xFF800000> : vector<2x1xf32>
    %343 = vector.multi_reduction <maximumf>, %342, %cst_129 [2] : vector<2x1x1xf32> to vector<2x1xf32>
    %344 = vector.shape_cast %343 : vector<2x1xf32> to vector<2x1x1xf32>
    %345 = arith.subf %342, %344 : vector<2x1x1xf32>
    %346 = math.exp %345 : vector<2x1x1xf32>
    %cst_130 = arith.constant dense<0.000000e+00> : vector<2x1xf32>
    %347 = vector.multi_reduction <add>, %346, %cst_130 [2] : vector<2x1x1xf32> to vector<2x1xf32>
    %348 = vector.shape_cast %347 : vector<2x1xf32> to vector<2x1x1xf32>
    %349 = tpu.reciprocal %348 {approx = true} : vector<2x1x1xf32> -> vector<2x1x1xf32>
    %350 = arith.mulf %346, %349 : vector<2x1x1xf32>
    %351 = arith.truncf %350 : vector<2x1x1xf32> to vector<2x1x1xbf16>
    %352 = arith.truncf %337 : vector<2x1x128xf32> to vector<2x1x128xbf16>
    "tpu.trace_start"() <{level = 10 : i32, message = "bqk,bkd->bqd"}> : () -> ()
    %cst_131 = arith.constant dense<0.000000e+00> : vector<2x1x128xf32>
    %353 = tpu.matmul %351, %352, %cst_131 {dimension_numbers = #tpu.dot_dimension_numbers<[2], [1], [1], [2], [0, 0, 0, 1, 1, 2], [0], [0]>} : vector<2x1x1xbf16>, vector<2x1x128xbf16>, vector<2x1x128xf32> -> vector<2x1x128xf32>
    "tpu.trace_stop"() : () -> ()
    %354 = vector.shape_cast %353 : vector<2x1x128xf32> to vector<2x128xf32>
    %c5_132 = arith.constant 5 : index
    %c0_133 = arith.constant 0 : index
    %c0_134 = arith.constant 0 : index
    %355 = vector.load %arg4[%c5_132, %c0_133, %c0_134] : memref<9x128x128xbf16, #tpu.memory_space<vmem>>, vector<1x128x128xbf16>
    %356 = vector.shape_cast %355 : vector<1x128x128xbf16> to vector<128x128xbf16>
    %357 = arith.truncf %354 : vector<2x128xf32> to vector<2x128xbf16>
    %cst_135 = arith.constant dense<0.000000e+00> : vector<2x128xf32>
    %358 = tpu.matmul %357, %356, %cst_135 {dimension_numbers = #tpu.dot_dimension_numbers<[1], [0], [0], [1], [0, 0, 1, 1], [], []>} : vector<2x128xbf16>, vector<128x128xbf16>, vector<2x128xf32> -> vector<2x128xf32>
    %c22 = arith.constant 22 : index
    %c0_136 = arith.constant 0 : index
    %359 = vector.load %arg7[%c22, %c0_136] : memref<36x384xf32, #tpu.memory_space<vmem>>, vector<1x128xf32>
    %360 = vector.broadcast %359 : vector<1x128xf32> to vector<2x128xf32>
    %361 = arith.addf %358, %360 : vector<2x128xf32>
    %362 = arith.addf %324, %361 : vector<2x128xf32>
    %cst_137 = arith.constant dense<0.000000e+00> : vector<2xf32>
    %363 = vector.multi_reduction <add>, %362, %cst_137 [1] : vector<2x128xf32> to vector<2xf32>
    %364 = vector.shape_cast %363 : vector<2xf32> to vector<2x1xf32>
    %cst_138 = arith.constant 3.125000e-02 : f32
    %365 = vector.broadcast %cst_138 : f32 to vector<2x1xf32>
    %366 = arith.mulf %364, %365 : vector<2x1xf32>
    %367 = arith.mulf %362, %362 : vector<2x128xf32>
    %cst_139 = arith.constant dense<0.000000e+00> : vector<2xf32>
    %368 = vector.multi_reduction <add>, %367, %cst_139 [1] : vector<2x128xf32> to vector<2xf32>
    %369 = vector.shape_cast %368 : vector<2xf32> to vector<2x1xf32>
    %cst_140 = arith.constant 3.125000e-02 : f32
    %370 = vector.broadcast %cst_140 : f32 to vector<2x1xf32>
    %371 = arith.mulf %369, %370 : vector<2x1xf32>
    %372 = arith.mulf %366, %366 : vector<2x1xf32>
    %373 = arith.subf %371, %372 : vector<2x1xf32>
    %374 = vector.broadcast %366 : vector<2x1xf32> to vector<2x128xf32>
    %375 = arith.subf %362, %374 : vector<2x128xf32>
    %cst_141 = arith.constant 9.99999974E-6 : f32
    %376 = vector.broadcast %cst_141 : f32 to vector<2x1xf32>
    %377 = arith.addf %373, %376 : vector<2x1xf32>
    %378 = math.rsqrt %377 : vector<2x1xf32>
    %379 = vector.broadcast %378 : vector<2x1xf32> to vector<2x128xf32>
    %380 = arith.mulf %375, %379 : vector<2x128xf32>
    %c23 = arith.constant 23 : index
    %c0_142 = arith.constant 0 : index
    %381 = vector.load %arg7[%c23, %c0_142] : memref<36x384xf32, #tpu.memory_space<vmem>>, vector<1x128xf32>
    %382 = vector.broadcast %381 : vector<1x128xf32> to vector<2x128xf32>
    %383 = arith.mulf %380, %382 : vector<2x128xf32>
    %c24 = arith.constant 24 : index
    %c0_143 = arith.constant 0 : index
    %384 = vector.load %arg7[%c24, %c0_143] : memref<36x384xf32, #tpu.memory_space<vmem>>, vector<1x128xf32>
    %385 = vector.broadcast %384 : vector<1x128xf32> to vector<2x128xf32>
    %386 = arith.addf %383, %385 : vector<2x128xf32>
    %c6_144 = arith.constant 6 : index
    %c0_145 = arith.constant 0 : index
    %c0_146 = arith.constant 0 : index
    %387 = vector.load %arg4[%c6_144, %c0_145, %c0_146] : memref<9x128x128xbf16, #tpu.memory_space<vmem>>, vector<1x128x128xbf16>
    %388 = vector.shape_cast %387 : vector<1x128x128xbf16> to vector<128x128xbf16>
    %389 = arith.truncf %386 : vector<2x128xf32> to vector<2x128xbf16>
    %cst_147 = arith.constant dense<0.000000e+00> : vector<2x128xf32>
    %390 = tpu.matmul %389, %388, %cst_147 {dimension_numbers = #tpu.dot_dimension_numbers<[1], [0], [0], [1], [0, 0, 1, 1], [], []>} : vector<2x128xbf16>, vector<128x128xbf16>, vector<2x128xf32> -> vector<2x128xf32>
    %c25 = arith.constant 25 : index
    %c0_148 = arith.constant 0 : index
    %391 = vector.load %arg7[%c25, %c0_148] : memref<36x384xf32, #tpu.memory_space<vmem>>, vector<1x128xf32>
    %392 = vector.broadcast %391 : vector<1x128xf32> to vector<2x128xf32>
    %393 = arith.addf %390, %392 : vector<2x128xf32>
    %394 = vector.shape_cast %393 : vector<2x128xf32> to vector<2x1x128xf32>
    %c7_149 = arith.constant 7 : index
    %c0_150 = arith.constant 0 : index
    %c0_151 = arith.constant 0 : index
    %395 = vector.load %arg5[%c7_149, %c0_150, %c0_151] : memref<10x128x384xbf16, #tpu.memory_space<vmem>>, vector<1x128x384xbf16>
    %396 = vector.shape_cast %395 : vector<1x128x384xbf16> to vector<128x384xbf16>
    %397 = vector.extract_strided_slice %396 {offsets = [0, 0], sizes = [128, 256], strides = [1, 1]} : vector<128x384xbf16> to vector<128x256xbf16>
    %398 = arith.truncf %321 : vector<16x128xf32> to vector<16x128xbf16>
    %cst_152 = arith.constant dense<0.000000e+00> : vector<16x256xf32>
    %399 = tpu.matmul %398, %397, %cst_152 {dimension_numbers = #tpu.dot_dimension_numbers<[1], [0], [0], [1], [0, 0, 1, 1], [], []>} : vector<16x128xbf16>, vector<128x256xbf16>, vector<16x256xf32> -> vector<16x256xf32>
    %c26 = arith.constant 26 : index
    %c0_153 = arith.constant 0 : index
    %400 = vector.load %arg7[%c26, %c0_153] : memref<36x384xf32, #tpu.memory_space<vmem>>, vector<1x256xf32>
    %401 = vector.broadcast %400 : vector<1x256xf32> to vector<16x256xf32>
    %402 = arith.addf %399, %401 : vector<16x256xf32>
    %403 = vector.extract_strided_slice %402 {offsets = [0, 0], sizes = [16, 128], strides = [1, 1]} : vector<16x256xf32> to vector<16x128xf32>
    %404 = vector.shape_cast %403 : vector<16x128xf32> to vector<2x8x128xf32>
    %405 = vector.extract_strided_slice %402 {offsets = [0, 128], sizes = [16, 128], strides = [1, 1]} : vector<16x256xf32> to vector<16x128xf32>
    %406 = vector.shape_cast %405 : vector<16x128xf32> to vector<2x8x128xf32>
    %407 = arith.truncf %394 : vector<2x1x128xf32> to vector<2x1x128xbf16>
    %408 = arith.truncf %404 : vector<2x8x128xf32> to vector<2x8x128xbf16>
    "tpu.trace_start"() <{level = 10 : i32, message = "bqd,bkd->bqk"}> : () -> ()
    %cst_154 = arith.constant dense<0.000000e+00> : vector<2x1x8xf32>
    %409 = tpu.matmul %407, %408, %cst_154 {dimension_numbers = #tpu.dot_dimension_numbers<[2], [2], [1], [1], [0, 0, 0, 1, 1, 1], [0], [0]>} : vector<2x1x128xbf16>, vector<2x8x128xbf16>, vector<2x1x8xf32> -> vector<2x1x8xf32>
    "tpu.trace_stop"() : () -> ()
    %cst_155 = arith.constant 0.176776692 : f32
    %410 = vector.broadcast %cst_155 : f32 to vector<2x1x8xf32>
    %411 = arith.mulf %409, %410 : vector<2x1x8xf32>
    %cst_156 = arith.constant dense<0xFF800000> : vector<2x1xf32>
    %412 = vector.multi_reduction <maximumf>, %411, %cst_156 [2] : vector<2x1x8xf32> to vector<2x1xf32>
    %413 = vector.shape_cast %412 : vector<2x1xf32> to vector<2x1x1xf32>
    %414 = vector.broadcast %413 : vector<2x1x1xf32> to vector<2x1x8xf32>
    %415 = arith.subf %411, %414 : vector<2x1x8xf32>
    %416 = math.exp %415 : vector<2x1x8xf32>
    %cst_157 = arith.constant dense<0.000000e+00> : vector<2x1xf32>
    %417 = vector.multi_reduction <add>, %416, %cst_157 [2] : vector<2x1x8xf32> to vector<2x1xf32>
    %418 = vector.shape_cast %417 : vector<2x1xf32> to vector<2x1x1xf32>
    %419 = tpu.reciprocal %418 {approx = true} : vector<2x1x1xf32> -> vector<2x1x1xf32>
    %420 = vector.broadcast %419 : vector<2x1x1xf32> to vector<2x1x8xf32>
    %421 = arith.mulf %416, %420 : vector<2x1x8xf32>
    %422 = arith.truncf %421 : vector<2x1x8xf32> to vector<2x1x8xbf16>
    %423 = arith.truncf %406 : vector<2x8x128xf32> to vector<2x8x128xbf16>
    "tpu.trace_start"() <{level = 10 : i32, message = "bqk,bkd->bqd"}> : () -> ()
    %cst_158 = arith.constant dense<0.000000e+00> : vector<2x1x128xf32>
    %424 = tpu.matmul %422, %423, %cst_158 {dimension_numbers = #tpu.dot_dimension_numbers<[2], [1], [1], [2], [0, 0, 0, 1, 1, 2], [0], [0]>} : vector<2x1x8xbf16>, vector<2x8x128xbf16>, vector<2x1x128xf32> -> vector<2x1x128xf32>
    "tpu.trace_stop"() : () -> ()
    %425 = vector.shape_cast %424 : vector<2x1x128xf32> to vector<2x128xf32>
    %c7_159 = arith.constant 7 : index
    %c0_160 = arith.constant 0 : index
    %c0_161 = arith.constant 0 : index
    %426 = vector.load %arg4[%c7_159, %c0_160, %c0_161] : memref<9x128x128xbf16, #tpu.memory_space<vmem>>, vector<1x128x128xbf16>
    %427 = vector.shape_cast %426 : vector<1x128x128xbf16> to vector<128x128xbf16>
    %428 = arith.truncf %425 : vector<2x128xf32> to vector<2x128xbf16>
    %cst_162 = arith.constant dense<0.000000e+00> : vector<2x128xf32>
    %429 = tpu.matmul %428, %427, %cst_162 {dimension_numbers = #tpu.dot_dimension_numbers<[1], [0], [0], [1], [0, 0, 1, 1], [], []>} : vector<2x128xbf16>, vector<128x128xbf16>, vector<2x128xf32> -> vector<2x128xf32>
    %c27 = arith.constant 27 : index
    %c0_163 = arith.constant 0 : index
    %430 = vector.load %arg7[%c27, %c0_163] : memref<36x384xf32, #tpu.memory_space<vmem>>, vector<1x128xf32>
    %431 = vector.broadcast %430 : vector<1x128xf32> to vector<2x128xf32>
    %432 = arith.addf %429, %431 : vector<2x128xf32>
    %433 = arith.addf %386, %432 : vector<2x128xf32>
    %cst_164 = arith.constant dense<0.000000e+00> : vector<2xf32>
    %434 = vector.multi_reduction <add>, %433, %cst_164 [1] : vector<2x128xf32> to vector<2xf32>
    %435 = vector.shape_cast %434 : vector<2xf32> to vector<2x1xf32>
    %cst_165 = arith.constant 3.125000e-02 : f32
    %436 = vector.broadcast %cst_165 : f32 to vector<2x1xf32>
    %437 = arith.mulf %435, %436 : vector<2x1xf32>
    %438 = arith.mulf %433, %433 : vector<2x128xf32>
    %cst_166 = arith.constant dense<0.000000e+00> : vector<2xf32>
    %439 = vector.multi_reduction <add>, %438, %cst_166 [1] : vector<2x128xf32> to vector<2xf32>
    %440 = vector.shape_cast %439 : vector<2xf32> to vector<2x1xf32>
    %cst_167 = arith.constant 3.125000e-02 : f32
    %441 = vector.broadcast %cst_167 : f32 to vector<2x1xf32>
    %442 = arith.mulf %440, %441 : vector<2x1xf32>
    %443 = arith.mulf %437, %437 : vector<2x1xf32>
    %444 = arith.subf %442, %443 : vector<2x1xf32>
    %445 = vector.broadcast %437 : vector<2x1xf32> to vector<2x128xf32>
    %446 = arith.subf %433, %445 : vector<2x128xf32>
    %cst_168 = arith.constant 9.99999974E-6 : f32
    %447 = vector.broadcast %cst_168 : f32 to vector<2x1xf32>
    %448 = arith.addf %444, %447 : vector<2x1xf32>
    %449 = math.rsqrt %448 : vector<2x1xf32>
    %450 = vector.broadcast %449 : vector<2x1xf32> to vector<2x128xf32>
    %451 = arith.mulf %446, %450 : vector<2x128xf32>
    %c28 = arith.constant 28 : index
    %c0_169 = arith.constant 0 : index
    %452 = vector.load %arg7[%c28, %c0_169] : memref<36x384xf32, #tpu.memory_space<vmem>>, vector<1x128xf32>
    %453 = vector.broadcast %452 : vector<1x128xf32> to vector<2x128xf32>
    %454 = arith.mulf %451, %453 : vector<2x128xf32>
    %c29 = arith.constant 29 : index
    %c0_170 = arith.constant 0 : index
    %455 = vector.load %arg7[%c29, %c0_170] : memref<36x384xf32, #tpu.memory_space<vmem>>, vector<1x128xf32>
    %456 = vector.broadcast %455 : vector<1x128xf32> to vector<2x128xf32>
    %457 = arith.addf %454, %456 : vector<2x128xf32>
    %c8_171 = arith.constant 8 : index
    %c0_172 = arith.constant 0 : index
    %c0_173 = arith.constant 0 : index
    %458 = vector.load %arg5[%c8_171, %c0_172, %c0_173] : memref<10x128x384xbf16, #tpu.memory_space<vmem>>, vector<1x128x384xbf16>
    %459 = vector.shape_cast %458 : vector<1x128x384xbf16> to vector<128x384xbf16>
    %460 = vector.extract_strided_slice %459 {offsets = [0, 0], sizes = [128, 256], strides = [1, 1]} : vector<128x384xbf16> to vector<128x256xbf16>
    %461 = arith.truncf %457 : vector<2x128xf32> to vector<2x128xbf16>
    %cst_174 = arith.constant dense<0.000000e+00> : vector<2x256xf32>
    %462 = tpu.matmul %461, %460, %cst_174 {dimension_numbers = #tpu.dot_dimension_numbers<[1], [0], [0], [1], [0, 0, 1, 1], [], []>} : vector<2x128xbf16>, vector<128x256xbf16>, vector<2x256xf32> -> vector<2x256xf32>
    %c30 = arith.constant 30 : index
    %c0_175 = arith.constant 0 : index
    %463 = vector.load %arg7[%c30, %c0_175] : memref<36x384xf32, #tpu.memory_space<vmem>>, vector<1x256xf32>
    %464 = vector.broadcast %463 : vector<1x256xf32> to vector<2x256xf32>
    %465 = arith.addf %462, %464 : vector<2x256xf32>
    %cst_176 = arith.constant 0.000000e+00 : f32
    %466 = vector.broadcast %cst_176 : f32 to vector<2x256xf32>
    %467 = arith.maximumf %465, %466 : vector<2x256xf32>
    %c2_177 = arith.constant 2 : index
    %c0_178 = arith.constant 0 : index
    %c0_179 = arith.constant 0 : index
    %468 = vector.load %arg6[%c2_177, %c0_178, %c0_179] : memref<3x256x128xbf16, #tpu.memory_space<vmem>>, vector<1x256x128xbf16>
    %469 = vector.shape_cast %468 : vector<1x256x128xbf16> to vector<256x128xbf16>
    %470 = arith.truncf %467 : vector<2x256xf32> to vector<2x256xbf16>
    %cst_180 = arith.constant dense<0.000000e+00> : vector<2x128xf32>
    %471 = tpu.matmul %470, %469, %cst_180 {dimension_numbers = #tpu.dot_dimension_numbers<[1], [0], [0], [1], [0, 0, 1, 1], [], []>} : vector<2x256xbf16>, vector<256x128xbf16>, vector<2x128xf32> -> vector<2x128xf32>
    %c31 = arith.constant 31 : index
    %c0_181 = arith.constant 0 : index
    %472 = vector.load %arg7[%c31, %c0_181] : memref<36x384xf32, #tpu.memory_space<vmem>>, vector<1x128xf32>
    %473 = vector.broadcast %472 : vector<1x128xf32> to vector<2x128xf32>
    %474 = arith.addf %471, %473 : vector<2x128xf32>
    %475 = arith.addf %457, %474 : vector<2x128xf32>
    %cst_182 = arith.constant dense<0.000000e+00> : vector<2xf32>
    %476 = vector.multi_reduction <add>, %475, %cst_182 [1] : vector<2x128xf32> to vector<2xf32>
    %477 = vector.shape_cast %476 : vector<2xf32> to vector<2x1xf32>
    %cst_183 = arith.constant 3.125000e-02 : f32
    %478 = vector.broadcast %cst_183 : f32 to vector<2x1xf32>
    %479 = arith.mulf %477, %478 : vector<2x1xf32>
    %480 = arith.mulf %475, %475 : vector<2x128xf32>
    %cst_184 = arith.constant dense<0.000000e+00> : vector<2xf32>
    %481 = vector.multi_reduction <add>, %480, %cst_184 [1] : vector<2x128xf32> to vector<2xf32>
    %482 = vector.shape_cast %481 : vector<2xf32> to vector<2x1xf32>
    %cst_185 = arith.constant 3.125000e-02 : f32
    %483 = vector.broadcast %cst_185 : f32 to vector<2x1xf32>
    %484 = arith.mulf %482, %483 : vector<2x1xf32>
    %485 = arith.mulf %479, %479 : vector<2x1xf32>
    %486 = arith.subf %484, %485 : vector<2x1xf32>
    %487 = vector.broadcast %479 : vector<2x1xf32> to vector<2x128xf32>
    %488 = arith.subf %475, %487 : vector<2x128xf32>
    %cst_186 = arith.constant 9.99999974E-6 : f32
    %489 = vector.broadcast %cst_186 : f32 to vector<2x1xf32>
    %490 = arith.addf %486, %489 : vector<2x1xf32>
    %491 = math.rsqrt %490 : vector<2x1xf32>
    %492 = vector.broadcast %491 : vector<2x1xf32> to vector<2x128xf32>
    %493 = arith.mulf %488, %492 : vector<2x128xf32>
    %c32 = arith.constant 32 : index
    %c0_187 = arith.constant 0 : index
    %494 = vector.load %arg7[%c32, %c0_187] : memref<36x384xf32, #tpu.memory_space<vmem>>, vector<1x128xf32>
    %495 = vector.broadcast %494 : vector<1x128xf32> to vector<2x128xf32>
    %496 = arith.mulf %493, %495 : vector<2x128xf32>
    %c33 = arith.constant 33 : index
    %c0_188 = arith.constant 0 : index
    %497 = vector.load %arg7[%c33, %c0_188] : memref<36x384xf32, #tpu.memory_space<vmem>>, vector<1x128xf32>
    %498 = vector.broadcast %497 : vector<1x128xf32> to vector<2x128xf32>
    %499 = arith.addf %496, %498 : vector<2x128xf32>
    %c9_189 = arith.constant 9 : index
    %c0_190 = arith.constant 0 : index
    %c0_191 = arith.constant 0 : index
    %500 = vector.load %arg5[%c9_189, %c0_190, %c0_191] : memref<10x128x384xbf16, #tpu.memory_space<vmem>>, vector<1x128x384xbf16>
    %501 = vector.shape_cast %500 : vector<1x128x384xbf16> to vector<128x384xbf16>
    %502 = vector.extract_strided_slice %501 {offsets = [0, 0], sizes = [128, 256], strides = [1, 1]} : vector<128x384xbf16> to vector<128x256xbf16>
    %503 = arith.truncf %499 : vector<2x128xf32> to vector<2x128xbf16>
    %cst_192 = arith.constant dense<0.000000e+00> : vector<2x256xf32>
    %504 = tpu.matmul %503, %502, %cst_192 {dimension_numbers = #tpu.dot_dimension_numbers<[1], [0], [0], [1], [0, 0, 1, 1], [], []>} : vector<2x128xbf16>, vector<128x256xbf16>, vector<2x256xf32> -> vector<2x256xf32>
    %c34 = arith.constant 34 : index
    %c0_193 = arith.constant 0 : index
    %505 = vector.load %arg7[%c34, %c0_193] : memref<36x384xf32, #tpu.memory_space<vmem>>, vector<1x256xf32>
    %506 = vector.broadcast %505 : vector<1x256xf32> to vector<2x256xf32>
    %507 = arith.addf %504, %506 : vector<2x256xf32>
    %508 = vector.extract_strided_slice %507 {offsets = [0, 0], sizes = [2, 128], strides = [1, 1]} : vector<2x256xf32> to vector<2x128xf32>
    %509 = vector.extract_strided_slice %507 {offsets = [0, 128], sizes = [2, 128], strides = [1, 1]} : vector<2x256xf32> to vector<2x128xf32>
    %c0_194 = arith.constant 0 : index
    %c0_195 = arith.constant 0 : index
    %510 = vector.load %arg3[%c0_194, %c0_195] : memref<2x128xf32, #tpu.memory_space<vmem>>, vector<2x128xf32>
    %cst_196 = arith.constant 5.000000e-01 : f32
    %511 = vector.broadcast %cst_196 : f32 to vector<2x128xf32>
    %512 = arith.mulf %511, %509 : vector<2x128xf32>
    %513 = math.exp %512 : vector<2x128xf32>
    %514 = arith.mulf %510, %513 : vector<2x128xf32>
    %515 = arith.addf %508, %514 : vector<2x128xf32>
    %c8_197 = arith.constant 8 : index
    %c0_198 = arith.constant 0 : index
    %c0_199 = arith.constant 0 : index
    %516 = vector.load %arg4[%c8_197, %c0_198, %c0_199] : memref<9x128x128xbf16, #tpu.memory_space<vmem>>, vector<1x128x128xbf16>
    %517 = vector.shape_cast %516 : vector<1x128x128xbf16> to vector<128x128xbf16>
    %518 = arith.truncf %515 : vector<2x128xf32> to vector<2x128xbf16>
    %cst_200 = arith.constant dense<0.000000e+00> : vector<2x128xf32>
    %519 = tpu.matmul %518, %517, %cst_200 {dimension_numbers = #tpu.dot_dimension_numbers<[1], [0], [0], [1], [0, 0, 1, 1], [], []>} : vector<2x128xbf16>, vector<128x128xbf16>, vector<2x128xf32> -> vector<2x128xf32>
    %c35 = arith.constant 35 : index
    %c0_201 = arith.constant 0 : index
    %520 = vector.load %arg7[%c35, %c0_201] : memref<36x384xf32, #tpu.memory_space<vmem>>, vector<1x128xf32>
    %521 = vector.broadcast %520 : vector<1x128xf32> to vector<2x128xf32>
    %522 = arith.addf %519, %521 : vector<2x128xf32>
    %523 = arith.negf %522 : vector<2x128xf32>
    %524 = math.exp %523 : vector<2x128xf32>
    %cst_202 = arith.constant 1.000000e+00 : f32
    %525 = vector.broadcast %cst_202 : f32 to vector<2x128xf32>
    %526 = arith.addf %525, %524 : vector<2x128xf32>
    %527 = arith.divf %525, %526 : vector<2x128xf32>
    %c0_203 = arith.constant 0 : index
    %c0_204 = arith.constant 0 : index
    %528 = vector.load %arg8[%c0_203, %c0_204] : memref<8x128xf32, #tpu.memory_space<vmem>>, vector<2x128xf32>
    tpu.vector_store %arg8[%c0_203, %c0_204], %527 {strides = array<i32>} : memref<8x128xf32, #tpu.memory_space<vmem>>, vector<2x128xf32>,
    %c2_205 = arith.constant 2 : index
    %c0_206 = arith.constant 0 : index
    %529 = vector.load %arg8[%c2_205, %c0_206] : memref<8x128xf32, #tpu.memory_space<vmem>>, vector<2x128xf32>
    tpu.vector_store %arg8[%c2_205, %c0_206], %508 {strides = array<i32>} : memref<8x128xf32, #tpu.memory_space<vmem>>, vector<2x128xf32>,
    %c4_207 = arith.constant 4 : index
    %c0_208 = arith.constant 0 : index
    %530 = vector.load %arg8[%c4_207, %c0_208] : memref<8x128xf32, #tpu.memory_space<vmem>>, vector<2x128xf32>
    tpu.vector_store %arg8[%c4_207, %c0_208], %509 {strides = array<i32>} : memref<8x128xf32, #tpu.memory_space<vmem>>, vector<2x128xf32>,
    %cst_209 = arith.constant 0.000000e+00 : f32
    %531 = vector.broadcast %cst_209 : f32 to vector<2x128xf32>
    %c6_210 = arith.constant 6 : index
    %c0_211 = arith.constant 0 : index
    %532 = vector.load %arg8[%c6_210, %c0_211] : memref<8x128xf32, #tpu.memory_space<vmem>>, vector<2x128xf32>
    tpu.vector_store %arg8[%c6_210, %c0_211], %531 {strides = array<i32>} : memref<8x128xf32, #tpu.memory_space<vmem>>, vector<2x128xf32>,
    return
  }
  func.func @transform_0(%arg0: i32) -> (i32, i32, i32) {
    %c0_i32 = arith.constant 0 : i32
    %c0_i32_0 = arith.constant 0 : i32
    %c0_i32_1 = arith.constant 0 : i32
    %c0_i32_2 = arith.constant 0 : i32
    return %c0_i32, %c0_i32_0, %c0_i32_1 : i32, i32, i32
  }
  func.func @transform_1(%arg0: i32) -> (i32, i32) {
    %c0_i32 = arith.constant 0 : i32
    %c0_i32_0 = arith.constant 0 : i32
    %c0_i32_1 = arith.constant 0 : i32
    return %c0_i32, %c0_i32_0 : i32, i32
  }
  func.func @transform_2(%arg0: i32) -> (i32, i32) {
    %c0_i32 = arith.constant 0 : i32
    %c0_i32_0 = arith.constant 0 : i32
    %c0_i32_1 = arith.constant 0 : i32
    return %c0_i32, %c0_i32_0 : i32, i32
  }
  func.func @transform_3(%arg0: i32) -> (i32, i32, i32) {
    %c0_i32 = arith.constant 0 : i32
    %c0_i32_0 = arith.constant 0 : i32
    %c0_i32_1 = arith.constant 0 : i32
    %c0_i32_2 = arith.constant 0 : i32
    return %c0_i32, %c0_i32_0, %c0_i32_1 : i32, i32, i32
  }
  func.func @transform_4(%arg0: i32) -> (i32, i32, i32) {
    %c0_i32 = arith.constant 0 : i32
    %c0_i32_0 = arith.constant 0 : i32
    %c0_i32_1 = arith.constant 0 : i32
    %c0_i32_2 = arith.constant 0 : i32
    return %c0_i32, %c0_i32_0, %c0_i32_1 : i32, i32, i32
  }
  func.func @transform_5(%arg0: i32) -> (i32, i32, i32) {
    %c0_i32 = arith.constant 0 : i32
    %c0_i32_0 = arith.constant 0 : i32
    %c0_i32_1 = arith.constant 0 : i32
    %c0_i32_2 = arith.constant 0 : i32
    return %c0_i32, %c0_i32_0, %c0_i32_1 : i32, i32, i32
  }
  func.func @transform_6(%arg0: i32) -> (i32, i32) {
    %c0_i32 = arith.constant 0 : i32
    %c0_i32_0 = arith.constant 0 : i32
    %c0_i32_1 = arith.constant 0 : i32
    return %c0_i32, %c0_i32_0 : i32, i32
  }
  func.func @transform_7(%arg0: i32) -> (i32, i32) {
    %c0_i32 = arith.constant 0 : i32
    %c0_i32_0 = arith.constant 0 : i32
    %c0_i32_1 = arith.constant 0 : i32
    return %c0_i32, %c0_i32_0 : i32, i32
  }
}

</mosaic_0001>

<llo_original>
// kernel: stad_forward.1
$region0: #{stad_forward.1}
  #allocation0 [shape = 'u32[]', space=smem, size = 0x4, offset = 0x4, fixed_abs, tag = 'smem constant byte address 0x4 - core index']
  #allocation1 [shape = 'u32[144,128]{1,0:T(1,128)}', space=vmem, size = 0x12000, scoped, tag = 'internal scratch']
  %s0 = inlined_call_operand.vmem [shape: f32[2,8,128], index: 0, kind: input, shape index: {}]
  %s1 = inlined_call_operand.vmem [shape: f32[8,128], index: 1, kind: input, shape index: {}]
  %s2 = inlined_call_operand.vmem [shape: f32[2,128], index: 2, kind: input, shape index: {}]
  %s3 = inlined_call_operand.hbm [shape: bf16[9,128,128], index: 3, kind: input, shape index: {}]
  %s4 = inlined_call_operand.hbm [shape: bf16[10,128,384], index: 4, kind: input, shape index: {}]
  %s5 = inlined_call_operand.hbm [shape: bf16[3,256,128], index: 5, kind: input, shape index: {}]
  %s6 = inlined_call_operand.hbm [shape: f32[36,384], index: 6, kind: input, shape index: {}]
  %s7 = inlined_call_operand.vmem [shape: f32[8,128], index: 7, kind: output, shape index: {}]
  %s8 = sld [smem:[#allocation0]]
  $region54: #{stad_forward.1} parent=0
    _
  %s10 = ssub.s32 1, %s8
  %s11 = scalar_select 0, %s10, %s8
  $region1: #{stad_forward.1} parent=0
    #allocation2 [shape = 'u8[294912]{0}', space=vmem, size = 0x48000, scoped, tag = 'input window, operand 3, single buffered']
    #allocation3 [shape = 's32[1]{0}', space=sflag, size = 0x4, scoped, tag = 'scoped memory for stad_forward.1']
    #allocation4 [shape = 'u8[983040]{0}', space=vmem, size = 0xf0000, scoped, tag = 'input window, operand 4, single buffered']
    #allocation5 [shape = 's32[1]{0}', space=sflag, size = 0x4, scoped, tag = 'scoped memory for stad_forward.1']
    #allocation6 [shape = 'u8[196608]{0}', space=vmem, size = 0x30000, scoped, tag = 'input window, operand 5, single buffered']
    #allocation7 [shape = 'u8[61440]{0}', space=vmem, size = 0xf000, scoped, tag = 'input window, operand 6, single buffered']
    #allocation8 [shape = 's32[1]{0}', space=sflag, size = 0x4, scoped, tag = 'scoped memory for stad_forward.1']
    %12 = vsyncpa [#allocation3], 0
    %13 = vsyncpa [#allocation5], 0
    %14 = vsyncpa [#allocation8], 0
    // Predicated region
    $region2: #{stad_forward.1} parent=1 // pred_check
      _
    $region3: #{stad_forward.1} parent=1 // pred_check_branch
      %16 = sbr.rel (0) target = $region5
    $region4: #{stad_forward.1} parent=1 // pred_region
      _
    $region5: #{stad_forward.1} parent=1 // pred_fallthru
      _
    // Predicated region
    $region6: #{stad_forward.1} parent=1 // pred_check
      _
    $region7: #{stad_forward.1} parent=1 // pred_check_branch
      %18 = sbr.rel (0) target = $region9
    $region8: #{stad_forward.1} parent=1 // pred_region
      _
    $region9: #{stad_forward.1} parent=1 // pred_fallthru
      _
    // Predicated region
    $region10: #{stad_forward.1} parent=1 // pred_check
      _
    $region11: #{stad_forward.1} parent=1 // pred_check_branch
      %20 = sbr.rel (0) target = $region13
    $region12: #{stad_forward.1} parent=1 // pred_region
      _
    $region13: #{stad_forward.1} parent=1 // pred_fallthru
      _
    // Predicated region
    $region14: #{stad_forward.1} parent=1 // pred_check
      _
    $region15: #{stad_forward.1} parent=1 // pred_check_branch
      %22 = sbr.rel (0) target = $region17
    $region16: #{stad_forward.1} parent=1 // pred_region
      %s24 = ssub.s32 9216, 9216
      %25 = vsyncadd [#allocation3], %s24
      %s26 = sshll.u32 [#allocation2], 4
      %s27 = int_to_ptr.vmem [resolvable:$true] %s26
      %32 = dma.hbm_to_vmem [thread:$0]  %s3, 9216, %s27, [#allocation3], 64, 64, 4
    $region17: #{stad_forward.1} parent=1 // pred_fallthru
      _
    // Predicated region
    $region18: #{stad_forward.1} parent=1 // pred_check
      _
    $region19: #{stad_forward.1} parent=1 // pred_check_branch
      %34 = sbr.rel (0) target = $region21
    $region20: #{stad_forward.1} parent=1 // pred_region
      %s36 = ssub.s32 30720, 30720
      %37 = vsyncadd [#allocation5], %s36
      %s38 = sshll.u32 [#allocation4], 4
      %s39 = int_to_ptr.vmem [resolvable:$true] %s38
      %44 = dma.hbm_to_vmem [thread:$0]  %s4, 30720, %s39, [#allocation5], 192, 192, 12
    $region21: #{stad_forward.1} parent=1 // pred_fallthru
      _
    // Predicated region
    $region22: #{stad_forward.1} parent=1 // pred_check
      _
    $region23: #{stad_forward.1} parent=1 // pred_check_branch
      %46 = sbr.rel (0) target = $region25
    $region24: #{stad_forward.1} parent=1 // pred_region
      %s48 = ssub.s32 6144, 6144
      %49 = vsyncadd [#allocation5], %s48
      %s50 = sshll.u32 [#allocation6], 4
      %s51 = int_to_ptr.vmem [resolvable:$true] %s50
      %56 = dma.hbm_to_vmem [thread:$0]  %s5, 6144, %s51, [#allocation5], 64, 64, 4
    $region25: #{stad_forward.1} parent=1 // pred_fallthru
      _
    // Predicated region
    $region26: #{stad_forward.1} parent=1 // pred_check
      _
    $region27: #{stad_forward.1} parent=1 // pred_check_branch
      %58 = sbr.rel (0) target = $region29
    $region28: #{stad_forward.1} parent=1 // pred_region
      %s60 = ssub.s32 1920, 1920
      %61 = vsyncadd [#allocation8], %s60
      %s62 = sshll.u32 [#allocation7], 4
      %s63 = int_to_ptr.vmem [resolvable:$true] %s62
      %68 = dma.hbm_to_vmem [thread:$0]  %s6, 1920, %s63, [#allocation8], 384, 384, 24
    $region29: #{stad_forward.1} parent=1 // pred_fallthru
      _
    // Predicated region
    $region30: #{stad_forward.1} parent=1 // pred_check
      _
    $region31: #{stad_forward.1} parent=1 // pred_check_branch
      %70 = sbr.rel (0) target = $region33
    $region32: #{stad_forward.1} parent=1 // pred_region
      %71 = dma.done [#allocation3], 9216
    $region33: #{stad_forward.1} parent=1 // pred_fallthru
      _
    // Predicated region
    $region34: #{stad_forward.1} parent=1 // pred_check
      _
    $region35: #{stad_forward.1} parent=1 // pred_check_branch
      %73 = sbr.rel (0) target = $region37
    $region36: #{stad_forward.1} parent=1 // pred_region
      %74 = dma.done [#allocation5], 30720
    $region37: #{stad_forward.1} parent=1 // pred_fallthru
      _
    // Predicated region
    $region38: #{stad_forward.1} parent=1 // pred_check
      _
    $region39: #{stad_forward.1} parent=1 // pred_check_branch
      %76 = sbr.rel (0) target = $region41
    $region40: #{stad_forward.1} parent=1 // pred_region
      %77 = dma.done [#allocation5], 6144
    $region41: #{stad_forward.1} parent=1 // pred_fallthru
      _
    // Predicated region
    $region42: #{stad_forward.1} parent=1 // pred_check
      _
    $region43: #{stad_forward.1} parent=1 // pred_check_branch
      %79 = sbr.rel (0) target = $region45
    $region44: #{stad_forward.1} parent=1 // pred_region
      %80 = dma.done [#allocation8], 1920
    $region45: #{stad_forward.1} parent=1 // pred_fallthru
      _
    %v82 = vld [vmem:[%s0] sm:$0xff]
    %v83 = vld [vmem:[%s0 + $0x8] sm:$0xff]
    %v84 = vld [vmem:[#allocation2] sm:$0xf]
    %v85 = vld [vmem:[#allocation2 + $0x4] sm:$0xf]
    %v86 = vld [vmem:[#allocation2 + $0x8] sm:$0xf]
    %v87 = vld [vmem:[#allocation2 + $0xc] sm:$0xf]
    %v88 = vld [vmem:[#allocation2 + $0x10] sm:$0xf]
    %v89 = vld [vmem:[#allocation2 + $0x14] sm:$0xf]
    %v90 = vld [vmem:[#allocation2 + $0x18] sm:$0xf]
    %v91 = vld [vmem:[#allocation2 + $0x1c] sm:$0xf]
    %v92 = vld [vmem:[#allocation2 + $0x20] sm:$0xf]
    %v93 = vld [vmem:[#allocation2 + $0x24] sm:$0xf]
    %v94 = vld [vmem:[#allocation2 + $0x28] sm:$0xf]
    %v95 = vld [vmem:[#allocation2 + $0x2c] sm:$0xf]
    %v96 = vld [vmem:[#allocation2 + $0x30] sm:$0xf]
    %v97 = vld [vmem:[#allocation2 + $0x34] sm:$0xf]
    %v98 = vld [vmem:[#allocation2 + $0x38] sm:$0xf]
    %v99 = vld [vmem:[#allocation2 + $0x3c] sm:$0xf]
    %v100 = vpack.c.bf16 %v83, %v82
    %v101 = vld [vmem:[#allocation7] ss:$0 sm:$0xff]
    %v118 = vunpack.c.l.b16 %v84
    %v119 = vunpack.c.l.b16 %v85
    %v120 = vunpack.c.l.b16 %v86
    %v121 = vunpack.c.l.b16 %v87
    %v122 = vunpack.c.l.b16 %v88
    %v123 = vunpack.c.l.b16 %v89
    %v124 = vunpack.c.l.b16 %v90
    %v125 = vunpack.c.l.b16 %v91
    %v126 = vunpack.c.l.b16 %v92
    %v127 = vunpack.c.l.b16 %v93
    %v128 = vunpack.c.l.b16 %v94
    %v129 = vunpack.c.l.b16 %v95
    %v130 = vunpack.c.l.b16 %v96
    %v131 = vunpack.c.l.b16 %v97
    %v132 = vunpack.c.l.b16 %v98
    %v133 = vunpack.c.l.b16 %v99
    %v134 = vpack.c.b16 %v119, %v118
    %v135 = vpack.c.b16 %v121, %v120
    %v136 = vpack.c.b16 %v123, %v122
    %v137 = vpack.c.b16 %v125, %v124
    %v138 = vpack.c.b16 %v127, %v126
    %v139 = vpack.c.b16 %v129, %v128
    %v140 = vpack.c.b16 %v131, %v130
    %v141 = vpack.c.b16 %v133, %v132
    %150 = vmatprep.subr.bf16.mxu0 0
    %151 = vmatpush1.bf16.msra.mxu0 %v134
    %152 = vmatprep.subr.bf16.mxu0 0
    %153 = vmatpush1.bf16.msra.mxu0 %v135
    %154 = vmatprep.subr.bf16.mxu0 0
    %155 = vmatpush1.bf16.msra.mxu0 %v136
    %156 = vmatprep.subr.bf16.mxu0 0
    %157 = vmatpush1.bf16.msra.mxu0 %v137
    %158 = vmatprep.subr.bf16.mxu0 0
    %159 = vmatpush1.bf16.msra.mxu0 %v138
    %160 = vmatprep.subr.bf16.mxu0 0
    %161 = vmatpush1.bf16.msra.mxu0 %v139
    %162 = vmatprep.subr.bf16.mxu0 0
    %163 = vmatpush1.bf16.msra.mxu0 %v140
    %164 = vmatprep.subr.bf16.mxu0 0
    %165 = vmatpush1.bf16.msra.mxu0 %v141
    %166 = vmatprep.subr.bf16.mxu0 0
    %167 = vmatpush1.bf16.msra.mxu0 0
    %168 = vmatprep.subr.bf16.mxu0 0
    %169 = vmatpush1.bf16.msra.mxu0 0
    %170 = vmatprep.subr.bf16.mxu0 0
    %171 = vmatpush1.bf16.msra.mxu0 0
    %172 = vmatprep.subr.bf16.mxu0 0
    %173 = vmatpush1.bf16.msra.mxu0 0
    %174 = vmatprep.subr.bf16.mxu0 0
    %175 = vmatpush1.bf16.msra.mxu0 0
    %176 = vmatprep.subr.bf16.mxu0 0
    %177 = vmatpush1.bf16.msra.mxu0 0
    %178 = vmatprep.subr.bf16.mxu0 0
    %179 = vmatpush1.bf16.msra.mxu0 0
    %180 = vmatprep.subr.bf16.mxu0 0
    %181 = vmatpush1.bf16.msra.mxu0 0
    %182 = vmatprep.mubr.bf16.mxu0 0
    %183 = vmatmul.mubr.bf16.gmra.mrb[0].mxu0 %v100
    %v184 = vpop.f32.mrb[0].mxu0
    %v185 = vadd.f32 %v101, %v184
    %v186 = vpop.f32.mrb[0].mxu0
    %v187 = vpop.f32.mrb[0].mxu0
    %v188 = vadd.f32 %v101, %v187
    %v189 = vpop.f32.mrb[0].mxu0
    %190 = vdwg.mxu0
    %v191 = vmax.f32 %v185, 0.0
    %v192 = vmax.f32 %v188, 0.0
    %s193 = scalar_lea.vmem [#allocation2], 64
    %v194 = vld [vmem:[%s193] sm:$0xf]
    %v195 = vld [vmem:[%s193 + $0x4] sm:$0xf]
    %v196 = vld [vmem:[%s193 + $0x8] sm:$0xf]
    %v197 = vld [vmem:[%s193 + $0xc] sm:$0xf]
    %v198 = vld [vmem:[%s193 + $0x10] sm:$0xf]
    %v199 = vld [vmem:[%s193 + $0x14] sm:$0xf]
    %v200 = vld [vmem:[%s193 + $0x18] sm:$0xf]
    %v201 = vld [vmem:[%s193 + $0x1c] sm:$0xf]
    %v202 = vld [vmem:[%s193 + $0x20] sm:$0xf]
    %v203 = vld [vmem:[%s193 + $0x24] sm:$0xf]
    %v204 = vld [vmem:[%s193 + $0x28] sm:$0xf]
    %v205 = vld [vmem:[%s193 + $0x2c] sm:$0xf]
    %v206 = vld [vmem:[%s193 + $0x30] sm:$0xf]
    %v207 = vld [vmem:[%s193 + $0x34] sm:$0xf]
    %v208 = vld [vmem:[%s193 + $0x38] sm:$0xf]
    %v209 = vld [vmem:[%s193 + $0x3c] sm:$0xf]
    %v210 = vpack.c.bf16 %v192, %v191
    %v211 = vld [vmem:[#allocation7 + $0x1] ss:$0 sm:$0xff]
    %v228 = vunpack.c.l.b16 %v194
    %v229 = vunpack.c.l.b16 %v195
    %v230 = vunpack.c.l.b16 %v196
    %v231 = vunpack.c.l.b16 %v197
    %v232 = vunpack.c.l.b16 %v198
    %v233 = vunpack.c.l.b16 %v199
    %v234 = vunpack.c.l.b16 %v200
    %v235 = vunpack.c.l.b16 %v201
    %v236 = vunpack.c.l.b16 %v202
    %v237 = vunpack.c.l.b16 %v203
    %v238 = vunpack.c.l.b16 %v204
    %v239 = vunpack.c.l.b16 %v205
    %v240 = vunpack.c.l.b16 %v206
    %v241 = vunpack.c.l.b16 %v207
    %v242 = vunpack.c.l.b16 %v208
    %v243 = vunpack.c.l.b16 %v209
    %v244 = vpack.c.b16 %v229, %v228
    %v245 = vpack.c.b16 %v231, %v230
    %v246 = vpack.c.b16 %v233, %v232
    %v247 = vpack.c.b16 %v235, %v234
    %v248 = vpack.c.b16 %v237, %v236
    %v249 = vpack.c.b16 %v239, %v238
    %v250 = vpack.c.b16 %v241, %v240
    %v251 = vpack.c.b16 %v243, %v242
    %260 = vmatprep.subr.bf16.mxu0 0
    %261 = vmatpush1.bf16.msra.mxu0 %v244
    %262 = vmatprep.subr.bf16.mxu0 0
    %263 = vmatpush1.bf16.msra.mxu0 %v245
    %264 = vmatprep.subr.bf16.mxu0 0
    %265 = vmatpush1.bf16.msra.mxu0 %v246
    %266 = vmatprep.subr.bf16.mxu0 0
    %267 = vmatpush1.bf16.msra.mxu0 %v247
    %268 = vmatprep.subr.bf16.mxu0 0
    %269 = vmatpush1.bf16.msra.mxu0 %v248
    %270 = vmatprep.subr.bf16.mxu0 0
    %271 = vmatpush1.bf16.msra.mxu0 %v249
    %272 = vmatprep.subr.bf16.mxu0 0
    %273 = vmatpush1.bf16.msra.mxu0 %v250
    %274 = vmatprep.subr.bf16.mxu0 0
    %275 = vmatpush1.bf16.msra.mxu0 %v251
    %276 = vmatprep.subr.bf16.mxu0 0
    %277 = vmatpush1.bf16.msra.mxu0 0
    %278 = vmatprep.subr.bf16.mxu0 0
    %279 = vmatpush1.bf16.msra.mxu0 0
    %280 = vmatprep.subr.bf16.mxu0 0
    %281 = vmatpush1.bf16.msra.mxu0 0
    %282 = vmatprep.subr.bf16.mxu0 0
    %283 = vmatpush1.bf16.msra.mxu0 0
    %284 = vmatprep.subr.bf16.mxu0 0
    %285 = vmatpush1.bf16.msra.mxu0 0
    %286 = vmatprep.subr.bf16.mxu0 0
    %287 = vmatpush1.bf16.msra.mxu0 0
    %288 = vmatprep.subr.bf16.mxu0 0
    %289 = vmatpush1.bf16.msra.mxu0 0
    %290 = vmatprep.subr.bf16.mxu0 0
    %291 = vmatpush1.bf16.msra.mxu0 0
    %292 = vmatprep.mubr.bf16.mxu0 0
    %293 = vmatmul.mubr.bf16.gmra.mrb[0].mxu0 %v210
    %v294 = vpop.f32.mrb[0].mxu0
    %v295 = vadd.f32 %v211, %v294
    %v296 = vpop.f32.mrb[0].mxu0
    %v297 = vpop.f32.mrb[0].mxu0
    %v298 = vadd.f32 %v211, %v297
    %v299 = vpop.f32.mrb[0].mxu0
    %300 = vdwg.mxu0
    %v301 = vmax.f32 %v295, 0.0
    %v302 = vmax.f32 %v298, 0.0
    %v303 = vlaneseq
    %v304 = vshrl.u32 %v303, 7
    %vm305 = vcmp.gt.s32.totalorder %v304, 0
    %v306 = vsel %vm305, 1, 0
    %v307 = vcvt.s32.f32 %v306
    %v308 = vld [vmem:[#allocation4] sm:$0xff]
    %v309 = vld [vmem:[#allocation4 + $0xc] sm:$0xff]
    %v310 = vld [vmem:[#allocation4 + $0x18] sm:$0xff]
    %v311 = vld [vmem:[#allocation4 + $0x24] sm:$0xff]
    %v312 = vld [vmem:[#allocation4 + $0x30] sm:$0xff]
    %v313 = vld [vmem:[#allocation4 + $0x3c] sm:$0xff]
    %v314 = vld [vmem:[#allocation4 + $0x48] sm:$0xff]
    %v315 = vld [vmem:[#allocation4 + $0x54] sm:$0xff]
    %v316 = vld [vmem:[#allocation4 + $0x60] sm:$0xff]
    %v317 = vld [vmem:[#allocation4 + $0x6c] sm:$0xff]
    %v318 = vld [vmem:[#allocation4 + $0x78] sm:$0xff]
    %v319 = vld [vmem:[#allocation4 + $0x84] sm:$0xff]
    %v320 = vld [vmem:[#allocation4 + $0x90] sm:$0xff]
    %v321 = vld [vmem:[#allocation4 + $0x9c] sm:$0xff]
    %v322 = vld [vmem:[#allocation4 + $0xa8] sm:$0xff]
    %v323 = vld [vmem:[#allocation4 + $0xb4] sm:$0xff]
    %v324 = vpack.c.bf16 %v302, %v301
    %v341 = vunpack.c.l.b16 %v308
    %v342 = vunpack.c.h.b16 %v308
    %v343 = vunpack.c.l.b16 %v309
    %v344 = vunpack.c.h.b16 %v309
    %v345 = vunpack.c.l.b16 %v310
    %v346 = vunpack.c.h.b16 %v310
    %v347 = vunpack.c.l.b16 %v311
    %v348 = vunpack.c.h.b16 %v311
    %v349 = vunpack.c.l.b16 %v312
    %v350 = vunpack.c.h.b16 %v312
    %v351 = vunpack.c.l.b16 %v313
    %v352 = vunpack.c.h.b16 %v313
    %v353 = vunpack.c.l.b16 %v314
    %v354 = vunpack.c.h.b16 %v314
    %v355 = vunpack.c.l.b16 %v315
    %v356 = vunpack.c.h.b16 %v315
    %v357 = vunpack.c.l.b16 %v316
    %v358 = vunpack.c.h.b16 %v316
    %v359 = vunpack.c.l.b16 %v317
    %v360 = vunpack.c.h.b16 %v317
    %v361 = vunpack.c.l.b16 %v318
    %v362 = vunpack.c.h.b16 %v318
    %v363 = vunpack.c.l.b16 %v319
    %v364 = vunpack.c.h.b16 %v319
    %v365 = vunpack.c.l.b16 %v320
    %v366 = vunpack.c.h.b16 %v320
    %v367 = vunpack.c.l.b16 %v321
    %v368 = vunpack.c.h.b16 %v321
    %v369 = vunpack.c.l.b16 %v322
    %v370 = vunpack.c.h.b16 %v322
    %v371 = vunpack.c.l.b16 %v323
    %v372 = vunpack.c.h.b16 %v323
    %v373 = vpack.c.b16 %v343, %v341
    %v374 = vpack.c.b16 %v344, %v342
    %v375 = vpack.c.b16 %v347, %v345
    %v376 = vpack.c.b16 %v348, %v346
    %v377 = vpack.c.b16 %v351, %v349
    %v378 = vpack.c.b16 %v352, %v350
    %v379 = vpack.c.b16 %v355, %v353
    %v380 = vpack.c.b16 %v356, %v354
    %v381 = vpack.c.b16 %v359, %v357
    %v382 = vpack.c.b16 %v360, %v358
    %v383 = vpack.c.b16 %v363, %v361
    %v384 = vpack.c.b16 %v364, %v362
    %v385 = vpack.c.b16 %v367, %v365
    %v386 = vpack.c.b16 %v368, %v366
    %v387 = vpack.c.b16 %v371, %v369
    %v388 = vpack.c.b16 %v372, %v370
    %405 = vmatprep.subr.bf16.mxu0 %v374
    %406 = vmatpush1.bf16.msra.mxu0 %v373
    %407 = vmatprep.subr.bf16.mxu0 %v376
    %408 = vmatpush1.bf16.msra.mxu0 %v375
    %409 = vmatprep.subr.bf16.mxu0 %v378
    %410 = vmatpush1.bf16.msra.mxu0 %v377
    %411 = vmatprep.subr.bf16.mxu0 %v380
    %412 = vmatpush1.bf16.msra.mxu0 %v379
    %413 = vmatprep.subr.bf16.mxu0 %v382
    %414 = vmatpush1.bf16.msra.mxu0 %v381
    %415 = vmatprep.subr.bf16.mxu0 %v384
    %416 = vmatpush1.bf16.msra.mxu0 %v383
    %417 = vmatprep.subr.bf16.mxu0 %v386
    %418 = vmatpush1.bf16.msra.mxu0 %v385
    %419 = vmatprep.subr.bf16.mxu0 %v388
    %420 = vmatpush1.bf16.msra.mxu0 %v387
    %421 = vmatprep.subr.bf16.mxu0 0
    %422 = vmatpush1.bf16.msra.mxu0 0
    %423 = vmatprep.subr.bf16.mxu0 0
    %424 = vmatpush1.bf16.msra.mxu0 0
    %425 = vmatprep.subr.bf16.mxu0 0
    %426 = vmatpush1.bf16.msra.mxu0 0
    %427 = vmatprep.subr.bf16.mxu0 0
    %428 = vmatpush1.bf16.msra.mxu0 0
    %429 = vmatprep.subr.bf16.mxu0 0
    %430 = vmatpush1.bf16.msra.mxu0 0
    %431 = vmatprep.subr.bf16.mxu0 0
    %432 = vmatpush1.bf16.msra.mxu0 0
    %433 = vmatprep.subr.bf16.mxu0 0
    %434 = vmatpush1.bf16.msra.mxu0 0
    %435 = vmatprep.subr.bf16.mxu0 0
    %436 = vmatpush1.bf16.msra.mxu0 0
    %437 = vmatprep.mubr.bf16.mxu0 0
    %438 = vmatmul.mubr.bf16.gmra.mrb[0].mxu0 %v324
    %v439 = vpop.f32.mrb[0].mxu0
    %v440 = vadd.f32 0.0, %v439
    %v441 = vpop.f32.mrb[0].mxu0
    %v442 = vadd.f32 0.0, %v441
    %v443 = vpop.f32.mrb[0].mxu0
    %v444 = vadd.f32 0.0, %v443
    %v445 = vpop.f32.mrb[0].mxu0
    %v446 = vadd.f32 0.0, %v445
    %447 = vdwg.mxu0
    %v448 = vrot.slane %v440, 7
    %v449 = vrot.slane %v444, 7
    %vm450 = vcmp.lt.s32.totalorder %v304, 1
    %v451 = vsel %vm450, %v448, %v449
    %v452 = vsel %vm450, %v449, %v448
    %v453 = vmul.f32 %v452, %v307
    %v454 = vmul.f32 %v451, %v307
    %v455 = vadd.f32 %v453, %v442
    %v456 = vadd.f32 %v454, %v446
    %v457 = vld [vmem:[#allocation7 + $0x2] ss:$0 sm:$0xff]
    %v458 = vadd.f32 %v455, %v457
    %v459 = vadd.f32 %v456, %v457
    %v460 = vmax.f32 %v458, 0.0
    %v461 = vmax.f32 %v459, 0.0
    %s462 = scalar_lea.vmem [#allocation4], 192
    %v463 = vld [vmem:[%s462] sm:$0xff]
    %v464 = vld [vmem:[%s462 + $0xc] sm:$0xff]
    %v465 = vld [vmem:[%s462 + $0x18] sm:$0xff]
    %v466 = vld [vmem:[%s462 + $0x24] sm:$0xff]
    %v467 = vld [vmem:[%s462 + $0x30] sm:$0xff]
    %v468 = vld [vmem:[%s462 + $0x3c] sm:$0xff]
    %v469 = vld [vmem:[%s462 + $0x48] sm:$0xff]
    %v470 = vld [vmem:[%s462 + $0x54] sm:$0xff]
    %v471 = vld [vmem:[%s462 + $0x60] sm:$0xff]
    %v472 = vld [vmem:[%s462 + $0x6c] sm:$0xff]
    %v473 = vld [vmem:[%s462 + $0x78] sm:$0xff]
    %v474 = vld [vmem:[%s462 + $0x84] sm:$0xff]
    %v475 = vld [vmem:[%s462 + $0x90] sm:$0xff]
    %v476 = vld [vmem:[%s462 + $0x9c] sm:$0xff]
    %v477 = vld [vmem:[%s462 + $0xa8] sm:$0xff]
    %v478 = vld [vmem:[%s462 + $0xb4] sm:$0xff]
    %v479 = vpack.c.bf16 %v461, %v460
    %v496 = vunpack.c.l.b16 %v463
    %v497 = vunpack.c.h.b16 %v463
    %v498 = vunpack.c.l.b16 %v464
    %v499 = vunpack.c.h.b16 %v464
    %v500 = vunpack.c.l.b16 %v465
    %v501 = vunpack.c.h.b16 %v465
    %v502 = vunpack.c.l.b16 %v466
    %v503 = vunpack.c.h.b16 %v466
    %v504 = vunpack.c.l.b16 %v467
    %v505 = vunpack.c.h.b16 %v467
    %v506 = vunpack.c.l.b16 %v468
    %v507 = vunpack.c.h.b16 %v468
    %v508 = vunpack.c.l.b16 %v469
    %v509 = vunpack.c.h.b16 %v469
    %v510 = vunpack.c.l.b16 %v470
    %v511 = vunpack.c.h.b16 %v470
    %v512 = vunpack.c.l.b16 %v471
    %v513 = vunpack.c.h.b16 %v471
    %v514 = vunpack.c.l.b16 %v472
    %v515 = vunpack.c.h.b16 %v472
    %v516 = vunpack.c.l.b16 %v473
    %v517 = vunpack.c.h.b16 %v473
    %v518 = vunpack.c.l.b16 %v474
    %v519 = vunpack.c.h.b16 %v474
    %v520 = vunpack.c.l.b16 %v475
    %v521 = vunpack.c.h.b16 %v475
    %v522 = vunpack.c.l.b16 %v476
    %v523 = vunpack.c.h.b16 %v476
    %v524 = vunpack.c.l.b16 %v477
    %v525 = vunpack.c.h.b16 %v477
    %v526 = vunpack.c.l.b16 %v478
    %v527 = vunpack.c.h.b16 %v478
    %v528 = vpack.c.b16 %v498, %v496
    %v529 = vpack.c.b16 %v499, %v497
    %v530 = vpack.c.b16 %v502, %v500
    %v531 = vpack.c.b16 %v503, %v501
    %v532 = vpack.c.b16 %v506, %v504
    %v533 = vpack.c.b16 %v507, %v505
    %v534 = vpack.c.b16 %v510, %v508
    %v535 = vpack.c.b16 %v511, %v509
    %v536 = vpack.c.b16 %v514, %v512
    %v537 = vpack.c.b16 %v515, %v513
    %v538 = vpack.c.b16 %v518, %v516
    %v539 = vpack.c.b16 %v519, %v517
    %v540 = vpack.c.b16 %v522, %v520
    %v541 = vpack.c.b16 %v523, %v521
    %v542 = vpack.c.b16 %v526, %v524
    %v543 = vpack.c.b16 %v527, %v525
    %560 = vmatprep.subr.bf16.mxu0 %v529
    %561 = vmatpush1.bf16.msra.mxu0 %v528
    %562 = vmatprep.subr.bf16.mxu0 %v531
    %563 = vmatpush1.bf16.msra.mxu0 %v530
    %564 = vmatprep.subr.bf16.mxu0 %v533
    %565 = vmatpush1.bf16.msra.mxu0 %v532
    %566 = vmatprep.subr.bf16.mxu0 %v535
    %567 = vmatpush1.bf16.msra.mxu0 %v534
    %568 = vmatprep.subr.bf16.mxu0 %v537
    %569 = vmatpush1.bf16.msra.mxu0 %v536
    %570 = vmatprep.subr.bf16.mxu0 %v539
    %571 = vmatpush1.bf16.msra.mxu0 %v538
    %572 = vmatprep.subr.bf16.mxu0 %v541
    %573 = vmatpush1.bf16.msra.mxu0 %v540
    %574 = vmatprep.subr.bf16.mxu0 %v543
    %575 = vmatpush1.bf16.msra.mxu0 %v542
    %576 = vmatprep.subr.bf16.mxu0 0
    %577 = vmatpush1.bf16.msra.mxu0 0
    %578 = vmatprep.subr.bf16.mxu0 0
    %579 = vmatpush1.bf16.msra.mxu0 0
    %580 = vmatprep.subr.bf16.mxu0 0
    %581 = vmatpush1.bf16.msra.mxu0 0
    %582 = vmatprep.subr.bf16.mxu0 0
    %583 = vmatpush1.bf16.msra.mxu0 0
    %584 = vmatprep.subr.bf16.mxu0 0
    %585 = vmatpush1.bf16.msra.mxu0 0
    %586 = vmatprep.subr.bf16.mxu0 0
    %587 = vmatpush1.bf16.msra.mxu0 0
    %588 = vmatprep.subr.bf16.mxu0 0
    %589 = vmatpush1.bf16.msra.mxu0 0
    %590 = vmatprep.subr.bf16.mxu0 0
    %591 = vmatpush1.bf16.msra.mxu0 0
    %592 = vmatprep.mubr.bf16.mxu0 0
    %593 = vmatmul.mubr.bf16.gmra.mrb[0].mxu0 %v479
    %v594 = vpop.f32.mrb[0].mxu0
    %v595 = vadd.f32 0.0, %v594
    %v596 = vpop.f32.mrb[0].mxu0
    %v597 = vadd.f32 0.0, %v596
    %v598 = vpop.f32.mrb[0].mxu0
    %v599 = vadd.f32 0.0, %v598
    %v600 = vpop.f32.mrb[0].mxu0
    %v601 = vadd.f32 0.0, %v600
    %602 = vdwg.mxu0
    %v603 = vrot.slane %v595, 7
    %v604 = vrot.slane %v599, 7
    %v605 = vsel %vm450, %v603, %v604
    %v606 = vsel %vm450, %v604, %v603
    %v607 = vmul.f32 %v606, %v307
    %v608 = vmul.f32 %v605, %v307
    %v609 = vadd.f32 %v607, %v597
    %v610 = vadd.f32 %v608, %v601
    %v611 = vld [vmem:[#allocation7 + $0x3] ss:$0 sm:$0xff]
    %v612 = vadd.f32 %v609, %v611
    %v613 = vadd.f32 %v610, %v611
    %v614 = vmax.f32 %v612, 0.0
    %v615 = vmax.f32 %v613, 0.0
    %v616 = vadd.f32 %v614, %v301
    %v617 = vadd.f32 %v615, %v302
    %v618 = vmax.f32 %v616, 0.0
    %v619 = vmax.f32 %v617, 0.0
    %v620 = vtanh.pop %v618
    %v621 = vtanh.pop %v619
    %v622 = vxor.u32 %v618, 2147483648
    %v623 = vxor.u32 %v619, 2147483648
    %v624 = vmul.f32 %v622, 1.442695
    %v625 = vpow.pop %v624
    %v626 = vmul.f32 %v623, 1.442695
    %v627 = vpow.pop %v626
    %v628 = vadd.f32 %v625, 1.0
    %v629 = vadd.f32 %v627, 1.0
    %v630 = vrcp.pop %v628
    %v631 = vmul.f32 1.0, %v630
    %v632 = vrcp.pop %v629
    %v633 = vmul.f32 1.0, %v632
    %v634 = vmul.f32 %v620, %v631
    %v635 = vmul.f32 %v621, %v633
    %v636 = vpack.c.bf16 %v634, %v634
    %v637 = vpack.c.bf16 %v635, %v635
    %638 = vmatprep.subr.bf16.mxu0 0
    %639 = vmatpush1.bf16.xpose.msra.mxu0 %v636
    %640 = vmatprep.subr.bf16.mxu0 0
    %641 = vmatpush1.bf16.xpose.msra.mxu0 0
    %642 = vmatprep.subr.bf16.mxu0 0
    %643 = vmatpush1.bf16.xpose.msra.mxu0 0
    %644 = vmatprep.subr.bf16.mxu0 0
    %645 = vmatpush1.bf16.xpose.msra.mxu0 0
    %646 = vmatprep.subr.bf16.mxu0 0
    %647 = vmatpush1.bf16.xpose.msra.mxu0 0
    %648 = vmatprep.subr.bf16.mxu0 0
    %649 = vmatpush1.bf16.xpose.msra.mxu0 0
    %650 = vmatprep.subr.bf16.mxu0 0
    %651 = vmatpush1.bf16.xpose.msra.mxu0 0
    %652 = vmatprep.subr.bf16.mxu0 0
    %653 = vmatpush1.bf16.xpose.msra.mxu0 0
    %654 = vmatprep.subr.bf16.mxu0 0
    %655 = vmatpush1.bf16.xpose.msra.mxu0 0
    %656 = vmatprep.subr.bf16.mxu0 0
    %657 = vmatpush1.bf16.xpose.msra.mxu0 0
    %658 = vmatprep.subr.bf16.mxu0 0
    %659 = vmatpush1.bf16.xpose.msra.mxu0 0
    %660 = vmatprep.subr.bf16.mxu0 0
    %661 = vmatpush1.bf16.xpose.msra.mxu0 0
    %662 = vmatprep.subr.bf16.mxu0 0
    %663 = vmatpush1.bf16.xpose.msra.mxu0 0
    %664 = vmatprep.subr.bf16.mxu0 0
    %665 = vmatpush1.bf16.xpose.msra.mxu0 0
    %666 = vmatprep.subr.bf16.mxu0 0
    %667 = vmatpush1.bf16.xpose.msra.mxu0 0
    %668 = vmatprep.subr.bf16.mxu0 0
    %669 = vmatpush1.bf16.xpose.msra.mxu0 0
    %670 = vmatprep.mubr.bf16.mxu0 0
    %671 = vmatmul.mubr.bf16.gmra.mrb[0].mxu0 %v636
    %v672 = vpop.f32.mrb[0].mxu0
    %v673 = vadd.f32 0.0, %v672
    %v674 = vpop.f32.mrb[0].mxu0
    %v675 = vpop.f32.mrb[0].mxu0
    %v676 = vpop.f32.mrb[0].mxu0
    %677 = vdwg.mxu0
    %678 = vmatprep.subr.bf16.mxu0 0
    %679 = vmatpush1.bf16.xpose.msra.mxu0 %v637
    %680 = vmatprep.subr.bf16.mxu0 0
    %681 = vmatpush1.bf16.xpose.msra.mxu0 0
    %682 = vmatprep.subr.bf16.mxu0 0
    %683 = vmatpush1.bf16.xpose.msra.mxu0 0
    %684 = vmatprep.subr.bf16.mxu0 0
    %685 = vmatpush1.bf16.xpose.msra.mxu0 0
    %686 = vmatprep.subr.bf16.mxu0 0
    %687 = vmatpush1.bf16.xpose.msra.mxu0 0
    %688 = vmatprep.subr.bf16.mxu0 0
    %689 = vmatpush1.bf16.xpose.msra.mxu0 0
    %690 = vmatprep.subr.bf16.mxu0 0
    %691 = vmatpush1.bf16.xpose.msra.mxu0 0
    %692 = vmatprep.subr.bf16.mxu0 0
    %693 = vmatpush1.bf16.xpose.msra.mxu0 0
    %694 = vmatprep.subr.bf16.mxu0 0
    %695 = vmatpush1.bf16.xpose.msra.mxu0 0
    %696 = vmatprep.subr.bf16.mxu0 0
    %697 = vmatpush1.bf16.xpose.msra.mxu0 0
    %698 = vmatprep.subr.bf16.mxu0 0
    %699 = vmatpush1.bf16.xpose.msra.mxu0 0
    %700 = vmatprep.subr.bf16.mxu0 0
    %701 = vmatpush1.bf16.xpose.msra.mxu0 0
    %702 = vmatprep.subr.bf16.mxu0 0
    %703 = vmatpush1.bf16.xpose.msra.mxu0 0
    %704 = vmatprep.subr.bf16.mxu0 0
    %705 = vmatpush1.bf16.xpose.msra.mxu0 0
    %706 = vmatprep.subr.bf16.mxu0 0
    %707 = vmatpush1.bf16.xpose.msra.mxu0 0
    %708 = vmatprep.subr.bf16.mxu0 0
    %709 = vmatpush1.bf16.xpose.msra.mxu0 0
    %710 = vmatprep.mubr.bf16.mxu0 0
    %711 = vmatmul.mubr.bf16.gmra.mrb[0].mxu0 %v637
    %v712 = vpop.f32.mrb[0].mxu0
    %v713 = vadd.f32 0.0, %v712
    %v714 = vpop.f32.mrb[0].mxu0
    %v715 = vpop.f32.mrb[0].mxu0
    %v716 = vpop.f32.mrb[0].mxu0
    %717 = vdwg.mxu0
    %v718 = vmul.f32 %v673, 0.17677669
    %v719 = vmul.f32 %v713, 0.17677669
    %vm720 = vcmask 64512
    %v721 = vsel %vm720, %v718, -inf
    %722 = vmax.xlane.f32.xlu0 %v721
    %v723 = vpop.xlane.xlu0 %722
    %v724 = vsel %vm720, %v719, -inf
    %725 = vmax.xlane.f32.xlu0 %v724
    %v726 = vpop.xlane.xlu0 %725
    %v727 = vsub.f32 %v718, %v723
    %v728 = vsub.f32 %v719, %v726
    %v729 = vmul.f32 %v727, 1.442695
    %v730 = vpow.pop %v729
    %v731 = vmul.f32 %v728, 1.442695
    %v732 = vpow.pop %v731
    %v733 = vsel %vm720, %v730, 0.0
    %734 = vadd.xlane.f32.xlu0 %v733
    %v735 = vpop.xlane.xlu0 %734
    %v736 = vsel %vm720, %v732, 0.0
    %737 = vadd.xlane.f32.xlu0 %v736
    %v738 = vpop.xlane.xlu0 %737
    %v739 = vrcp.pop %v735
    %v740 = vrcp.pop %v738
    %v741 = vmul.f32 %v730, %v739
    %v742 = vmul.f32 %v732, %v740
    %v743 = vpack.c.bf16 %v741, %v741
    %v744 = vpack.c.bf16 %v742, %v742
    %v746 = vsel %vm720, %v743, 0
    %vm748 = vcmask 1043456
    %v750 = vsel %vm748, %v636, 0
    %752 = vmatprep.subr.bf16.mxu0 0
    %753 = vmatpush1.bf16.msra.mxu0 %v750
    %754 = vmatprep.subr.bf16.mxu0 0
    %755 = vmatpush1.bf16.msra.mxu0 0
    %756 = vmatprep.subr.bf16.mxu0 0
    %757 = vmatpush1.bf16.msra.mxu0 0
    %758 = vmatprep.subr.bf16.mxu0 0
    %759 = vmatpush1.bf16.msra.mxu0 0
    %760 = vmatprep.subr.bf16.mxu0 0
    %761 = vmatpush1.bf16.msra.mxu0 0
    %762 = vmatprep.subr.bf16.mxu0 0
    %763 = vmatpush1.bf16.msra.mxu0 0
    %764 = vmatprep.subr.bf16.mxu0 0
    %765 = vmatpush1.bf16.msra.mxu0 0
    %766 = vmatprep.subr.bf16.mxu0 0
    %767 = vmatpush1.bf16.msra.mxu0 0
    %768 = vmatprep.subr.bf16.mxu0 0
    %769 = vmatpush1.bf16.msra.mxu0 0
    %770 = vmatprep.subr.bf16.mxu0 0
    %771 = vmatpush1.bf16.msra.mxu0 0
    %772 = vmatprep.subr.bf16.mxu0 0
    %773 = vmatpush1.bf16.msra.mxu0 0
    %774 = vmatprep.subr.bf16.mxu0 0
    %775 = vmatpush1.bf16.msra.mxu0 0
    %776 = vmatprep.subr.bf16.mxu0 0
    %777 = vmatpush1.bf16.msra.mxu0 0
    %778 = vmatprep.subr.bf16.mxu0 0
    %779 = vmatpush1.bf16.msra.mxu0 0
    %780 = vmatprep.subr.bf16.mxu0 0
    %781 = vmatpush1.bf16.msra.mxu0 0
    %782 = vmatprep.subr.bf16.mxu0 0
    %783 = vmatpush1.bf16.msra.mxu0 0
    %784 = vmatprep.mubr.bf16.mxu0 0
    %785 = vmatmul.mubr.bf16.gmra.mrb[0].mxu0 %v746
    %v786 = vpop.f32.mrb[0].mxu0
    %v787 = vadd.f32 0.0, %v786
    %v788 = vpop.f32.mrb[0].mxu0
    %v789 = vpop.f32.mrb[0].mxu0
    %v790 = vpop.f32.mrb[0].mxu0
    %791 = vdwg.mxu0
    %v793 = vsel %vm720, %v744, 0
    %v796 = vsel %vm748, %v637, 0
    %798 = vmatprep.subr.bf16.mxu0 0
    %799 = vmatpush1.bf16.msra.mxu0 %v796
    %800 = vmatprep.subr.bf16.mxu0 0
    %801 = vmatpush1.bf16.msra.mxu0 0
    %802 = vmatprep.subr.bf16.mxu0 0
    %803 = vmatpush1.bf16.msra.mxu0 0
    %804 = vmatprep.subr.bf16.mxu0 0
    %805 = vmatpush1.bf16.msra.mxu0 0
    %806 = vmatprep.subr.bf16.mxu0 0
    %807 = vmatpush1.bf16.msra.mxu0 0
    %808 = vmatprep.subr.bf16.mxu0 0
    %809 = vmatpush1.bf16.msra.mxu0 0
    %810 = vmatprep.subr.bf16.mxu0 0
    %811 = vmatpush1.bf16.msra.mxu0 0
    %812 = vmatprep.subr.bf16.mxu0 0
    %813 = vmatpush1.bf16.msra.mxu0 0
    %814 = vmatprep.subr.bf16.mxu0 0
    %815 = vmatpush1.bf16.msra.mxu0 0
    %816 = vmatprep.subr.bf16.mxu0 0
    %817 = vmatpush1.bf16.msra.mxu0 0
    %818 = vmatprep.subr.bf16.mxu0 0
    %819 = vmatpush1.bf16.msra.mxu0 0
    %820 = vmatprep.subr.bf16.mxu0 0
    %821 = vmatpush1.bf16.msra.mxu0 0
    %822 = vmatprep.subr.bf16.mxu0 0
    %823 = vmatpush1.bf16.msra.mxu0 0
    %824 = vmatprep.subr.bf16.mxu0 0
    %825 = vmatpush1.bf16.msra.mxu0 0
    %826 = vmatprep.subr.bf16.mxu0 0
    %827 = vmatpush1.bf16.msra.mxu0 0
    %828 = vmatprep.subr.bf16.mxu0 0
    %829 = vmatpush1.bf16.msra.mxu0 0
    %830 = vmatprep.mubr.bf16.mxu0 0
    %831 = vmatmul.mubr.bf16.gmra.mrb[0].mxu0 %v793
    %v832 = vpop.f32.mrb[0].mxu0
    %v833 = vadd.f32 0.0, %v832
    %v834 = vpop.f32.mrb[0].mxu0
    %v835 = vpop.f32.mrb[0].mxu0
    %v836 = vpop.f32.mrb[0].mxu0
    %837 = vdwg.mxu0
    %s838 = scalar_lea.vmem [#allocation2], 128
    %v839 = vld [vmem:[%s838] sm:$0xf]
    %v840 = vld [vmem:[%s838 + $0x4] sm:$0xf]
    %v841 = vld [vmem:[%s838 + $0x8] sm:$0xf]
    %v842 = vld [vmem:[%s838 + $0xc] sm:$0xf]
    %v843 = vld [vmem:[%s838 + $0x10] sm:$0xf]
    %v844 = vld [vmem:[%s838 + $0x14] sm:$0xf]
    %v845 = vld [vmem:[%s838 + $0x18] sm:$0xf]
    %v846 = vld [vmem:[%s838 + $0x1c] sm:$0xf]
    %v847 = vld [vmem:[%s838 + $0x20] sm:$0xf]
    %v848 = vld [vmem:[%s838 + $0x24] sm:$0xf]
    %v849 = vld [vmem:[%s838 + $0x28] sm:$0xf]
    %v850 = vld [vmem:[%s838 + $0x2c] sm:$0xf]
    %v851 = vld [vmem:[%s838 + $0x30] sm:$0xf]
    %v852 = vld [vmem:[%s838 + $0x34] sm:$0xf]
    %v853 = vld [vmem:[%s838 + $0x38] sm:$0xf]
    %v854 = vld [vmem:[%s838 + $0x3c] sm:$0xf]
    %v855 = vpack.c.bf16 %v833, %v787
    %v856 = vld [vmem:[#allocation7 + $0x4] ss:$0 sm:$0xff]
    %v873 = vunpack.c.l.b16 %v839
    %v874 = vunpack.c.l.b16 %v840
    %v875 = vunpack.c.l.b16 %v841
    %v876 = vunpack.c.l.b16 %v842
    %v877 = vunpack.c.l.b16 %v843
    %v878 = vunpack.c.l.b16 %v844
    %v879 = vunpack.c.l.b16 %v845
    %v880 = vunpack.c.l.b16 %v846
    %v881 = vunpack.c.l.b16 %v847
    %v882 = vunpack.c.l.b16 %v848
    %v883 = vunpack.c.l.b16 %v849
    %v884 = vunpack.c.l.b16 %v850
    %v885 = vunpack.c.l.b16 %v851
    %v886 = vunpack.c.l.b16 %v852
    %v887 = vunpack.c.l.b16 %v853
    %v888 = vunpack.c.l.b16 %v854
    %v889 = vpack.c.b16 %v874, %v873
    %v890 = vpack.c.b16 %v876, %v875
    %v891 = vpack.c.b16 %v878, %v877
    %v892 = vpack.c.b16 %v880, %v879
    %v893 = vpack.c.b16 %v882, %v881
    %v894 = vpack.c.b16 %v884, %v883
    %v895 = vpack.c.b16 %v886, %v885
    %v896 = vpack.c.b16 %v888, %v887
    %905 = vmatprep.subr.bf16.mxu0 0
    %906 = vmatpush1.bf16.msra.mxu0 %v889
    %907 = vmatprep.subr.bf16.mxu0 0
    %908 = vmatpush1.bf16.msra.mxu0 %v890
    %909 = vmatprep.subr.bf16.mxu0 0
    %910 = vmatpush1.bf16.msra.mxu0 %v891
    %911 = vmatprep.subr.bf16.mxu0 0
    %912 = vmatpush1.bf16.msra.mxu0 %v892
    %913 = vmatprep.subr.bf16.mxu0 0
    %914 = vmatpush1.bf16.msra.mxu0 %v893
    %915 = vmatprep.subr.bf16.mxu0 0
    %916 = vmatpush1.bf16.msra.mxu0 %v894
    %917 = vmatprep.subr.bf16.mxu0 0
    %918 = vmatpush1.bf16.msra.mxu0 %v895
    %919 = vmatprep.subr.bf16.mxu0 0
    %920 = vmatpush1.bf16.msra.mxu0 %v896
    %921 = vmatprep.subr.bf16.mxu0 0
    %922 = vmatpush1.bf16.msra.mxu0 0
    %923 = vmatprep.subr.bf16.mxu0 0
    %924 = vmatpush1.bf16.msra.mxu0 0
    %925 = vmatprep.subr.bf16.mxu0 0
    %926 = vmatpush1.bf16.msra.mxu0 0
    %927 = vmatprep.subr.bf16.mxu0 0
    %928 = vmatpush1.bf16.msra.mxu0 0
    %929 = vmatprep.subr.bf16.mxu0 0
    %930 = vmatpush1.bf16.msra.mxu0 0
    %931 = vmatprep.subr.bf16.mxu0 0
    %932 = vmatpush1.bf16.msra.mxu0 0
    %933 = vmatprep.subr.bf16.mxu0 0
    %934 = vmatpush1.bf16.msra.mxu0 0
    %935 = vmatprep.subr.bf16.mxu0 0
    %936 = vmatpush1.bf16.msra.mxu0 0
    %937 = vmatprep.mubr.bf16.mxu0 0
    %938 = vmatmul.mubr.bf16.gmra.mrb[0].mxu0 %v855
    %v939 = vpop.f32.mrb[0].mxu0
    %v940 = vadd.f32 %v856, %v939
    %v941 = vpop.f32.mrb[0].mxu0
    %v942 = vpop.f32.mrb[0].mxu0
    %v943 = vadd.f32 %v856, %v942
    %v944 = vpop.f32.mrb[0].mxu0
    %945 = vdwg.mxu0
    %v946 = vadd.f32 %v940, %v634
    %v947 = vadd.f32 %v943, %v635
    %v948 = vmax.f32 %v946, 0.0
    %v949 = vmax.f32 %v947, 0.0
    %v950 = vld [vmem:[%s1] sm:$0xff]
    %v951 = vadd.f32 %v948, %v950
    %v952 = vadd.f32 %v949, %v950
    %s953 = scalar_lea.vmem [#allocation4], 384
    %v954 = vld [vmem:[%s953] sm:$0xff]
    %v955 = vld [vmem:[%s953 + $0x8] sm:$0xf]
    %v956 = vld [vmem:[%s953 + $0xc] sm:$0xff]
    %v957 = vld [vmem:[%s953 + $0x14] sm:$0xf]
    %v958 = vld [vmem:[%s953 + $0x18] sm:$0xff]
    %v959 = vld [vmem:[%s953 + $0x20] sm:$0xf]
    %v960 = vld [vmem:[%s953 + $0x24] sm:$0xff]
    %v961 = vld [vmem:[%s953 + $0x2c] sm:$0xf]
    %v962 = vld [vmem:[%s953 + $0x30] sm:$0xff]
    %v963 = vld [vmem:[%s953 + $0x38] sm:$0xf]
    %v964 = vld [vmem:[%s953 + $0x3c] sm:$0xff]
    %v965 = vld [vmem:[%s953 + $0x44] sm:$0xf]
    %v966 = vld [vmem:[%s953 + $0x48] sm:$0xff]
    %v967 = vld [vmem:[%s953 + $0x50] sm:$0xf]
    %v968 = vld [vmem:[%s953 + $0x54] sm:$0xff]
    %v969 = vld [vmem:[%s953 + $0x5c] sm:$0xf]
    %v970 = vld [vmem:[%s953 + $0x60] sm:$0xff]
    %v971 = vld [vmem:[%s953 + $0x68] sm:$0xf]
    %v972 = vld [vmem:[%s953 + $0x6c] sm:$0xff]
    %v973 = vld [vmem:[%s953 + $0x74] sm:$0xf]
    %v974 = vld [vmem:[%s953 + $0x78] sm:$0xff]
    %v975 = vld [vmem:[%s953 + $0x80] sm:$0xf]
    %v976 = vld [vmem:[%s953 + $0x84] sm:$0xff]
    %v977 = vld [vmem:[%s953 + $0x8c] sm:$0xf]
    %v978 = vld [vmem:[%s953 + $0x90] sm:$0xff]
    %v979 = vld [vmem:[%s953 + $0x98] sm:$0xf]
    %v980 = vld [vmem:[%s953 + $0x9c] sm:$0xff]
    %v981 = vld [vmem:[%s953 + $0xa4] sm:$0xf]
    %v982 = vld [vmem:[%s953 + $0xa8] sm:$0xff]
    %v983 = vld [vmem:[%s953 + $0xb0] sm:$0xf]
    %v984 = vld [vmem:[%s953 + $0xb4] sm:$0xff]
    %v985 = vld [vmem:[%s953 + $0xbc] sm:$0xf]
    %v986 = vpack.c.bf16 %v952, %v951
    %s987 = scalar_lea.vmem [#allocation7], 5
    %v988 = vld [vmem:[%s987] ss:$8 sm:$0x7]
    %v990 = vlaneseq
    %v991 = vshrl.u32 %v990, 7
    %v992 = vsub.s32 0, %v991
    %v993 = vrot.slane %v988, %v992
    %v994 = vlaneseq
    %v995 = vshrl.u32 %v994, 7
    %v996 = vsub.s32 1, %v995
    %v997 = vrot.slane %v988, %v996
    %v998 = vlaneseq
    %v999 = vshrl.u32 %v998, 7
    %v1000 = vsub.s32 2, %v999
    %v1001 = vrot.slane %v988, %v1000
    %v1037 = vunpack.c.l.b16 %v954
    %v1038 = vunpack.c.h.b16 %v954
    %v1039 = vunpack.c.l.b16 %v955
    %v1040 = vunpack.c.l.b16 %v956
    %v1041 = vunpack.c.h.b16 %v956
    %v1042 = vunpack.c.l.b16 %v957
    %v1043 = vunpack.c.l.b16 %v958
    %v1044 = vunpack.c.h.b16 %v958
    %v1045 = vunpack.c.l.b16 %v959
    %v1046 = vunpack.c.l.b16 %v960
    %v1047 = vunpack.c.h.b16 %v960
    %v1048 = vunpack.c.l.b16 %v961
    %v1049 = vunpack.c.l.b16 %v962
    %v1050 = vunpack.c.h.b16 %v962
    %v1051 = vunpack.c.l.b16 %v963
    %v1052 = vunpack.c.l.b16 %v964
    %v1053 = vunpack.c.h.b16 %v964
    %v1054 = vunpack.c.l.b16 %v965
    %v1055 = vunpack.c.l.b16 %v966
    %v1056 = vunpack.c.h.b16 %v966
    %v1057 = vunpack.c.l.b16 %v967
    %v1058 = vunpack.c.l.b16 %v968
    %v1059 = vunpack.c.h.b16 %v968
    %v1060 = vunpack.c.l.b16 %v969
    %v1061 = vunpack.c.l.b16 %v970
    %v1062 = vunpack.c.h.b16 %v970
    %v1063 = vunpack.c.l.b16 %v971
    %v1064 = vunpack.c.l.b16 %v972
    %v1065 = vunpack.c.h.b16 %v972
    %v1066 = vunpack.c.l.b16 %v973
    %v1067 = vunpack.c.l.b16 %v974
    %v1068 = vunpack.c.h.b16 %v974
    %v1069 = vunpack.c.l.b16 %v975
    %v1070 = vunpack.c.l.b16 %v976
    %v1071 = vunpack.c.h.b16 %v976
    %v1072 = vunpack.c.l.b16 %v977
    %v1073 = vunpack.c.l.b16 %v978
    %v1074 = vunpack.c.h.b16 %v978
    %v1075 = vunpack.c.l.b16 %v979
    %v1076 = vunpack.c.l.b16 %v980
    %v1077 = vunpack.c.h.b16 %v980
    %v1078 = vunpack.c.l.b16 %v981
    %v1079 = vunpack.c.l.b16 %v982
    %v1080 = vunpack.c.h.b16 %v982
    %v1081 = vunpack.c.l.b16 %v983
    %v1082 = vunpack.c.l.b16 %v984
    %v1083 = vunpack.c.h.b16 %v984
    %v1084 = vunpack.c.l.b16 %v985
    %v1085 = vpack.c.b16 %v1040, %v1037
    %v1086 = vpack.c.b16 %v1041, %v1038
    %v1087 = vpack.c.b16 %v1042, %v1039
    %v1088 = vpack.c.b16 %v1046, %v1043
    %v1089 = vpack.c.b16 %v1047, %v1044
    %v1090 = vpack.c.b16 %v1048, %v1045
    %v1091 = vpack.c.b16 %v1052, %v1049
    %v1092 = vpack.c.b16 %v1053, %v1050
    %v1093 = vpack.c.b16 %v1054, %v1051
    %v1094 = vpack.c.b16 %v1058, %v1055
    %v1095 = vpack.c.b16 %v1059, %v1056
    %v1096 = vpack.c.b16 %v1060, %v1057
    %v1097 = vpack.c.b16 %v1064, %v1061
    %v1098 = vpack.c.b16 %v1065, %v1062
    %v1099 = vpack.c.b16 %v1066, %v1063
    %v1100 = vpack.c.b16 %v1070, %v1067
    %v1101 = vpack.c.b16 %v1071, %v1068
    %v1102 = vpack.c.b16 %v1072, %v1069
    %v1103 = vpack.c.b16 %v1076, %v1073
    %v1104 = vpack.c.b16 %v1077, %v1074
    %v1105 = vpack.c.b16 %v1078, %v1075
    %v1106 = vpack.c.b16 %v1082, %v1079
    %v1107 = vpack.c.b16 %v1083, %v1080
    %v1108 = vpack.c.b16 %v1084, %v1081
    %1133 = vmatprep.subr.bf16.mxu0 %v1086
    %1134 = vmatpush1.bf16.msra.mxu0 %v1085
    %1135 = vmatprep.subr.bf16.mxu0 %v1089
    %1136 = vmatpush1.bf16.msra.mxu0 %v1088
    %1137 = vmatprep.subr.bf16.mxu0 %v1092
    %1138 = vmatpush1.bf16.msra.mxu0 %v1091
    %1139 = vmatprep.subr.bf16.mxu0 %v1095
    %1140 = vmatpush1.bf16.msra.mxu0 %v1094
    %1141 = vmatprep.subr.bf16.mxu0 %v1098
    %1142 = vmatpush1.bf16.msra.mxu0 %v1097
    %1143 = vmatprep.subr.bf16.mxu0 %v1101
    %1144 = vmatpush1.bf16.msra.mxu0 %v1100
    %1145 = vmatprep.subr.bf16.mxu0 %v1104
    %1146 = vmatpush1.bf16.msra.mxu0 %v1103
    %1147 = vmatprep.subr.bf16.mxu0 %v1107
    %1148 = vmatpush1.bf16.msra.mxu0 %v1106
    %1149 = vmatprep.subr.bf16.mxu0 0
    %1150 = vmatpush1.bf16.msra.mxu0 0
    %1151 = vmatprep.subr.bf16.mxu0 0
    %1152 = vmatpush1.bf16.msra.mxu0 0
    %1153 = vmatprep.subr.bf16.mxu0 0
    %1154 = vmatpush1.bf16.msra.mxu0 0
    %1155 = vmatprep.subr.bf16.mxu0 0
    %1156 = vmatpush1.bf16.msra.mxu0 0
    %1157 = vmatprep.subr.bf16.mxu0 0
    %1158 = vmatpush1.bf16.msra.mxu0 0
    %1159 = vmatprep.subr.bf16.mxu0 0
    %1160 = vmatpush1.bf16.msra.mxu0 0
    %1161 = vmatprep.subr.bf16.mxu0 0
    %1162 = vmatpush1.bf16.msra.mxu0 0
    %1163 = vmatprep.subr.bf16.mxu0 0
    %1164 = vmatpush1.bf16.msra.mxu0 0
    %1165 = vmatprep.mubr.bf16.mxu0 0
    %1166 = vmatmul.mubr.bf16.gmra.mrb[0].mxu0 %v986
    %v1167 = vpop.f32.mrb[0].mxu0
    %v1168 = vadd.f32 %v993, %v1167
    %v1169 = vpop.f32.mrb[0].mxu0
    %v1170 = vadd.f32 %v997, %v1169
    %v1171 = vpop.f32.mrb[0].mxu0
    %v1172 = vadd.f32 %v993, %v1171
    %v1173 = vpop.f32.mrb[0].mxu0
    %v1174 = vadd.f32 %v997, %v1173
    %1175 = vdwg.mxu0
    %1176 = vmatprep.subr.bf16.mxu0 0
    %1177 = vmatpush1.bf16.msra.mxu0 %v1087
    %1178 = vmatprep.subr.bf16.mxu0 0
    %1179 = vmatpush1.bf16.msra.mxu0 %v1090
    %1180 = vmatprep.subr.bf16.mxu0 0
    %1181 = vmatpush1.bf16.msra.mxu0 %v1093
    %1182 = vmatprep.subr.bf16.mxu0 0
    %1183 = vmatpush1.bf16.msra.mxu0 %v1096
    %1184 = vmatprep.subr.bf16.mxu0 0
    %1185 = vmatpush1.bf16.msra.mxu0 %v1099
    %1186 = vmatprep.subr.bf16.mxu0 0
    %1187 = vmatpush1.bf16.msra.mxu0 %v1102
    %1188 = vmatprep.subr.bf16.mxu0 0
    %1189 = vmatpush1.bf16.msra.mxu0 %v1105
    %1190 = vmatprep.subr.bf16.mxu0 0
    %1191 = vmatpush1.bf16.msra.mxu0 %v1108
    %1192 = vmatprep.subr.bf16.mxu0 0
    %1193 = vmatpush1.bf16.msra.mxu0 0
    %1194 = vmatprep.subr.bf16.mxu0 0
    %1195 = vmatpush1.bf16.msra.mxu0 0
    %1196 = vmatprep.subr.bf16.mxu0 0
    %1197 = vmatpush1.bf16.msra.mxu0 0
    %1198 = vmatprep.subr.bf16.mxu0 0
    %1199 = vmatpush1.bf16.msra.mxu0 0
    %1200 = vmatprep.subr.bf16.mxu0 0
    %1201 = vmatpush1.bf16.msra.mxu0 0
    %1202 = vmatprep.subr.bf16.mxu0 0
    %1203 = vmatpush1.bf16.msra.mxu0 0
    %1204 = vmatprep.subr.bf16.mxu0 0
    %1205 = vmatpush1.bf16.msra.mxu0 0
    %1206 = vmatprep.subr.bf16.mxu0 0
    %1207 = vmatpush1.bf16.msra.mxu0 0
    %1208 = vmatprep.mubr.bf16.mxu0 0
    %1209 = vmatmul.mubr.bf16.gmra.mrb[0].mxu0 %v986
    %v1210 = vpop.f32.mrb[0].mxu0
    %v1211 = vadd.f32 %v1001, %v1210
    %v1212 = vpop.f32.mrb[0].mxu0
    %v1213 = vpop.f32.mrb[0].mxu0
    %v1214 = vadd.f32 %v1001, %v1213
    %v1215 = vpop.f32.mrb[0].mxu0
    %1216 = vdwg.mxu0
    %v1217 = vpack.c.bf16 %v1168, %v1168
    %v1218 = vpack.c.bf16 %v1172, %v1172
    %v1219 = vpack.c.bf16 %v1170, %v1170
    %v1220 = vpack.c.bf16 %v1174, %v1174
    %1221 = vmatprep.subr.bf16.mxu0 0
    %1222 = vmatpush1.bf16.xpose.msra.mxu0 %v1219
    %1223 = vmatprep.subr.bf16.mxu0 0
    %1224 = vmatpush1.bf16.xpose.msra.mxu0 0
    %1225 = vmatprep.subr.bf16.mxu0 0
    %1226 = vmatpush1.bf16.xpose.msra.mxu0 0
    %1227 = vmatprep.subr.bf16.mxu0 0
    %1228 = vmatpush1.bf16.xpose.msra.mxu0 0
    %1229 = vmatprep.subr.bf16.mxu0 0
    %1230 = vmatpush1.bf16.xpose.msra.mxu0 0
    %1231 = vmatprep.subr.bf16.mxu0 0
    %1232 = vmatpush1.bf16.xpose.msra.mxu0 0
    %1233 = vmatprep.subr.bf16.mxu0 0
    %1234 = vmatpush1.bf16.xpose.msra.mxu0 0
    %1235 = vmatprep.subr.bf16.mxu0 0
    %1236 = vmatpush1.bf16.xpose.msra.mxu0 0
    %1237 = vmatprep.subr.bf16.mxu0 0
    %1238 = vmatpush1.bf16.xpose.msra.mxu0 0
    %1239 = vmatprep.subr.bf16.mxu0 0
    %1240 = vmatpush1.bf16.xpose.msra.mxu0 0
    %1241 = vmatprep.subr.bf16.mxu0 0
    %1242 = vmatpush1.bf16.xpose.msra.mxu0 0
    %1243 = vmatprep.subr.bf16.mxu0 0
    %1244 = vmatpush1.bf16.xpose.msra.mxu0 0
    %1245 = vmatprep.subr.bf16.mxu0 0
    %1246 = vmatpush1.bf16.xpose.msra.mxu0 0
    %1247 = vmatprep.subr.bf16.mxu0 0
    %1248 = vmatpush1.bf16.xpose.msra.mxu0 0
    %1249 = vmatprep.subr.bf16.mxu0 0
    %1250 = vmatpush1.bf16.xpose.msra.mxu0 0
    %1251 = vmatprep.subr.bf16.mxu0 0
    %1252 = vmatpush1.bf16.xpose.msra.mxu0 0
    %1253 = vmatprep.mubr.bf16.mxu0 0
    %1254 = vmatmul.mubr.bf16.gmra.mrb[0].mxu0 %v1217
    %v1255 = vpop.f32.mrb[0].mxu0
    %v1256 = vadd.f32 0.0, %v1255
    %v1257 = vpop.f32.mrb[0].mxu0
    %v1258 = vpop.f32.mrb[0].mxu0
    %v1259 = vpop.f32.mrb[0].mxu0
    %1260 = vdwg.mxu0
    %1261 = vmatprep.subr.bf16.mxu0 0
    %1262 = vmatpush1.bf16.xpose.msra.mxu0 %v1220
    %1263 = vmatprep.subr.bf16.mxu0 0
    %1264 = vmatpush1.bf16.xpose.msra.mxu0 0
    %1265 = vmatprep.subr.bf16.mxu0 0
    %1266 = vmatpush1.bf16.xpose.msra.mxu0 0
    %1267 = vmatprep.subr.bf16.mxu0 0
    %1268 = vmatpush1.bf16.xpose.msra.mxu0 0
    %1269 = vmatprep.subr.bf16.mxu0 0
    %1270 = vmatpush1.bf16.xpose.msra.mxu0 0
    %1271 = vmatprep.subr.bf16.mxu0 0
    %1272 = vmatpush1.bf16.xpose.msra.mxu0 0
    %1273 = vmatprep.subr.bf16.mxu0 0
    %1274 = vmatpush1.bf16.xpose.msra.mxu0 0
    %1275 = vmatprep.subr.bf16.mxu0 0
    %1276 = vmatpush1.bf16.xpose.msra.mxu0 0
    %1277 = vmatprep.subr.bf16.mxu0 0
    %1278 = vmatpush1.bf16.xpose.msra.mxu0 0
    %1279 = vmatprep.subr.bf16.mxu0 0
    %1280 = vmatpush1.bf16.xpose.msra.mxu0 0
    %1281 = vmatprep.subr.bf16.mxu0 0
    %1282 = vmatpush1.bf16.xpose.msra.mxu0 0
    %1283 = vmatprep.subr.bf16.mxu0 0
    %1284 = vmatpush1.bf16.xpose.msra.mxu0 0
    %1285 = vmatprep.subr.bf16.mxu0 0
    %1286 = vmatpush1.bf16.xpose.msra.mxu0 0
    %1287 = vmatprep.subr.bf16.mxu0 0
    %1288 = vmatpush1.bf16.xpose.msra.mxu0 0
    %1289 = vmatprep.subr.bf16.mxu0 0
    %1290 = vmatpush1.bf16.xpose.msra.mxu0 0
    %1291 = vmatprep.subr.bf16.mxu0 0
    %1292 = vmatpush1.bf16.xpose.msra.mxu0 0
    %1293 = vmatprep.mubr.bf16.mxu0 0
    %1294 = vmatmul.mubr.bf16.gmra.mrb[0].mxu0 %v1218
    %v1295 = vpop.f32.mrb[0].mxu0
    %v1296 = vadd.f32 0.0, %v1295
    %v1297 = vpop.f32.mrb[0].mxu0
    %v1298 = vpop.f32.mrb[0].mxu0
    %v1299 = vpop.f32.mrb[0].mxu0
    %1300 = vdwg.mxu0
    %v1301 = vmul.f32 %v1256, 0.17677669
    %v1302 = vmul.f32 %v1296, 0.17677669
    %v1303 = vsel %vm720, %v1301, -inf
    %1304 = vmax.xlane.f32.xlu0 %v1303
    %v1305 = vpop.xlane.xlu0 %1304
    %v1306 = vsel %vm720, %v1302, -inf
    %1307 = vmax.xlane.f32.xlu0 %v1306
    %v1308 = vpop.xlane.xlu0 %1307
    %v1309 = vsub.f32 %v1301, %v1305
    %v1310 = vsub.f32 %v1302, %v1308
    %v1311 = vmul.f32 %v1309, 1.442695
    %v1312 = vpow.pop %v1311
    %v1313 = vmul.f32 %v1310, 1.442695
    %v1314 = vpow.pop %v1313
    %v1315 = vsel %vm720, %v1312, 0.0
    %1316 = vadd.xlane.f32.xlu0 %v1315
    %v1317 = vpop.xlane.xlu0 %1316
    %v1318 = vsel %vm720, %v1314, 0.0
    %1319 = vadd.xlane.f32.xlu0 %v1318
    %v1320 = vpop.xlane.xlu0 %1319
    %v1321 = vrcp.pop %v1317
    %v1322 = vrcp.pop %v1320
    %v1323 = vmul.f32 %v1312, %v1321
    %v1324 = vmul.f32 %v1314, %v1322
    %v1325 = vpack.c.bf16 %v1323, %v1323
    %v1326 = vpack.c.bf16 %v1324, %v1324
    %v1327 = vpack.c.bf16 %v1211, %v1211
    %v1328 = vpack.c.bf16 %v1214, %v1214
    %v1330 = vsel %vm720, %v1325, 0
    %v1333 = vsel %vm748, %v1327, 0
    %1335 = vmatprep.subr.bf16.mxu0 0
    %1336 = vmatpush1.bf16.msra.mxu0 %v1333
    %1337 = vmatprep.subr.bf16.mxu0 0
    %1338 = vmatpush1.bf16.msra.mxu0 0
    %1339 = vmatprep.subr.bf16.mxu0 0
    %1340 = vmatpush1.bf16.msra.mxu0 0
    %1341 = vmatprep.subr.bf16.mxu0 0
    %1342 = vmatpush1.bf16.msra.mxu0 0
    %1343 = vmatprep.subr.bf16.mxu0 0
    %1344 = vmatpush1.bf16.msra.mxu0 0
    %1345 = vmatprep.subr.bf16.mxu0 0
    %1346 = vmatpush1.bf16.msra.mxu0 0
    %1347 = vmatprep.subr.bf16.mxu0 0
    %1348 = vmatpush1.bf16.msra.mxu0 0
    %1349 = vmatprep.subr.bf16.mxu0 0
    %1350 = vmatpush1.bf16.msra.mxu0 0
    %1351 = vmatprep.subr.bf16.mxu0 0
    %1352 = vmatpush1.bf16.msra.mxu0 0
    %1353 = vmatprep.subr.bf16.mxu0 0
    %1354 = vmatpush1.bf16.msra.mxu0 0
    %1355 = vmatprep.subr.bf16.mxu0 0
    %1356 = vmatpush1.bf16.msra.mxu0 0
    %1357 = vmatprep.subr.bf16.mxu0 0
    %1358 = vmatpush1.bf16.msra.mxu0 0
    %1359 = vmatprep.subr.bf16.mxu0 0
    %1360 = vmatpush1.bf16.msra.mxu0 0
    %1361 = vmatprep.subr.bf16.mxu0 0
    %1362 = vmatpush1.bf16.msra.mxu0 0
    %1363 = vmatprep.subr.bf16.mxu0 0
    %1364 = vmatpush1.bf16.msra.mxu0 0
    %1365 = vmatprep.subr.bf16.mxu0 0
    %1366 = vmatpush1.bf16.msra.mxu0 0
    %1367 = vmatprep.mubr.bf16.mxu0 0
    %1368 = vmatmul.mubr.bf16.gmra.mrb[0].mxu0 %v1330
    %v1369 = vpop.f32.mrb[0].mxu0
    %v1370 = vadd.f32 0.0, %v1369
    %v1371 = vpop.f32.mrb[0].mxu0
    %v1372 = vpop.f32.mrb[0].mxu0
    %v1373 = vpop.f32.mrb[0].mxu0
    %1374 = vdwg.mxu0
    %v1376 = vsel %vm720, %v1326, 0
    %v1379 = vsel %vm748, %v1328, 0
    %1381 = vmatprep.subr.bf16.mxu0 0
    %1382 = vmatpush1.bf16.msra.mxu0 %v1379
    %1383 = vmatprep.subr.bf16.mxu0 0
    %1384 = vmatpush1.bf16.msra.mxu0 0
    %1385 = vmatprep.subr.bf16.mxu0 0
    %1386 = vmatpush1.bf16.msra.mxu0 0
    %1387 = vmatprep.subr.bf16.mxu0 0
    %1388 = vmatpush1.bf16.msra.mxu0 0
    %1389 = vmatprep.subr.bf16.mxu0 0
    %1390 = vmatpush1.bf16.msra.mxu0 0
    %1391 = vmatprep.subr.bf16.mxu0 0
    %1392 = vmatpush1.bf16.msra.mxu0 0
    %1393 = vmatprep.subr.bf16.mxu0 0
    %1394 = vmatpush1.bf16.msra.mxu0 0
    %1395 = vmatprep.subr.bf16.mxu0 0
    %1396 = vmatpush1.bf16.msra.mxu0 0
    %1397 = vmatprep.subr.bf16.mxu0 0
    %1398 = vmatpush1.bf16.msra.mxu0 0
    %1399 = vmatprep.subr.bf16.mxu0 0
    %1400 = vmatpush1.bf16.msra.mxu0 0
    %1401 = vmatprep.subr.bf16.mxu0 0
    %1402 = vmatpush1.bf16.msra.mxu0 0
    %1403 = vmatprep.subr.bf16.mxu0 0
    %1404 = vmatpush1.bf16.msra.mxu0 0
    %1405 = vmatprep.subr.bf16.mxu0 0
    %1406 = vmatpush1.bf16.msra.mxu0 0
    %1407 = vmatprep.subr.bf16.mxu0 0
    %1408 = vmatpush1.bf16.msra.mxu0 0
    %1409 = vmatprep.subr.bf16.mxu0 0
    %1410 = vmatpush1.bf16.msra.mxu0 0
    %1411 = vmatprep.subr.bf16.mxu0 0
    %1412 = vmatpush1.bf16.msra.mxu0 0
    %1413 = vmatprep.mubr.bf16.mxu0 0
    %1414 = vmatmul.mubr.bf16.gmra.mrb[0].mxu0 %v1376
    %v1415 = vpop.f32.mrb[0].mxu0
    %v1416 = vadd.f32 0.0, %v1415
    %v1417 = vpop.f32.mrb[0].mxu0
    %v1418 = vpop.f32.mrb[0].mxu0
    %v1419 = vpop.f32.mrb[0].mxu0
    %1420 = vdwg.mxu0
    %s1421 = scalar_lea.vmem [#allocation2], 192
    %v1422 = vld [vmem:[%s1421] sm:$0xf]
    %v1423 = vld [vmem:[%s1421 + $0x4] sm:$0xf]
    %v1424 = vld [vmem:[%s1421 + $0x8] sm:$0xf]
    %v1425 = vld [vmem:[%s1421 + $0xc] sm:$0xf]
    %v1426 = vld [vmem:[%s1421 + $0x10] sm:$0xf]
    %v1427 = vld [vmem:[%s1421 + $0x14] sm:$0xf]
    %v1428 = vld [vmem:[%s1421 + $0x18] sm:$0xf]
    %v1429 = vld [vmem:[%s1421 + $0x1c] sm:$0xf]
    %v1430 = vld [vmem:[%s1421 + $0x20] sm:$0xf]
    %v1431 = vld [vmem:[%s1421 + $0x24] sm:$0xf]
    %v1432 = vld [vmem:[%s1421 + $0x28] sm:$0xf]
    %v1433 = vld [vmem:[%s1421 + $0x2c] sm:$0xf]
    %v1434 = vld [vmem:[%s1421 + $0x30] sm:$0xf]
    %v1435 = vld [vmem:[%s1421 + $0x34] sm:$0xf]
    %v1436 = vld [vmem:[%s1421 + $0x38] sm:$0xf]
    %v1437 = vld [vmem:[%s1421 + $0x3c] sm:$0xf]
    %v1438 = vpack.c.bf16 %v1416, %v1370
    %v1439 = vld [vmem:[#allocation7 + $0x6] ss:$0 sm:$0xff]
    %v1456 = vunpack.c.l.b16 %v1422
    %v1457 = vunpack.c.l.b16 %v1423
    %v1458 = vunpack.c.l.b16 %v1424
    %v1459 = vunpack.c.l.b16 %v1425
    %v1460 = vunpack.c.l.b16 %v1426
    %v1461 = vunpack.c.l.b16 %v1427
    %v1462 = vunpack.c.l.b16 %v1428
    %v1463 = vunpack.c.l.b16 %v1429
    %v1464 = vunpack.c.l.b16 %v1430
    %v1465 = vunpack.c.l.b16 %v1431
    %v1466 = vunpack.c.l.b16 %v1432
    %v1467 = vunpack.c.l.b16 %v1433
    %v1468 = vunpack.c.l.b16 %v1434
    %v1469 = vunpack.c.l.b16 %v1435
    %v1470 = vunpack.c.l.b16 %v1436
    %v1471 = vunpack.c.l.b16 %v1437
    %v1472 = vpack.c.b16 %v1457, %v1456
    %v1473 = vpack.c.b16 %v1459, %v1458
    %v1474 = vpack.c.b16 %v1461, %v1460
    %v1475 = vpack.c.b16 %v1463, %v1462
    %v1476 = vpack.c.b16 %v1465, %v1464
    %v1477 = vpack.c.b16 %v1467, %v1466
    %v1478 = vpack.c.b16 %v1469, %v1468
    %v1479 = vpack.c.b16 %v1471, %v1470
    %1488 = vmatprep.subr.bf16.mxu0 0
    %1489 = vmatpush1.bf16.msra.mxu0 %v1472
    %1490 = vmatprep.subr.bf16.mxu0 0
    %1491 = vmatpush1.bf16.msra.mxu0 %v1473
    %1492 = vmatprep.subr.bf16.mxu0 0
    %1493 = vmatpush1.bf16.msra.mxu0 %v1474
    %1494 = vmatprep.subr.bf16.mxu0 0
    %1495 = vmatpush1.bf16.msra.mxu0 %v1475
    %1496 = vmatprep.subr.bf16.mxu0 0
    %1497 = vmatpush1.bf16.msra.mxu0 %v1476
    %1498 = vmatprep.subr.bf16.mxu0 0
    %1499 = vmatpush1.bf16.msra.mxu0 %v1477
    %1500 = vmatprep.subr.bf16.mxu0 0
    %1501 = vmatpush1.bf16.msra.mxu0 %v1478
    %1502 = vmatprep.subr.bf16.mxu0 0
    %1503 = vmatpush1.bf16.msra.mxu0 %v1479
    %1504 = vmatprep.subr.bf16.mxu0 0
    %1505 = vmatpush1.bf16.msra.mxu0 0
    %1506 = vmatprep.subr.bf16.mxu0 0
    %1507 = vmatpush1.bf16.msra.mxu0 0
    %1508 = vmatprep.subr.bf16.mxu0 0
    %1509 = vmatpush1.bf16.msra.mxu0 0
    %1510 = vmatprep.subr.bf16.mxu0 0
    %1511 = vmatpush1.bf16.msra.mxu0 0
    %1512 = vmatprep.subr.bf16.mxu0 0
    %1513 = vmatpush1.bf16.msra.mxu0 0
    %1514 = vmatprep.subr.bf16.mxu0 0
    %1515 = vmatpush1.bf16.msra.mxu0 0
    %1516 = vmatprep.subr.bf16.mxu0 0
    %1517 = vmatpush1.bf16.msra.mxu0 0
    %1518 = vmatprep.subr.bf16.mxu0 0
    %1519 = vmatpush1.bf16.msra.mxu0 0
    %1520 = vmatprep.mubr.bf16.mxu0 0
    %1521 = vmatmul.mubr.bf16.gmra.mrb[0].mxu0 %v1438
    %v1522 = vpop.f32.mrb[0].mxu0
    %v1523 = vadd.f32 %v1439, %v1522
    %v1524 = vpop.f32.mrb[0].mxu0
    %v1525 = vpop.f32.mrb[0].mxu0
    %v1526 = vadd.f32 %v1439, %v1525
    %v1527 = vpop.f32.mrb[0].mxu0
    %1528 = vdwg.mxu0
    %v1529 = vadd.f32 %v951, %v1523
    %v1530 = vadd.f32 %v952, %v1526
    %1531 = vadd.xlane.f32.xlu0 %v1529
    %v1532 = vpop.xlane.xlu0 %1531
    %1533 = vadd.xlane.f32.xlu0 %v1530
    %v1534 = vpop.xlane.xlu0 %1533
    %v1535 = vmul.f32 %v1532, 0.03125
    %v1536 = vmul.f32 %v1534, 0.03125
    %v1537 = vmul.f32 %v1529, %v1529
    %v1538 = vmul.f32 %v1530, %v1530
    %1539 = vadd.xlane.f32.xlu0 %v1537
    %v1540 = vpop.xlane.xlu0 %1539
    %1541 = vadd.xlane.f32.xlu0 %v1538
    %v1542 = vpop.xlane.xlu0 %1541
    %v1543 = vmul.f32 %v1540, 0.03125
    %v1544 = vmul.f32 %v1542, 0.03125
    %v1545 = vmul.f32 %v1535, %v1535
    %v1546 = vmul.f32 %v1536, %v1536
    %v1547 = vsub.f32 %v1543, %v1545
    %v1548 = vsub.f32 %v1544, %v1546
    %v1549 = vsub.f32 %v1529, %v1535
    %v1550 = vsub.f32 %v1530, %v1536
    %v1551 = vadd.f32 %v1547, 1e-05
    %v1552 = vadd.f32 %v1548, 1e-05
    %v1553 = vrsqrt.pop %v1551
    %v1554 = vrsqrt.pop %v1552
    %v1555 = vmul.f32 %v1549, %v1553
    %v1556 = vmul.f32 %v1550, %v1554
    %v1557 = vld [vmem:[#allocation7 + $0x7] ss:$0 sm:$0xff]
    %v1558 = vmul.f32 %v1555, %v1557
    %v1559 = vmul.f32 %v1556, %v1557
    %v1560 = vld [vmem:[#allocation7 + $0x18] ss:$0 sm:$0xff]
    %v1561 = vadd.f32 %v1558, %v1560
    %v1562 = vadd.f32 %v1559, %v1560
    %s1563 = scalar_lea.vmem [#allocation4], 576
    %v1564 = vld [vmem:[%s1563] sm:$0xff]
    %v1565 = vld [vmem:[%s1563 + $0xc] sm:$0xff]
    %v1566 = vld [vmem:[%s1563 + $0x18] sm:$0xff]
    %v1567 = vld [vmem:[%s1563 + $0x24] sm:$0xff]
    %v1568 = vld [vmem:[%s1563 + $0x30] sm:$0xff]
    %v1569 = vld [vmem:[%s1563 + $0x3c] sm:$0xff]
    %v1570 = vld [vmem:[%s1563 + $0x48] sm:$0xff]
    %v1571 = vld [vmem:[%s1563 + $0x54] sm:$0xff]
    %v1572 = vld [vmem:[%s1563 + $0x60] sm:$0xff]
    %v1573 = vld [vmem:[%s1563 + $0x6c] sm:$0xff]
    %v1574 = vld [vmem:[%s1563 + $0x78] sm:$0xff]
    %v1575 = vld [vmem:[%s1563 + $0x84] sm:$0xff]
    %v1576 = vld [vmem:[%s1563 + $0x90] sm:$0xff]
    %v1577 = vld [vmem:[%s1563 + $0x9c] sm:$0xff]
    %v1578 = vld [vmem:[%s1563 + $0xa8] sm:$0xff]
    %v1579 = vld [vmem:[%s1563 + $0xb4] sm:$0xff]
    %v1580 = vpack.c.bf16 %v1562, %v1561
    %s1581 = scalar_lea.vmem [#allocation7], 25
    %v1582 = vld [vmem:[%s1581] ss:$8 sm:$0x3]
    %v1584 = vlaneseq
    %v1585 = vshrl.u32 %v1584, 7
    %v1586 = vsub.s32 0, %v1585
    %v1587 = vrot.slane %v1582, %v1586
    %v1588 = vlaneseq
    %v1589 = vshrl.u32 %v1588, 7
    %v1590 = vsub.s32 1, %v1589
    %v1591 = vrot.slane %v1582, %v1590
    %v1610 = vunpack.c.l.b16 %v1564
    %v1611 = vunpack.c.h.b16 %v1564
    %v1612 = vunpack.c.l.b16 %v1565
    %v1613 = vunpack.c.h.b16 %v1565
    %v1614 = vunpack.c.l.b16 %v1566
    %v1615 = vunpack.c.h.b16 %v1566
    %v1616 = vunpack.c.l.b16 %v1567
    %v1617 = vunpack.c.h.b16 %v1567
    %v1618 = vunpack.c.l.b16 %v1568
    %v1619 = vunpack.c.h.b16 %v1568
    %v1620 = vunpack.c.l.b16 %v1569
    %v1621 = vunpack.c.h.b16 %v1569
    %v1622 = vunpack.c.l.b16 %v1570
    %v1623 = vunpack.c.h.b16 %v1570
    %v1624 = vunpack.c.l.b16 %v1571
    %v1625 = vunpack.c.h.b16 %v1571
    %v1626 = vunpack.c.l.b16 %v1572
    %v1627 = vunpack.c.h.b16 %v1572
    %v1628 = vunpack.c.l.b16 %v1573
    %v1629 = vunpack.c.h.b16 %v1573
    %v1630 = vunpack.c.l.b16 %v1574
    %v1631 = vunpack.c.h.b16 %v1574
    %v1632 = vunpack.c.l.b16 %v1575
    %v1633 = vunpack.c.h.b16 %v1575
    %v1634 = vunpack.c.l.b16 %v1576
    %v1635 = vunpack.c.h.b16 %v1576
    %v1636 = vunpack.c.l.b16 %v1577
    %v1637 = vunpack.c.h.b16 %v1577
    %v1638 = vunpack.c.l.b16 %v1578
    %v1639 = vunpack.c.h.b16 %v1578
    %v1640 = vunpack.c.l.b16 %v1579
    %v1641 = vunpack.c.h.b16 %v1579
    %v1642 = vpack.c.b16 %v1612, %v1610
    %v1643 = vpack.c.b16 %v1613, %v1611
    %v1644 = vpack.c.b16 %v1616, %v1614
    %v1645 = vpack.c.b16 %v1617, %v1615
    %v1646 = vpack.c.b16 %v1620, %v1618
    %v1647 = vpack.c.b16 %v1621, %v1619
    %v1648 = vpack.c.b16 %v1624, %v1622
    %v1649 = vpack.c.b16 %v1625, %v1623
    %v1650 = vpack.c.b16 %v1628, %v1626
    %v1651 = vpack.c.b16 %v1629, %v1627
    %v1652 = vpack.c.b16 %v1632, %v1630
    %v1653 = vpack.c.b16 %v1633, %v1631
    %v1654 = vpack.c.b16 %v1636, %v1634
    %v1655 = vpack.c.b16 %v1637, %v1635
    %v1656 = vpack.c.b16 %v1640, %v1638
    %v1657 = vpack.c.b16 %v1641, %v1639
    %1674 = vmatprep.subr.bf16.mxu0 %v1643
    %1675 = vmatpush1.bf16.msra.mxu0 %v1642
    %1676 = vmatprep.subr.bf16.mxu0 %v1645
    %1677 = vmatpush1.bf16.msra.mxu0 %v1644
    %1678 = vmatprep.subr.bf16.mxu0 %v1647
    %1679 = vmatpush1.bf16.msra.mxu0 %v1646
    %1680 = vmatprep.subr.bf16.mxu0 %v1649
    %1681 = vmatpush1.bf16.msra.mxu0 %v1648
    %1682 = vmatprep.subr.bf16.mxu0 %v1651
    %1683 = vmatpush1.bf16.msra.mxu0 %v1650
    %1684 = vmatprep.subr.bf16.mxu0 %v1653
    %1685 = vmatpush1.bf16.msra.mxu0 %v1652
    %1686 = vmatprep.subr.bf16.mxu0 %v1655
    %1687 = vmatpush1.bf16.msra.mxu0 %v1654
    %1688 = vmatprep.subr.bf16.mxu0 %v1657
    %1689 = vmatpush1.bf16.msra.mxu0 %v1656
    %1690 = vmatprep.subr.bf16.mxu0 0
    %1691 = vmatpush1.bf16.msra.mxu0 0
    %1692 = vmatprep.subr.bf16.mxu0 0
    %1693 = vmatpush1.bf16.msra.mxu0 0
    %1694 = vmatprep.subr.bf16.mxu0 0
    %1695 = vmatpush1.bf16.msra.mxu0 0
    %1696 = vmatprep.subr.bf16.mxu0 0
    %1697 = vmatpush1.bf16.msra.mxu0 0
    %1698 = vmatprep.subr.bf16.mxu0 0
    %1699 = vmatpush1.bf16.msra.mxu0 0
    %1700 = vmatprep.subr.bf16.mxu0 0
    %1701 = vmatpush1.bf16.msra.mxu0 0
    %1702 = vmatprep.subr.bf16.mxu0 0
    %1703 = vmatpush1.bf16.msra.mxu0 0
    %1704 = vmatprep.subr.bf16.mxu0 0
    %1705 = vmatpush1.bf16.msra.mxu0 0
    %1706 = vmatprep.mubr.bf16.mxu0 0
    %1707 = vmatmul.mubr.bf16.gmra.mrb[0].mxu0 %v1580
    %v1708 = vpop.f32.mrb[0].mxu0
    %v1709 = vadd.f32 %v1587, %v1708
    %v1710 = vpop.f32.mrb[0].mxu0
    %v1711 = vadd.f32 %v1591, %v1710
    %v1712 = vpop.f32.mrb[0].mxu0
    %v1713 = vadd.f32 %v1587, %v1712
    %v1714 = vpop.f32.mrb[0].mxu0
    %v1715 = vadd.f32 %v1591, %v1714
    %1716 = vdwg.mxu0
    %v1717 = vmax.f32 %v1709, 0.0
    %v1718 = vmax.f32 %v1711, 0.0
    %v1719 = vmax.f32 %v1713, 0.0
    %v1720 = vmax.f32 %v1715, 0.0
    %v1721 = vld [vmem:[#allocation6] sm:$0xf]
    %v1722 = vld [vmem:[#allocation6 + $0x4] sm:$0xf]
    %v1723 = vld [vmem:[#allocation6 + $0x8] sm:$0xf]
    %v1724 = vld [vmem:[#allocation6 + $0xc] sm:$0xf]
    %v1725 = vld [vmem:[#allocation6 + $0x10] sm:$0xf]
    %v1726 = vld [vmem:[#allocation6 + $0x14] sm:$0xf]
    %v1727 = vld [vmem:[#allocation6 + $0x18] sm:$0xf]
    %v1728 = vld [vmem:[#allocation6 + $0x1c] sm:$0xf]
    %v1729 = vld [vmem:[#allocation6 + $0x20] sm:$0xf]
    %v1730 = vld [vmem:[#allocation6 + $0x24] sm:$0xf]
    %v1731 = vld [vmem:[#allocation6 + $0x28] sm:$0xf]
    %v1732 = vld [vmem:[#allocation6 + $0x2c] sm:$0xf]
    %v1733 = vld [vmem:[#allocation6 + $0x30] sm:$0xf]
    %v1734 = vld [vmem:[#allocation6 + $0x34] sm:$0xf]
    %v1735 = vld [vmem:[#allocation6 + $0x38] sm:$0xf]
    %v1736 = vld [vmem:[#allocation6 + $0x3c] sm:$0xf]
    %v1737 = vld [vmem:[#allocation6 + $0x40] sm:$0xf]
    %v1738 = vld [vmem:[#allocation6 + $0x44] sm:$0xf]
    %v1739 = vld [vmem:[#allocation6 + $0x48] sm:$0xf]
    %v1740 = vld [vmem:[#allocation6 + $0x4c] sm:$0xf]
    %v1741 = vld [vmem:[#allocation6 + $0x50] sm:$0xf]
    %v1742 = vld [vmem:[#allocation6 + $0x54] sm:$0xf]
    %v1743 = vld [vmem:[#allocation6 + $0x58] sm:$0xf]
    %v1744 = vld [vmem:[#allocation6 + $0x5c] sm:$0xf]
    %v1745 = vld [vmem:[#allocation6 + $0x60] sm:$0xf]
    %v1746 = vld [vmem:[#allocation6 + $0x64] sm:$0xf]
    %v1747 = vld [vmem:[#allocation6 + $0x68] sm:$0xf]
    %v1748 = vld [vmem:[#allocation6 + $0x6c] sm:$0xf]
    %v1749 = vld [vmem:[#allocation6 + $0x70] sm:$0xf]
    %v1750 = vld [vmem:[#allocation6 + $0x74] sm:$0xf]
    %v1751 = vld [vmem:[#allocation6 + $0x78] sm:$0xf]
    %v1752 = vld [vmem:[#allocation6 + $0x7c] sm:$0xf]
    %v1753 = vpack.c.bf16 %v1719, %v1717
    %v1754 = vpack.c.bf16 %v1720, %v1718
    %v1755 = vld [vmem:[#allocation7 + $0x1a] ss:$0 sm:$0xff]
    %v1788 = vunpack.c.l.b16 %v1721
    %v1789 = vunpack.c.l.b16 %v1722
    %v1790 = vunpack.c.l.b16 %v1723
    %v1791 = vunpack.c.l.b16 %v1724
    %v1792 = vunpack.c.l.b16 %v1725
    %v1793 = vunpack.c.l.b16 %v1726
    %v1794 = vunpack.c.l.b16 %v1727
    %v1795 = vunpack.c.l.b16 %v1728
    %v1796 = vunpack.c.l.b16 %v1729
    %v1797 = vunpack.c.l.b16 %v1730
    %v1798 = vunpack.c.l.b16 %v1731
    %v1799 = vunpack.c.l.b16 %v1732
    %v1800 = vunpack.c.l.b16 %v1733
    %v1801 = vunpack.c.l.b16 %v1734
    %v1802 = vunpack.c.l.b16 %v1735
    %v1803 = vunpack.c.l.b16 %v1736
    %v1804 = vunpack.c.l.b16 %v1737
    %v1805 = vunpack.c.l.b16 %v1738
    %v1806 = vunpack.c.l.b16 %v1739
    %v1807 = vunpack.c.l.b16 %v1740
    %v1808 = vunpack.c.l.b16 %v1741
    %v1809 = vunpack.c.l.b16 %v1742
    %v1810 = vunpack.c.l.b16 %v1743
    %v1811 = vunpack.c.l.b16 %v1744
    %v1812 = vunpack.c.l.b16 %v1745
    %v1813 = vunpack.c.l.b16 %v1746
    %v1814 = vunpack.c.l.b16 %v1747
    %v1815 = vunpack.c.l.b16 %v1748
    %v1816 = vunpack.c.l.b16 %v1749
    %v1817 = vunpack.c.l.b16 %v1750
    %v1818 = vunpack.c.l.b16 %v1751
    %v1819 = vunpack.c.l.b16 %v1752
    %v1820 = vpack.c.b16 %v1789, %v1788
    %v1821 = vpack.c.b16 %v1791, %v1790
    %v1822 = vpack.c.b16 %v1793, %v1792
    %v1823 = vpack.c.b16 %v1795, %v1794
    %v1824 = vpack.c.b16 %v1797, %v1796
    %v1825 = vpack.c.b16 %v1799, %v1798
    %v1826 = vpack.c.b16 %v1801, %v1800
    %v1827 = vpack.c.b16 %v1803, %v1802
    %v1828 = vpack.c.b16 %v1805, %v1804
    %v1829 = vpack.c.b16 %v1807, %v1806
    %v1830 = vpack.c.b16 %v1809, %v1808
    %v1831 = vpack.c.b16 %v1811, %v1810
    %v1832 = vpack.c.b16 %v1813, %v1812
    %v1833 = vpack.c.b16 %v1815, %v1814
    %v1834 = vpack.c.b16 %v1817, %v1816
    %v1835 = vpack.c.b16 %v1819, %v1818
    %1852 = vmatprep.subr.bf16.mxu0 0
    %1853 = vmatpush1.bf16.msra.mxu0 %v1820
    %1854 = vmatprep.subr.bf16.mxu0 0
    %1855 = vmatpush1.bf16.msra.mxu0 %v1821
    %1856 = vmatprep.subr.bf16.mxu0 0
    %1857 = vmatpush1.bf16.msra.mxu0 %v1822
    %1858 = vmatprep.subr.bf16.mxu0 0
    %1859 = vmatpush1.bf16.msra.mxu0 %v1823
    %1860 = vmatprep.subr.bf16.mxu0 0
    %1861 = vmatpush1.bf16.msra.mxu0 %v1824
    %1862 = vmatprep.subr.bf16.mxu0 0
    %1863 = vmatpush1.bf16.msra.mxu0 %v1825
    %1864 = vmatprep.subr.bf16.mxu0 0
    %1865 = vmatpush1.bf16.msra.mxu0 %v1826
    %1866 = vmatprep.subr.bf16.mxu0 0
    %1867 = vmatpush1.bf16.msra.mxu0 %v1827
    %1868 = vmatprep.subr.bf16.mxu0 0
    %1869 = vmatpush1.bf16.msra.mxu0 %v1828
    %1870 = vmatprep.subr.bf16.mxu0 0
    %1871 = vmatpush1.bf16.msra.mxu0 %v1829
    %1872 = vmatprep.subr.bf16.mxu0 0
    %1873 = vmatpush1.bf16.msra.mxu0 %v1830
    %1874 = vmatprep.subr.bf16.mxu0 0
    %1875 = vmatpush1.bf16.msra.mxu0 %v1831
    %1876 = vmatprep.subr.bf16.mxu0 0
    %1877 = vmatpush1.bf16.msra.mxu0 %v1832
    %1878 = vmatprep.subr.bf16.mxu0 0
    %1879 = vmatpush1.bf16.msra.mxu0 %v1833
    %1880 = vmatprep.subr.bf16.mxu0 0
    %1881 = vmatpush1.bf16.msra.mxu0 %v1834
    %1882 = vmatprep.subr.bf16.mxu0 0
    %1883 = vmatpush1.bf16.msra.mxu0 %v1835
    %1884 = vmatprep.mubr.bf16.mxu0 %v1754
    %1885 = vmatmul.mubr.bf16.gmra.mrb[0].mxu0 %v1753
    %v1886 = vpop.f32.mrb[0].mxu0
    %v1887 = vadd.f32 %v1755, %v1886
    %v1888 = vpop.f32.mrb[0].mxu0
    %v1889 = vpop.f32.mrb[0].mxu0
    %v1890 = vadd.f32 %v1755, %v1889
    %v1891 = vpop.f32.mrb[0].mxu0
    %1892 = vdwg.mxu0
    %v1893 = vadd.f32 %v1561, %v1887
    %v1894 = vadd.f32 %v1562, %v1890
    %1895 = vadd.xlane.f32.xlu0 %v1893
    %v1896 = vpop.xlane.xlu0 %1895
    %1897 = vadd.xlane.f32.xlu0 %v1894
    %v1898 = vpop.xlane.xlu0 %1897
    %v1899 = vmul.f32 %v1896, 0.03125
    %v1900 = vmul.f32 %v1898, 0.03125
    %v1901 = vmul.f32 %v1893, %v1893
    %v1902 = vmul.f32 %v1894, %v1894
    %1903 = vadd.xlane.f32.xlu0 %v1901
    %v1904 = vpop.xlane.xlu0 %1903
    %1905 = vadd.xlane.f32.xlu0 %v1902
    %v1906 = vpop.xlane.xlu0 %1905
    %v1907 = vmul.f32 %v1904, 0.03125
    %v1908 = vmul.f32 %v1906, 0.03125
    %v1909 = vmul.f32 %v1899, %v1899
    %v1910 = vmul.f32 %v1900, %v1900
    %v1911 = vsub.f32 %v1907, %v1909
    %v1912 = vsub.f32 %v1908, %v1910
    %v1913 = vsub.f32 %v1893, %v1899
    %v1914 = vsub.f32 %v1894, %v1900
    %v1915 = vadd.f32 %v1911, 1e-05
    %v1916 = vadd.f32 %v1912, 1e-05
    %v1917 = vrsqrt.pop %v1915
    %v1918 = vrsqrt.pop %v1916
    %v1919 = vmul.f32 %v1913, %v1917
    %v1920 = vmul.f32 %v1914, %v1918
    %v1921 = vld [vmem:[#allocation7 + $0x1b] ss:$0 sm:$0xff]
    %v1922 = vmul.f32 %v1919, %v1921
    %v1923 = vmul.f32 %v1920, %v1921
    %v1924 = vld [vmem:[#allocation7 + $0x1c] ss:$0 sm:$0xff]
    %v1925 = vadd.f32 %v1922, %v1924
    %v1926 = vadd.f32 %v1923, %v1924
    %s1927 = scalar_lea.vmem [#allocation4], 768
    %v1928 = vld [vmem:[%s1927] sm:$0xff]
    %v1929 = vld [vmem:[%s1927 + $0x8] sm:$0xf]
    %v1930 = vld [vmem:[%s1927 + $0xc] sm:$0xff]
    %v1931 = vld [vmem:[%s1927 + $0x14] sm:$0xf]
    %v1932 = vld [vmem:[%s1927 + $0x18] sm:$0xff]
    %v1933 = vld [vmem:[%s1927 + $0x20] sm:$0xf]
    %v1934 = vld [vmem:[%s1927 + $0x24] sm:$0xff]
    %v1935 = vld [vmem:[%s1927 + $0x2c] sm:$0xf]
    %v1936 = vld [vmem:[%s1927 + $0x30] sm:$0xff]
    %v1937 = vld [vmem:[%s1927 + $0x38] sm:$0xf]
    %v1938 = vld [vmem:[%s1927 + $0x3c] sm:$0xff]
    %v1939 = vld [vmem:[%s1927 + $0x44] sm:$0xf]
    %v1940 = vld [vmem:[%s1927 + $0x48] sm:$0xff]
    %v1941 = vld [vmem:[%s1927 + $0x50] sm:$0xf]
    %v1942 = vld [vmem:[%s1927 + $0x54] sm:$0xff]
    %v1943 = vld [vmem:[%s1927 + $0x5c] sm:$0xf]
    %v1944 = vld [vmem:[%s1927 + $0x60] sm:$0xff]
    %v1945 = vld [vmem:[%s1927 + $0x68] sm:$0xf]
    %v1946 = vld [vmem:[%s1927 + $0x6c] sm:$0xff]
    %v1947 = vld [vmem:[%s1927 + $0x74] sm:$0xf]
    %v1948 = vld [vmem:[%s1927 + $0x78] sm:$0xff]
    %v1949 = vld [vmem:[%s1927 + $0x80] sm:$0xf]
    %v1950 = vld [vmem:[%s1927 + $0x84] sm:$0xff]
    %v1951 = vld [vmem:[%s1927 + $0x8c] sm:$0xf]
    %v1952 = vld [vmem:[%s1927 + $0x90] sm:$0xff]
    %v1953 = vld [vmem:[%s1927 + $0x98] sm:$0xf]
    %v1954 = vld [vmem:[%s1927 + $0x9c] sm:$0xff]
    %v1955 = vld [vmem:[%s1927 + $0xa4] sm:$0xf]
    %v1956 = vld [vmem:[%s1927 + $0xa8] sm:$0xff]
    %v1957 = vld [vmem:[%s1927 + $0xb0] sm:$0xf]
    %v1958 = vld [vmem:[%s1927 + $0xb4] sm:$0xff]
    %v1959 = vld [vmem:[%s1927 + $0xbc] sm:$0xf]
    %v1960 = vpack.c.bf16 %v1926, %v1925
    %s1961 = scalar_lea.vmem [#allocation7], 29
    %v1962 = vld [vmem:[%s1961] ss:$8 sm:$0x7]
    %v1964 = vlaneseq
    %v1965 = vshrl.u32 %v1964, 7
    %v1966 = vsub.s32 0, %v1965
    %v1967 = vrot.slane %v1962, %v1966
    %v1968 = vlaneseq
    %v1969 = vshrl.u32 %v1968, 7
    %v1970 = vsub.s32 1, %v1969
    %v1971 = vrot.slane %v1962, %v1970
    %v1972 = vlaneseq
    %v1973 = vshrl.u32 %v1972, 7
    %v1974 = vsub.s32 2, %v1973
    %v1975 = vrot.slane %v1962, %v1974
    %v2011 = vunpack.c.l.b16 %v1928
    %v2012 = vunpack.c.h.b16 %v1928
    %v2013 = vunpack.c.l.b16 %v1929
    %v2014 = vunpack.c.l.b16 %v1930
    %v2015 = vunpack.c.h.b16 %v1930
    %v2016 = vunpack.c.l.b16 %v1931
    %v2017 = vunpack.c.l.b16 %v1932
    %v2018 = vunpack.c.h.b16 %v1932
    %v2019 = vunpack.c.l.b16 %v1933
    %v2020 = vunpack.c.l.b16 %v1934
    %v2021 = vunpack.c.h.b16 %v1934
    %v2022 = vunpack.c.l.b16 %v1935
    %v2023 = vunpack.c.l.b16 %v1936
    %v2024 = vunpack.c.h.b16 %v1936
    %v2025 = vunpack.c.l.b16 %v1937
    %v2026 = vunpack.c.l.b16 %v1938
    %v2027 = vunpack.c.h.b16 %v1938
    %v2028 = vunpack.c.l.b16 %v1939
    %v2029 = vunpack.c.l.b16 %v1940
    %v2030 = vunpack.c.h.b16 %v1940
    %v2031 = vunpack.c.l.b16 %v1941
    %v2032 = vunpack.c.l.b16 %v1942
    %v2033 = vunpack.c.h.b16 %v1942
    %v2034 = vunpack.c.l.b16 %v1943
    %v2035 = vunpack.c.l.b16 %v1944
    %v2036 = vunpack.c.h.b16 %v1944
    %v2037 = vunpack.c.l.b16 %v1945
    %v2038 = vunpack.c.l.b16 %v1946
    %v2039 = vunpack.c.h.b16 %v1946
    %v2040 = vunpack.c.l.b16 %v1947
    %v2041 = vunpack.c.l.b16 %v1948
    %v2042 = vunpack.c.h.b16 %v1948
    %v2043 = vunpack.c.l.b16 %v1949
    %v2044 = vunpack.c.l.b16 %v1950
    %v2045 = vunpack.c.h.b16 %v1950
    %v2046 = vunpack.c.l.b16 %v1951
    %v2047 = vunpack.c.l.b16 %v1952
    %v2048 = vunpack.c.h.b16 %v1952
    %v2049 = vunpack.c.l.b16 %v1953
    %v2050 = vunpack.c.l.b16 %v1954
    %v2051 = vunpack.c.h.b16 %v1954
    %v2052 = vunpack.c.l.b16 %v1955
    %v2053 = vunpack.c.l.b16 %v1956
    %v2054 = vunpack.c.h.b16 %v1956
    %v2055 = vunpack.c.l.b16 %v1957
    %v2056 = vunpack.c.l.b16 %v1958
    %v2057 = vunpack.c.h.b16 %v1958
    %v2058 = vunpack.c.l.b16 %v1959
    %v2059 = vpack.c.b16 %v2014, %v2011
    %v2060 = vpack.c.b16 %v2015, %v2012
    %v2061 = vpack.c.b16 %v2016, %v2013
    %v2062 = vpack.c.b16 %v2020, %v2017
    %v2063 = vpack.c.b16 %v2021, %v2018
    %v2064 = vpack.c.b16 %v2022, %v2019
    %v2065 = vpack.c.b16 %v2026, %v2023
    %v2066 = vpack.c.b16 %v2027, %v2024
    %v2067 = vpack.c.b16 %v2028, %v2025
    %v2068 = vpack.c.b16 %v2032, %v2029
    %v2069 = vpack.c.b16 %v2033, %v2030
    %v2070 = vpack.c.b16 %v2034, %v2031
    %v2071 = vpack.c.b16 %v2038, %v2035
    %v2072 = vpack.c.b16 %v2039, %v2036
    %v2073 = vpack.c.b16 %v2040, %v2037
    %v2074 = vpack.c.b16 %v2044, %v2041
    %v2075 = vpack.c.b16 %v2045, %v2042
    %v2076 = vpack.c.b16 %v2046, %v2043
    %v2077 = vpack.c.b16 %v2050, %v2047
    %v2078 = vpack.c.b16 %v2051, %v2048
    %v2079 = vpack.c.b16 %v2052, %v2049
    %v2080 = vpack.c.b16 %v2056, %v2053
    %v2081 = vpack.c.b16 %v2057, %v2054
    %v2082 = vpack.c.b16 %v2058, %v2055
    %2107 = vmatprep.subr.bf16.mxu0 %v2060
    %2108 = vmatpush1.bf16.msra.mxu0 %v2059
    %2109 = vmatprep.subr.bf16.mxu0 %v2063
    %2110 = vmatpush1.bf16.msra.mxu0 %v2062
    %2111 = vmatprep.subr.bf16.mxu0 %v2066
    %2112 = vmatpush1.bf16.msra.mxu0 %v2065
    %2113 = vmatprep.subr.bf16.mxu0 %v2069
    %2114 = vmatpush1.bf16.msra.mxu0 %v2068
    %2115 = vmatprep.subr.bf16.mxu0 %v2072
    %2116 = vmatpush1.bf16.msra.mxu0 %v2071
    %2117 = vmatprep.subr.bf16.mxu0 %v2075
    %2118 = vmatpush1.bf16.msra.mxu0 %v2074
    %2119 = vmatprep.subr.bf16.mxu0 %v2078
    %2120 = vmatpush1.bf16.msra.mxu0 %v2077
    %2121 = vmatprep.subr.bf16.mxu0 %v2081
    %2122 = vmatpush1.bf16.msra.mxu0 %v2080
    %2123 = vmatprep.subr.bf16.mxu0 0
    %2124 = vmatpush1.bf16.msra.mxu0 0
    %2125 = vmatprep.subr.bf16.mxu0 0
    %2126 = vmatpush1.bf16.msra.mxu0 0
    %2127 = vmatprep.subr.bf16.mxu0 0
    %2128 = vmatpush1.bf16.msra.mxu0 0
    %2129 = vmatprep.subr.bf16.mxu0 0
    %2130 = vmatpush1.bf16.msra.mxu0 0
    %2131 = vmatprep.subr.bf16.mxu0 0
    %2132 = vmatpush1.bf16.msra.mxu0 0
    %2133 = vmatprep.subr.bf16.mxu0 0
    %2134 = vmatpush1.bf16.msra.mxu0 0
    %2135 = vmatprep.subr.bf16.mxu0 0
    %2136 = vmatpush1.bf16.msra.mxu0 0
    %2137 = vmatprep.subr.bf16.mxu0 0
    %2138 = vmatpush1.bf16.msra.mxu0 0
    %2139 = vmatprep.mubr.bf16.mxu0 0
    %2140 = vmatmul.mubr.bf16.gmra.mrb[0].mxu0 %v1960
    %v2141 = vpop.f32.mrb[0].mxu0
    %v2142 = vadd.f32 %v1967, %v2141
    %v2143 = vpop.f32.mrb[0].mxu0
    %v2144 = vadd.f32 %v1971, %v2143
    %v2145 = vpop.f32.mrb[0].mxu0
    %v2146 = vadd.f32 %v1967, %v2145
    %v2147 = vpop.f32.mrb[0].mxu0
    %v2148 = vadd.f32 %v1971, %v2147
    %2149 = vdwg.mxu0
    %2150 = vmatprep.subr.bf16.mxu0 0
    %2151 = vmatpush1.bf16.msra.mxu0 %v2061
    %2152 = vmatprep.subr.bf16.mxu0 0
    %2153 = vmatpush1.bf16.msra.mxu0 %v2064
    %2154 = vmatprep.subr.bf16.mxu0 0
    %2155 = vmatpush1.bf16.msra.mxu0 %v2067
    %2156 = vmatprep.subr.bf16.mxu0 0
    %2157 = vmatpush1.bf16.msra.mxu0 %v2070
    %2158 = vmatprep.subr.bf16.mxu0 0
    %2159 = vmatpush1.bf16.msra.mxu0 %v2073
    %2160 = vmatprep.subr.bf16.mxu0 0
    %2161 = vmatpush1.bf16.msra.mxu0 %v2076
    %2162 = vmatprep.subr.bf16.mxu0 0
    %2163 = vmatpush1.bf16.msra.mxu0 %v2079
    %2164 = vmatprep.subr.bf16.mxu0 0
    %2165 = vmatpush1.bf16.msra.mxu0 %v2082
    %2166 = vmatprep.subr.bf16.mxu0 0
    %2167 = vmatpush1.bf16.msra.mxu0 0
    %2168 = vmatprep.subr.bf16.mxu0 0
    %2169 = vmatpush1.bf16.msra.mxu0 0
    %2170 = vmatprep.subr.bf16.mxu0 0
    %2171 = vmatpush1.bf16.msra.mxu0 0
    %2172 = vmatprep.subr.bf16.mxu0 0
    %2173 = vmatpush1.bf16.msra.mxu0 0
    %2174 = vmatprep.subr.bf16.mxu0 0
    %2175 = vmatpush1.bf16.msra.mxu0 0
    %2176 = vmatprep.subr.bf16.mxu0 0
    %2177 = vmatpush1.bf16.msra.mxu0 0
    %2178 = vmatprep.subr.bf16.mxu0 0
    %2179 = vmatpush1.bf16.msra.mxu0 0
    %2180 = vmatprep.subr.bf16.mxu0 0
    %2181 = vmatpush1.bf16.msra.mxu0 0
    %2182 = vmatprep.mubr.bf16.mxu0 0
    %2183 = vmatmul.mubr.bf16.gmra.mrb[0].mxu0 %v1960
    %v2184 = vpop.f32.mrb[0].mxu0
    %v2185 = vadd.f32 %v1975, %v2184
    %v2186 = vpop.f32.mrb[0].mxu0
    %v2187 = vpop.f32.mrb[0].mxu0
    %v2188 = vadd.f32 %v1975, %v2187
    %v2189 = vpop.f32.mrb[0].mxu0
    %2190 = vdwg.mxu0
    %v2191 = vpack.c.bf16 %v2142, %v2142
    %v2192 = vpack.c.bf16 %v2146, %v2146
    %v2193 = vpack.c.bf16 %v2144, %v2144
    %v2194 = vpack.c.bf16 %v2148, %v2148
    %2195 = vmatprep.subr.bf16.mxu0 0
    %2196 = vmatpush1.bf16.xpose.msra.mxu0 %v2193
    %2197 = vmatprep.subr.bf16.mxu0 0
    %2198 = vmatpush1.bf16.xpose.msra.mxu0 0
    %2199 = vmatprep.subr.bf16.mxu0 0
    %2200 = vmatpush1.bf16.xpose.msra.mxu0 0
    %2201 = vmatprep.subr.bf16.mxu0 0
    %2202 = vmatpush1.bf16.xpose.msra.mxu0 0
    %2203 = vmatprep.subr.bf16.mxu0 0
    %2204 = vmatpush1.bf16.xpose.msra.mxu0 0
    %2205 = vmatprep.subr.bf16.mxu0 0
    %2206 = vmatpush1.bf16.xpose.msra.mxu0 0
    %2207 = vmatprep.subr.bf16.mxu0 0
    %2208 = vmatpush1.bf16.xpose.msra.mxu0 0
    %2209 = vmatprep.subr.bf16.mxu0 0
    %2210 = vmatpush1.bf16.xpose.msra.mxu0 0
    %2211 = vmatprep.subr.bf16.mxu0 0
    %2212 = vmatpush1.bf16.xpose.msra.mxu0 0
    %2213 = vmatprep.subr.bf16.mxu0 0
    %2214 = vmatpush1.bf16.xpose.msra.mxu0 0
    %2215 = vmatprep.subr.bf16.mxu0 0
    %2216 = vmatpush1.bf16.xpose.msra.mxu0 0
    %2217 = vmatprep.subr.bf16.mxu0 0
    %2218 = vmatpush1.bf16.xpose.msra.mxu0 0
    %2219 = vmatprep.subr.bf16.mxu0 0
    %2220 = vmatpush1.bf16.xpose.msra.mxu0 0
    %2221 = vmatprep.subr.bf16.mxu0 0
    %2222 = vmatpush1.bf16.xpose.msra.mxu0 0
    %2223 = vmatprep.subr.bf16.mxu0 0
    %2224 = vmatpush1.bf16.xpose.msra.mxu0 0
    %2225 = vmatprep.subr.bf16.mxu0 0
    %2226 = vmatpush1.bf16.xpose.msra.mxu0 0
    %2227 = vmatprep.mubr.bf16.mxu0 0
    %2228 = vmatmul.mubr.bf16.gmra.mrb[0].mxu0 %v2191
    %v2229 = vpop.f32.mrb[0].mxu0
    %v2230 = vadd.f32 0.0, %v2229
    %v2231 = vpop.f32.mrb[0].mxu0
    %v2232 = vpop.f32.mrb[0].mxu0
    %v2233 = vpop.f32.mrb[0].mxu0
    %2234 = vdwg.mxu0
    %2235 = vmatprep.subr.bf16.mxu0 0
    %2236 = vmatpush1.bf16.xpose.msra.mxu0 %v2194
    %2237 = vmatprep.subr.bf16.mxu0 0
    %2238 = vmatpush1.bf16.xpose.msra.mxu0 0
    %2239 = vmatprep.subr.bf16.mxu0 0
    %2240 = vmatpush1.bf16.xpose.msra.mxu0 0
    %2241 = vmatprep.subr.bf16.mxu0 0
    %2242 = vmatpush1.bf16.xpose.msra.mxu0 0
    %2243 = vmatprep.subr.bf16.mxu0 0
    %2244 = vmatpush1.bf16.xpose.msra.mxu0 0
    %2245 = vmatprep.subr.bf16.mxu0 0
    %2246 = vmatpush1.bf16.xpose.msra.mxu0 0
    %2247 = vmatprep.subr.bf16.mxu0 0
    %2248 = vmatpush1.bf16.xpose.msra.mxu0 0
    %2249 = vmatprep.subr.bf16.mxu0 0
    %2250 = vmatpush1.bf16.xpose.msra.mxu0 0
    %2251 = vmatprep.subr.bf16.mxu0 0
    %2252 = vmatpush1.bf16.xpose.msra.mxu0 0
    %2253 = vmatprep.subr.bf16.mxu0 0
    %2254 = vmatpush1.bf16.xpose.msra.mxu0 0
    %2255 = vmatprep.subr.bf16.mxu0 0
    %2256 = vmatpush1.bf16.xpose.msra.mxu0 0
    %2257 = vmatprep.subr.bf16.mxu0 0
    %2258 = vmatpush1.bf16.xpose.msra.mxu0 0
    %2259 = vmatprep.subr.bf16.mxu0 0
    %2260 = vmatpush1.bf16.xpose.msra.mxu0 0
    %2261 = vmatprep.subr.bf16.mxu0 0
    %2262 = vmatpush1.bf16.xpose.msra.mxu0 0
    %2263 = vmatprep.subr.bf16.mxu0 0
    %2264 = vmatpush1.bf16.xpose.msra.mxu0 0
    %2265 = vmatprep.subr.bf16.mxu0 0
    %2266 = vmatpush1.bf16.xpose.msra.mxu0 0
    %2267 = vmatprep.mubr.bf16.mxu0 0
    %2268 = vmatmul.mubr.bf16.gmra.mrb[0].mxu0 %v2192
    %v2269 = vpop.f32.mrb[0].mxu0
    %v2270 = vadd.f32 0.0, %v2269
    %v2271 = vpop.f32.mrb[0].mxu0
    %v2272 = vpop.f32.mrb[0].mxu0
    %v2273 = vpop.f32.mrb[0].mxu0
    %2274 = vdwg.mxu0
    %v2275 = vmul.f32 %v2230, 0.17677669
    %v2276 = vmul.f32 %v2270, 0.17677669
    %v2277 = vsel %vm720, %v2275, -inf
    %2278 = vmax.xlane.f32.xlu0 %v2277
    %v2279 = vpop.xlane.xlu0 %2278
    %v2280 = vsel %vm720, %v2276, -inf
    %2281 = vmax.xlane.f32.xlu0 %v2280
    %v2282 = vpop.xlane.xlu0 %2281
    %v2283 = vsub.f32 %v2275, %v2279
    %v2284 = vsub.f32 %v2276, %v2282
    %v2285 = vmul.f32 %v2283, 1.442695
    %v2286 = vpow.pop %v2285
    %v2287 = vmul.f32 %v2284, 1.442695
    %v2288 = vpow.pop %v2287
    %v2289 = vsel %vm720, %v2286, 0.0
    %2290 = vadd.xlane.f32.xlu0 %v2289
    %v2291 = vpop.xlane.xlu0 %2290
    %v2292 = vsel %vm720, %v2288, 0.0
    %2293 = vadd.xlane.f32.xlu0 %v2292
    %v2294 = vpop.xlane.xlu0 %2293
    %v2295 = vrcp.pop %v2291
    %v2296 = vrcp.pop %v2294
    %v2297 = vmul.f32 %v2286, %v2295
    %v2298 = vmul.f32 %v2288, %v2296
    %v2299 = vpack.c.bf16 %v2297, %v2297
    %v2300 = vpack.c.bf16 %v2298, %v2298
    %v2301 = vpack.c.bf16 %v2185, %v2185
    %v2302 = vpack.c.bf16 %v2188, %v2188
    %v2304 = vsel %vm720, %v2299, 0
    %v2307 = vsel %vm748, %v2301, 0
    %2309 = vmatprep.subr.bf16.mxu0 0
    %2310 = vmatpush1.bf16.msra.mxu0 %v2307
    %2311 = vmatprep.subr.bf16.mxu0 0
    %2312 = vmatpush1.bf16.msra.mxu0 0
    %2313 = vmatprep.subr.bf16.mxu0 0
    %2314 = vmatpush1.bf16.msra.mxu0 0
    %2315 = vmatprep.subr.bf16.mxu0 0
    %2316 = vmatpush1.bf16.msra.mxu0 0
    %2317 = vmatprep.subr.bf16.mxu0 0
    %2318 = vmatpush1.bf16.msra.mxu0 0
    %2319 = vmatprep.subr.bf16.mxu0 0
    %2320 = vmatpush1.bf16.msra.mxu0 0
    %2321 = vmatprep.subr.bf16.mxu0 0
    %2322 = vmatpush1.bf16.msra.mxu0 0
    %2323 = vmatprep.subr.bf16.mxu0 0
    %2324 = vmatpush1.bf16.msra.mxu0 0
    %2325 = vmatprep.subr.bf16.mxu0 0
    %2326 = vmatpush1.bf16.msra.mxu0 0
    %2327 = vmatprep.subr.bf16.mxu0 0
    %2328 = vmatpush1.bf16.msra.mxu0 0
    %2329 = vmatprep.subr.bf16.mxu0 0
    %2330 = vmatpush1.bf16.msra.mxu0 0
    %2331 = vmatprep.subr.bf16.mxu0 0
    %2332 = vmatpush1.bf16.msra.mxu0 0
    %2333 = vmatprep.subr.bf16.mxu0 0
    %2334 = vmatpush1.bf16.msra.mxu0 0
    %2335 = vmatprep.subr.bf16.mxu0 0
    %2336 = vmatpush1.bf16.msra.mxu0 0
    %2337 = vmatprep.subr.bf16.mxu0 0
    %2338 = vmatpush1.bf16.msra.mxu0 0
    %2339 = vmatprep.subr.bf16.mxu0 0
    %2340 = vmatpush1.bf16.msra.mxu0 0
    %2341 = vmatprep.mubr.bf16.mxu0 0
    %2342 = vmatmul.mubr.bf16.gmra.mrb[0].mxu0 %v2304
    %v2343 = vpop.f32.mrb[0].mxu0
    %v2344 = vadd.f32 0.0, %v2343
    %v2345 = vpop.f32.mrb[0].mxu0
    %v2346 = vpop.f32.mrb[0].mxu0
    %v2347 = vpop.f32.mrb[0].mxu0
    %2348 = vdwg.mxu0
    %v2350 = vsel %vm720, %v2300, 0
    %v2353 = vsel %vm748, %v2302, 0
    %2355 = vmatprep.subr.bf16.mxu0 0
    %2356 = vmatpush1.bf16.msra.mxu0 %v2353
    %2357 = vmatprep.subr.bf16.mxu0 0
    %2358 = vmatpush1.bf16.msra.mxu0 0
    %2359 = vmatprep.subr.bf16.mxu0 0
    %2360 = vmatpush1.bf16.msra.mxu0 0
    %2361 = vmatprep.subr.bf16.mxu0 0
    %2362 = vmatpush1.bf16.msra.mxu0 0
    %2363 = vmatprep.subr.bf16.mxu0 0
    %2364 = vmatpush1.bf16.msra.mxu0 0
    %2365 = vmatprep.subr.bf16.mxu0 0
    %2366 = vmatpush1.bf16.msra.mxu0 0
    %2367 = vmatprep.subr.bf16.mxu0 0
    %2368 = vmatpush1.bf16.msra.mxu0 0
    %2369 = vmatprep.subr.bf16.mxu0 0
    %2370 = vmatpush1.bf16.msra.mxu0 0
    %2371 = vmatprep.subr.bf16.mxu0 0
    %2372 = vmatpush1.bf16.msra.mxu0 0
    %2373 = vmatprep.subr.bf16.mxu0 0
    %2374 = vmatpush1.bf16.msra.mxu0 0
    %2375 = vmatprep.subr.bf16.mxu0 0
    %2376 = vmatpush1.bf16.msra.mxu0 0
    %2377 = vmatprep.subr.bf16.mxu0 0
    %2378 = vmatpush1.bf16.msra.mxu0 0
    %2379 = vmatprep.subr.bf16.mxu0 0
    %2380 = vmatpush1.bf16.msra.mxu0 0
    %2381 = vmatprep.subr.bf16.mxu0 0
    %2382 = vmatpush1.bf16.msra.mxu0 0
    %2383 = vmatprep.subr.bf16.mxu0 0
    %2384 = vmatpush1.bf16.msra.mxu0 0
    %2385 = vmatprep.subr.bf16.mxu0 0
    %2386 = vmatpush1.bf16.msra.mxu0 0
    %2387 = vmatprep.mubr.bf16.mxu0 0
    %2388 = vmatmul.mubr.bf16.gmra.mrb[0].mxu0 %v2350
    %v2389 = vpop.f32.mrb[0].mxu0
    %v2390 = vadd.f32 0.0, %v2389
    %v2391 = vpop.f32.mrb[0].mxu0
    %v2392 = vpop.f32.mrb[0].mxu0
    %v2393 = vpop.f32.mrb[0].mxu0
    %2394 = vdwg.mxu0
    %s2395 = scalar_lea.vmem [#allocation2], 256
    %v2396 = vld [vmem:[%s2395] sm:$0xf]
    %v2397 = vld [vmem:[%s2395 + $0x4] sm:$0xf]
    %v2398 = vld [vmem:[%s2395 + $0x8] sm:$0xf]
    %v2399 = vld [vmem:[%s2395 + $0xc] sm:$0xf]
    %v2400 = vld [vmem:[%s2395 + $0x10] sm:$0xf]
    %v2401 = vld [vmem:[%s2395 + $0x14] sm:$0xf]
    %v2402 = vld [vmem:[%s2395 + $0x18] sm:$0xf]
    %v2403 = vld [vmem:[%s2395 + $0x1c] sm:$0xf]
    %v2404 = vld [vmem:[%s2395 + $0x20] sm:$0xf]
    %v2405 = vld [vmem:[%s2395 + $0x24] sm:$0xf]
    %v2406 = vld [vmem:[%s2395 + $0x28] sm:$0xf]
    %v2407 = vld [vmem:[%s2395 + $0x2c] sm:$0xf]
    %v2408 = vld [vmem:[%s2395 + $0x30] sm:$0xf]
    %v2409 = vld [vmem:[%s2395 + $0x34] sm:$0xf]
    %v2410 = vld [vmem:[%s2395 + $0x38] sm:$0xf]
    %v2411 = vld [vmem:[%s2395 + $0x3c] sm:$0xf]
    %v2412 = vpack.c.bf16 %v2390, %v2344
    %v2413 = vld [vmem:[#allocation7 + $0x1e] ss:$0 sm:$0xff]
    %v2430 = vunpack.c.l.b16 %v2396
    %v2431 = vunpack.c.l.b16 %v2397
    %v2432 = vunpack.c.l.b16 %v2398
    %v2433 = vunpack.c.l.b16 %v2399
    %v2434 = vunpack.c.l.b16 %v2400
    %v2435 = vunpack.c.l.b16 %v2401
    %v2436 = vunpack.c.l.b16 %v2402
    %v2437 = vunpack.c.l.b16 %v2403
    %v2438 = vunpack.c.l.b16 %v2404
    %v2439 = vunpack.c.l.b16 %v2405
    %v2440 = vunpack.c.l.b16 %v2406
    %v2441 = vunpack.c.l.b16 %v2407
    %v2442 = vunpack.c.l.b16 %v2408
    %v2443 = vunpack.c.l.b16 %v2409
    %v2444 = vunpack.c.l.b16 %v2410
    %v2445 = vunpack.c.l.b16 %v2411
    %v2446 = vpack.c.b16 %v2431, %v2430
    %v2447 = vpack.c.b16 %v2433, %v2432
    %v2448 = vpack.c.b16 %v2435, %v2434
    %v2449 = vpack.c.b16 %v2437, %v2436
    %v2450 = vpack.c.b16 %v2439, %v2438
    %v2451 = vpack.c.b16 %v2441, %v2440
    %v2452 = vpack.c.b16 %v2443, %v2442
    %v2453 = vpack.c.b16 %v2445, %v2444
    %2462 = vmatprep.subr.bf16.mxu0 0
    %2463 = vmatpush1.bf16.msra.mxu0 %v2446
    %2464 = vmatprep.subr.bf16.mxu0 0
    %2465 = vmatpush1.bf16.msra.mxu0 %v2447
    %2466 = vmatprep.subr.bf16.mxu0 0
    %2467 = vmatpush1.bf16.msra.mxu0 %v2448
    %2468 = vmatprep.subr.bf16.mxu0 0
    %2469 = vmatpush1.bf16.msra.mxu0 %v2449
    %2470 = vmatprep.subr.bf16.mxu0 0
    %2471 = vmatpush1.bf16.msra.mxu0 %v2450
    %2472 = vmatprep.subr.bf16.mxu0 0
    %2473 = vmatpush1.bf16.msra.mxu0 %v2451
    %2474 = vmatprep.subr.bf16.mxu0 0
    %2475 = vmatpush1.bf16.msra.mxu0 %v2452
    %2476 = vmatprep.subr.bf16.mxu0 0
    %2477 = vmatpush1.bf16.msra.mxu0 %v2453
    %2478 = vmatprep.subr.bf16.mxu0 0
    %2479 = vmatpush1.bf16.msra.mxu0 0
    %2480 = vmatprep.subr.bf16.mxu0 0
    %2481 = vmatpush1.bf16.msra.mxu0 0
    %2482 = vmatprep.subr.bf16.mxu0 0
    %2483 = vmatpush1.bf16.msra.mxu0 0
    %2484 = vmatprep.subr.bf16.mxu0 0
    %2485 = vmatpush1.bf16.msra.mxu0 0
    %2486 = vmatprep.subr.bf16.mxu0 0
    %2487 = vmatpush1.bf16.msra.mxu0 0
    %2488 = vmatprep.subr.bf16.mxu0 0
    %2489 = vmatpush1.bf16.msra.mxu0 0
    %2490 = vmatprep.subr.bf16.mxu0 0
    %2491 = vmatpush1.bf16.msra.mxu0 0
    %2492 = vmatprep.subr.bf16.mxu0 0
    %2493 = vmatpush1.bf16.msra.mxu0 0
    %2494 = vmatprep.mubr.bf16.mxu0 0
    %2495 = vmatmul.mubr.bf16.gmra.mrb[0].mxu0 %v2412
    %v2496 = vpop.f32.mrb[0].mxu0
    %v2497 = vadd.f32 %v2413, %v2496
    %v2498 = vpop.f32.mrb[0].mxu0
    %v2499 = vpop.f32.mrb[0].mxu0
    %v2500 = vadd.f32 %v2413, %v2499
    %v2501 = vpop.f32.mrb[0].mxu0
    %2502 = vdwg.mxu0
    %v2503 = vadd.f32 %v1925, %v2497
    %v2504 = vadd.f32 %v1926, %v2500
    %2505 = vadd.xlane.f32.xlu0 %v2503
    %v2506 = vpop.xlane.xlu0 %2505
    %2507 = vadd.xlane.f32.xlu0 %v2504
    %v2508 = vpop.xlane.xlu0 %2507
    %v2509 = vmul.f32 %v2506, 0.03125
    %v2510 = vmul.f32 %v2508, 0.03125
    %v2511 = vmul.f32 %v2503, %v2503
    %v2512 = vmul.f32 %v2504, %v2504
    %2513 = vadd.xlane.f32.xlu0 %v2511
    %v2514 = vpop.xlane.xlu0 %2513
    %2515 = vadd.xlane.f32.xlu0 %v2512
    %v2516 = vpop.xlane.xlu0 %2515
    %v2517 = vmul.f32 %v2514, 0.03125
    %v2518 = vmul.f32 %v2516, 0.03125
    %v2519 = vmul.f32 %v2509, %v2509
    %v2520 = vmul.f32 %v2510, %v2510
    %v2521 = vsub.f32 %v2517, %v2519
    %v2522 = vsub.f32 %v2518, %v2520
    %v2523 = vsub.f32 %v2503, %v2509
    %v2524 = vsub.f32 %v2504, %v2510
    %v2525 = vadd.f32 %v2521, 1e-05
    %v2526 = vadd.f32 %v2522, 1e-05
    %v2527 = vrsqrt.pop %v2525
    %v2528 = vrsqrt.pop %v2526
    %v2529 = vmul.f32 %v2523, %v2527
    %v2530 = vmul.f32 %v2524, %v2528
    %v2531 = vld [vmem:[#allocation7 + $0x1f] ss:$0 sm:$0xff]
    %v2532 = vmul.f32 %v2529, %v2531
    %v2533 = vmul.f32 %v2530, %v2531
    %v2534 = vld [vmem:[#allocation7 + $0x30] ss:$0 sm:$0xff]
    %v2535 = vadd.f32 %v2532, %v2534
    %v2536 = vadd.f32 %v2533, %v2534
    %s2537 = scalar_lea.vmem [#allocation4], 960
    %v2538 = vld [vmem:[%s2537] sm:$0xff]
    %v2539 = vld [vmem:[%s2537 + $0xc] sm:$0xff]
    %v2540 = vld [vmem:[%s2537 + $0x18] sm:$0xff]
    %v2541 = vld [vmem:[%s2537 + $0x24] sm:$0xff]
    %v2542 = vld [vmem:[%s2537 + $0x30] sm:$0xff]
    %v2543 = vld [vmem:[%s2537 + $0x3c] sm:$0xff]
    %v2544 = vld [vmem:[%s2537 + $0x48] sm:$0xff]
    %v2545 = vld [vmem:[%s2537 + $0x54] sm:$0xff]
    %v2546 = vld [vmem:[%s2537 + $0x60] sm:$0xff]
    %v2547 = vld [vmem:[%s2537 + $0x6c] sm:$0xff]
    %v2548 = vld [vmem:[%s2537 + $0x78] sm:$0xff]
    %v2549 = vld [vmem:[%s2537 + $0x84] sm:$0xff]
    %v2550 = vld [vmem:[%s2537 + $0x90] sm:$0xff]
    %v2551 = vld [vmem:[%s2537 + $0x9c] sm:$0xff]
    %v2552 = vld [vmem:[%s2537 + $0xa8] sm:$0xff]
    %v2553 = vld [vmem:[%s2537 + $0xb4] sm:$0xff]
    %v2554 = vpack.c.bf16 %v2536, %v2535
    %s2555 = scalar_lea.vmem [#allocation7], 49
    %v2556 = vld [vmem:[%s2555] ss:$8 sm:$0x3]
    %v2558 = vlaneseq
    %v2559 = vshrl.u32 %v2558, 7
    %v2560 = vsub.s32 0, %v2559
    %v2561 = vrot.slane %v2556, %v2560
    %v2562 = vlaneseq
    %v2563 = vshrl.u32 %v2562, 7
    %v2564 = vsub.s32 1, %v2563
    %v2565 = vrot.slane %v2556, %v2564
    %v2584 = vunpack.c.l.b16 %v2538
    %v2585 = vunpack.c.h.b16 %v2538
    %v2586 = vunpack.c.l.b16 %v2539
    %v2587 = vunpack.c.h.b16 %v2539
    %v2588 = vunpack.c.l.b16 %v2540
    %v2589 = vunpack.c.h.b16 %v2540
    %v2590 = vunpack.c.l.b16 %v2541
    %v2591 = vunpack.c.h.b16 %v2541
    %v2592 = vunpack.c.l.b16 %v2542
    %v2593 = vunpack.c.h.b16 %v2542
    %v2594 = vunpack.c.l.b16 %v2543
    %v2595 = vunpack.c.h.b16 %v2543
    %v2596 = vunpack.c.l.b16 %v2544
    %v2597 = vunpack.c.h.b16 %v2544
    %v2598 = vunpack.c.l.b16 %v2545
    %v2599 = vunpack.c.h.b16 %v2545
    %v2600 = vunpack.c.l.b16 %v2546
    %v2601 = vunpack.c.h.b16 %v2546
    %v2602 = vunpack.c.l.b16 %v2547
    %v2603 = vunpack.c.h.b16 %v2547
    %v2604 = vunpack.c.l.b16 %v2548
    %v2605 = vunpack.c.h.b16 %v2548
    %v2606 = vunpack.c.l.b16 %v2549
    %v2607 = vunpack.c.h.b16 %v2549
    %v2608 = vunpack.c.l.b16 %v2550
    %v2609 = vunpack.c.h.b16 %v2550
    %v2610 = vunpack.c.l.b16 %v2551
    %v2611 = vunpack.c.h.b16 %v2551
    %v2612 = vunpack.c.l.b16 %v2552
    %v2613 = vunpack.c.h.b16 %v2552
    %v2614 = vunpack.c.l.b16 %v2553
    %v2615 = vunpack.c.h.b16 %v2553
    %v2616 = vpack.c.b16 %v2586, %v2584
    %v2617 = vpack.c.b16 %v2587, %v2585
    %v2618 = vpack.c.b16 %v2590, %v2588
    %v2619 = vpack.c.b16 %v2591, %v2589
    %v2620 = vpack.c.b16 %v2594, %v2592
    %v2621 = vpack.c.b16 %v2595, %v2593
    %v2622 = vpack.c.b16 %v2598, %v2596
    %v2623 = vpack.c.b16 %v2599, %v2597
    %v2624 = vpack.c.b16 %v2602, %v2600
    %v2625 = vpack.c.b16 %v2603, %v2601
    %v2626 = vpack.c.b16 %v2606, %v2604
    %v2627 = vpack.c.b16 %v2607, %v2605
    %v2628 = vpack.c.b16 %v2610, %v2608
    %v2629 = vpack.c.b16 %v2611, %v2609
    %v2630 = vpack.c.b16 %v2614, %v2612
    %v2631 = vpack.c.b16 %v2615, %v2613
    %2648 = vmatprep.subr.bf16.mxu0 %v2617
    %2649 = vmatpush1.bf16.msra.mxu0 %v2616
    %2650 = vmatprep.subr.bf16.mxu0 %v2619
    %2651 = vmatpush1.bf16.msra.mxu0 %v2618
    %2652 = vmatprep.subr.bf16.mxu0 %v2621
    %2653 = vmatpush1.bf16.msra.mxu0 %v2620
    %2654 = vmatprep.subr.bf16.mxu0 %v2623
    %2655 = vmatpush1.bf16.msra.mxu0 %v2622
    %2656 = vmatprep.subr.bf16.mxu0 %v2625
    %2657 = vmatpush1.bf16.msra.mxu0 %v2624
    %2658 = vmatprep.subr.bf16.mxu0 %v2627
    %2659 = vmatpush1.bf16.msra.mxu0 %v2626
    %2660 = vmatprep.subr.bf16.mxu0 %v2629
    %2661 = vmatpush1.bf16.msra.mxu0 %v2628
    %2662 = vmatprep.subr.bf16.mxu0 %v2631
    %2663 = vmatpush1.bf16.msra.mxu0 %v2630
    %2664 = vmatprep.subr.bf16.mxu0 0
    %2665 = vmatpush1.bf16.msra.mxu0 0
    %2666 = vmatprep.subr.bf16.mxu0 0
    %2667 = vmatpush1.bf16.msra.mxu0 0
    %2668 = vmatprep.subr.bf16.mxu0 0
    %2669 = vmatpush1.bf16.msra.mxu0 0
    %2670 = vmatprep.subr.bf16.mxu0 0
    %2671 = vmatpush1.bf16.msra.mxu0 0
    %2672 = vmatprep.subr.bf16.mxu0 0
    %2673 = vmatpush1.bf16.msra.mxu0 0
    %2674 = vmatprep.subr.bf16.mxu0 0
    %2675 = vmatpush1.bf16.msra.mxu0 0
    %2676 = vmatprep.subr.bf16.mxu0 0
    %2677 = vmatpush1.bf16.msra.mxu0 0
    %2678 = vmatprep.subr.bf16.mxu0 0
    %2679 = vmatpush1.bf16.msra.mxu0 0
    %2680 = vmatprep.mubr.bf16.mxu0 0
    %2681 = vmatmul.mubr.bf16.gmra.mrb[0].mxu0 %v2554
    %v2682 = vpop.f32.mrb[0].mxu0
    %v2683 = vadd.f32 %v2561, %v2682
    %v2684 = vpop.f32.mrb[0].mxu0
    %v2685 = vadd.f32 %v2565, %v2684
    %v2686 = vpop.f32.mrb[0].mxu0
    %v2687 = vadd.f32 %v2561, %v2686
    %v2688 = vpop.f32.mrb[0].mxu0
    %v2689 = vadd.f32 %v2565, %v2688
    %2690 = vdwg.mxu0
    %v2691 = vmax.f32 %v2683, 0.0
    %v2692 = vmax.f32 %v2685, 0.0
    %v2693 = vmax.f32 %v2687, 0.0
    %v2694 = vmax.f32 %v2689, 0.0
    %s2695 = scalar_lea.vmem [#allocation6], 128
    %v2696 = vld [vmem:[%s2695] sm:$0xf]
    %v2697 = vld [vmem:[%s2695 + $0x4] sm:$0xf]
    %v2698 = vld [vmem:[%s2695 + $0x8] sm:$0xf]
    %v2699 = vld [vmem:[%s2695 + $0xc] sm:$0xf]
    %v2700 = vld [vmem:[%s2695 + $0x10] sm:$0xf]
    %v2701 = vld [vmem:[%s2695 + $0x14] sm:$0xf]
    %v2702 = vld [vmem:[%s2695 + $0x18] sm:$0xf]
    %v2703 = vld [vmem:[%s2695 + $0x1c] sm:$0xf]
    %v2704 = vld [vmem:[%s2695 + $0x20] sm:$0xf]
    %v2705 = vld [vmem:[%s2695 + $0x24] sm:$0xf]
    %v2706 = vld [vmem:[%s2695 + $0x28] sm:$0xf]
    %v2707 = vld [vmem:[%s2695 + $0x2c] sm:$0xf]
    %v2708 = vld [vmem:[%s2695 + $0x30] sm:$0xf]
    %v2709 = vld [vmem:[%s2695 + $0x34] sm:$0xf]
    %v2710 = vld [vmem:[%s2695 + $0x38] sm:$0xf]
    %v2711 = vld [vmem:[%s2695 + $0x3c] sm:$0xf]
    %v2712 = vld [vmem:[%s2695 + $0x40] sm:$0xf]
    %v2713 = vld [vmem:[%s2695 + $0x44] sm:$0xf]
    %v2714 = vld [vmem:[%s2695 + $0x48] sm:$0xf]
    %v2715 = vld [vmem:[%s2695 + $0x4c] sm:$0xf]
    %v2716 = vld [vmem:[%s2695 + $0x50] sm:$0xf]
    %v2717 = vld [vmem:[%s2695 + $0x54] sm:$0xf]
    %v2718 = vld [vmem:[%s2695 + $0x58] sm:$0xf]
    %v2719 = vld [vmem:[%s2695 + $0x5c] sm:$0xf]
    %v2720 = vld [vmem:[%s2695 + $0x60] sm:$0xf]
    %v2721 = vld [vmem:[%s2695 + $0x64] sm:$0xf]
    %v2722 = vld [vmem:[%s2695 + $0x68] sm:$0xf]
    %v2723 = vld [vmem:[%s2695 + $0x6c] sm:$0xf]
    %v2724 = vld [vmem:[%s2695 + $0x70] sm:$0xf]
    %v2725 = vld [vmem:[%s2695 + $0x74] sm:$0xf]
    %v2726 = vld [vmem:[%s2695 + $0x78] sm:$0xf]
    %v2727 = vld [vmem:[%s2695 + $0x7c] sm:$0xf]
    %v2728 = vpack.c.bf16 %v2693, %v2691
    %v2729 = vpack.c.bf16 %v2694, %v2692
    %v2730 = vld [vmem:[#allocation7 + $0x32] ss:$0 sm:$0xff]
    %v2763 = vunpack.c.l.b16 %v2696
    %v2764 = vunpack.c.l.b16 %v2697
    %v2765 = vunpack.c.l.b16 %v2698
    %v2766 = vunpack.c.l.b16 %v2699
    %v2767 = vunpack.c.l.b16 %v2700
    %v2768 = vunpack.c.l.b16 %v2701
    %v2769 = vunpack.c.l.b16 %v2702
    %v2770 = vunpack.c.l.b16 %v2703
    %v2771 = vunpack.c.l.b16 %v2704
    %v2772 = vunpack.c.l.b16 %v2705
    %v2773 = vunpack.c.l.b16 %v2706
    %v2774 = vunpack.c.l.b16 %v2707
    %v2775 = vunpack.c.l.b16 %v2708
    %v2776 = vunpack.c.l.b16 %v2709
    %v2777 = vunpack.c.l.b16 %v2710
    %v2778 = vunpack.c.l.b16 %v2711
    %v2779 = vunpack.c.l.b16 %v2712
    %v2780 = vunpack.c.l.b16 %v2713
    %v2781 = vunpack.c.l.b16 %v2714
    %v2782 = vunpack.c.l.b16 %v2715
    %v2783 = vunpack.c.l.b16 %v2716
    %v2784 = vunpack.c.l.b16 %v2717
    %v2785 = vunpack.c.l.b16 %v2718
    %v2786 = vunpack.c.l.b16 %v2719
    %v2787 = vunpack.c.l.b16 %v2720
    %v2788 = vunpack.c.l.b16 %v2721
    %v2789 = vunpack.c.l.b16 %v2722
    %v2790 = vunpack.c.l.b16 %v2723
    %v2791 = vunpack.c.l.b16 %v2724
    %v2792 = vunpack.c.l.b16 %v2725
    %v2793 = vunpack.c.l.b16 %v2726
    %v2794 = vunpack.c.l.b16 %v2727
    %v2795 = vpack.c.b16 %v2764, %v2763
    %v2796 = vpack.c.b16 %v2766, %v2765
    %v2797 = vpack.c.b16 %v2768, %v2767
    %v2798 = vpack.c.b16 %v2770, %v2769
    %v2799 = vpack.c.b16 %v2772, %v2771
    %v2800 = vpack.c.b16 %v2774, %v2773
    %v2801 = vpack.c.b16 %v2776, %v2775
    %v2802 = vpack.c.b16 %v2778, %v2777
    %v2803 = vpack.c.b16 %v2780, %v2779
    %v2804 = vpack.c.b16 %v2782, %v2781
    %v2805 = vpack.c.b16 %v2784, %v2783
    %v2806 = vpack.c.b16 %v2786, %v2785
    %v2807 = vpack.c.b16 %v2788, %v2787
    %v2808 = vpack.c.b16 %v2790, %v2789
    %v2809 = vpack.c.b16 %v2792, %v2791
    %v2810 = vpack.c.b16 %v2794, %v2793
    %2827 = vmatprep.subr.bf16.mxu0 0
    %2828 = vmatpush1.bf16.msra.mxu0 %v2795
    %2829 = vmatprep.subr.bf16.mxu0 0
    %2830 = vmatpush1.bf16.msra.mxu0 %v2796
    %2831 = vmatprep.subr.bf16.mxu0 0
    %2832 = vmatpush1.bf16.msra.mxu0 %v2797
    %2833 = vmatprep.subr.bf16.mxu0 0
    %2834 = vmatpush1.bf16.msra.mxu0 %v2798
    %2835 = vmatprep.subr.bf16.mxu0 0
    %2836 = vmatpush1.bf16.msra.mxu0 %v2799
    %2837 = vmatprep.subr.bf16.mxu0 0
    %2838 = vmatpush1.bf16.msra.mxu0 %v2800
    %2839 = vmatprep.subr.bf16.mxu0 0
    %2840 = vmatpush1.bf16.msra.mxu0 %v2801
    %2841 = vmatprep.subr.bf16.mxu0 0
    %2842 = vmatpush1.bf16.msra.mxu0 %v2802
    %2843 = vmatprep.subr.bf16.mxu0 0
    %2844 = vmatpush1.bf16.msra.mxu0 %v2803
    %2845 = vmatprep.subr.bf16.mxu0 0
    %2846 = vmatpush1.bf16.msra.mxu0 %v2804
    %2847 = vmatprep.subr.bf16.mxu0 0
    %2848 = vmatpush1.bf16.msra.mxu0 %v2805
    %2849 = vmatprep.subr.bf16.mxu0 0
    %2850 = vmatpush1.bf16.msra.mxu0 %v2806
    %2851 = vmatprep.subr.bf16.mxu0 0
    %2852 = vmatpush1.bf16.msra.mxu0 %v2807
    %2853 = vmatprep.subr.bf16.mxu0 0
    %2854 = vmatpush1.bf16.msra.mxu0 %v2808
    %2855 = vmatprep.subr.bf16.mxu0 0
    %2856 = vmatpush1.bf16.msra.mxu0 %v2809
    %2857 = vmatprep.subr.bf16.mxu0 0
    %2858 = vmatpush1.bf16.msra.mxu0 %v2810
    %2859 = vmatprep.mubr.bf16.mxu0 %v2729
    %2860 = vmatmul.mubr.bf16.gmra.mrb[0].mxu0 %v2728
    %v2861 = vpop.f32.mrb[0].mxu0
    %v2862 = vadd.f32 %v2730, %v2861
    %v2863 = vpop.f32.mrb[0].mxu0
    %v2864 = vpop.f32.mrb[0].mxu0
    %v2865 = vadd.f32 %v2730, %v2864
    %v2866 = vpop.f32.mrb[0].mxu0
    %2867 = vdwg.mxu0
    %v2868 = vadd.f32 %v2535, %v2862
    %v2869 = vadd.f32 %v2536, %v2865
    %2870 = vadd.xlane.f32.xlu0 %v2868
    %v2871 = vpop.xlane.xlu0 %2870
    %2872 = vadd.xlane.f32.xlu0 %v2869
    %v2873 = vpop.xlane.xlu0 %2872
    %v2874 = vmul.f32 %v2871, 0.03125
    %v2875 = vmul.f32 %v2873, 0.03125
    %v2876 = vmul.f32 %v2868, %v2868
    %v2877 = vmul.f32 %v2869, %v2869
    %2878 = vadd.xlane.f32.xlu0 %v2876
    %v2879 = vpop.xlane.xlu0 %2878
    %2880 = vadd.xlane.f32.xlu0 %v2877
    %v2881 = vpop.xlane.xlu0 %2880
    %v2882 = vmul.f32 %v2879, 0.03125
    %v2883 = vmul.f32 %v2881, 0.03125
    %v2884 = vmul.f32 %v2874, %v2874
    %v2885 = vmul.f32 %v2875, %v2875
    %v2886 = vsub.f32 %v2882, %v2884
    %v2887 = vsub.f32 %v2883, %v2885
    %v2888 = vsub.f32 %v2868, %v2874
    %v2889 = vsub.f32 %v2869, %v2875
    %v2890 = vadd.f32 %v2886, 1e-05
    %v2891 = vadd.f32 %v2887, 1e-05
    %v2892 = vrsqrt.pop %v2890
    %v2893 = vrsqrt.pop %v2891
    %v2894 = vmul.f32 %v2888, %v2892
    %v2895 = vmul.f32 %v2889, %v2893
    %v2896 = vld [vmem:[#allocation7 + $0x33] ss:$0 sm:$0xff]
    %v2897 = vmul.f32 %v2894, %v2896
    %v2898 = vmul.f32 %v2895, %v2896
    %v2899 = vld [vmem:[#allocation7 + $0x34] ss:$0 sm:$0xff]
    %v2900 = vadd.f32 %v2897, %v2899
    %v2901 = vadd.f32 %v2898, %v2899
    %s2902 = scalar_lea.vmem [#allocation4], 1152
    %v2903 = vld [vmem:[%s2902] sm:$0xff]
    %v2904 = vld [vmem:[%s2902 + $0x8] sm:$0xf]
    %v2905 = vld [vmem:[%s2902 + $0xc] sm:$0xff]
    %v2906 = vld [vmem:[%s2902 + $0x14] sm:$0xf]
    %v2907 = vld [vmem:[%s2902 + $0x18] sm:$0xff]
    %v2908 = vld [vmem:[%s2902 + $0x20] sm:$0xf]
    %v2909 = vld [vmem:[%s2902 + $0x24] sm:$0xff]
    %v2910 = vld [vmem:[%s2902 + $0x2c] sm:$0xf]
    %v2911 = vld [vmem:[%s2902 + $0x30] sm:$0xff]
    %v2912 = vld [vmem:[%s2902 + $0x38] sm:$0xf]
    %v2913 = vld [vmem:[%s2902 + $0x3c] sm:$0xff]
    %v2914 = vld [vmem:[%s2902 + $0x44] sm:$0xf]
    %v2915 = vld [vmem:[%s2902 + $0x48] sm:$0xff]
    %v2916 = vld [vmem:[%s2902 + $0x50] sm:$0xf]
    %v2917 = vld [vmem:[%s2902 + $0x54] sm:$0xff]
    %v2918 = vld [vmem:[%s2902 + $0x5c] sm:$0xf]
    %v2919 = vld [vmem:[%s2902 + $0x60] sm:$0xff]
    %v2920 = vld [vmem:[%s2902 + $0x68] sm:$0xf]
    %v2921 = vld [vmem:[%s2902 + $0x6c] sm:$0xff]
    %v2922 = vld [vmem:[%s2902 + $0x74] sm:$0xf]
    %v2923 = vld [vmem:[%s2902 + $0x78] sm:$0xff]
    %v2924 = vld [vmem:[%s2902 + $0x80] sm:$0xf]
    %v2925 = vld [vmem:[%s2902 + $0x84] sm:$0xff]
    %v2926 = vld [vmem:[%s2902 + $0x8c] sm:$0xf]
    %v2927 = vld [vmem:[%s2902 + $0x90] sm:$0xff]
    %v2928 = vld [vmem:[%s2902 + $0x98] sm:$0xf]
    %v2929 = vld [vmem:[%s2902 + $0x9c] sm:$0xff]
    %v2930 = vld [vmem:[%s2902 + $0xa4] sm:$0xf]
    %v2931 = vld [vmem:[%s2902 + $0xa8] sm:$0xff]
    %v2932 = vld [vmem:[%s2902 + $0xb0] sm:$0xf]
    %v2933 = vld [vmem:[%s2902 + $0xb4] sm:$0xff]
    %v2934 = vld [vmem:[%s2902 + $0xbc] sm:$0xf]
    %v2935 = vpack.c.bf16 %v2900, %v2900
    %v2936 = vpack.c.bf16 %v2901, %v2901
    %s2937 = scalar_lea.vmem [#allocation7], 53
    %v2938 = vld [vmem:[%s2937] ss:$8 sm:$0x7]
    %v2940 = vlaneseq
    %v2941 = vshrl.u32 %v2940, 7
    %v2942 = vsub.s32 0, %v2941
    %v2943 = vrot.slane %v2938, %v2942
    %v2944 = vlaneseq
    %v2945 = vshrl.u32 %v2944, 7
    %v2946 = vsub.s32 1, %v2945
    %v2947 = vrot.slane %v2938, %v2946
    %v2948 = vlaneseq
    %v2949 = vshrl.u32 %v2948, 7
    %v2950 = vsub.s32 2, %v2949
    %v2951 = vrot.slane %v2938, %v2950
    %v2957 = vunpack.c.l.b16 %v2935
    %v2958 = vunpack.c.l.b16 %v2936
    %v2959 = vrot.slane %v2957, 7
    %v2960 = vrot.slane %v2958, 6
    %vm2961 = vcmask 1041409
    %v2962 = vsel %vm2961, %v2960, %v2959
    %v2963 = vpack.c.b16 %v2962, %v2962
    %v2997 = vunpack.c.l.b16 %v2903
    %v2998 = vunpack.c.h.b16 %v2903
    %v2999 = vunpack.c.l.b16 %v2904
    %v3000 = vunpack.c.l.b16 %v2905
    %v3001 = vunpack.c.h.b16 %v2905
    %v3002 = vunpack.c.l.b16 %v2906
    %v3003 = vunpack.c.l.b16 %v2907
    %v3004 = vunpack.c.h.b16 %v2907
    %v3005 = vunpack.c.l.b16 %v2908
    %v3006 = vunpack.c.l.b16 %v2909
    %v3007 = vunpack.c.h.b16 %v2909
    %v3008 = vunpack.c.l.b16 %v2910
    %v3009 = vunpack.c.l.b16 %v2911
    %v3010 = vunpack.c.h.b16 %v2911
    %v3011 = vunpack.c.l.b16 %v2912
    %v3012 = vunpack.c.l.b16 %v2913
    %v3013 = vunpack.c.h.b16 %v2913
    %v3014 = vunpack.c.l.b16 %v2914
    %v3015 = vunpack.c.l.b16 %v2915
    %v3016 = vunpack.c.h.b16 %v2915
    %v3017 = vunpack.c.l.b16 %v2916
    %v3018 = vunpack.c.l.b16 %v2917
    %v3019 = vunpack.c.h.b16 %v2917
    %v3020 = vunpack.c.l.b16 %v2918
    %v3021 = vunpack.c.l.b16 %v2919
    %v3022 = vunpack.c.h.b16 %v2919
    %v3023 = vunpack.c.l.b16 %v2920
    %v3024 = vunpack.c.l.b16 %v2921
    %v3025 = vunpack.c.h.b16 %v2921
    %v3026 = vunpack.c.l.b16 %v2922
    %v3027 = vunpack.c.l.b16 %v2923
    %v3028 = vunpack.c.h.b16 %v2923
    %v3029 = vunpack.c.l.b16 %v2924
    %v3030 = vunpack.c.l.b16 %v2925
    %v3031 = vunpack.c.h.b16 %v2925
    %v3032 = vunpack.c.l.b16 %v2926
    %v3033 = vunpack.c.l.b16 %v2927
    %v3034 = vunpack.c.h.b16 %v2927
    %v3035 = vunpack.c.l.b16 %v2928
    %v3036 = vunpack.c.l.b16 %v2929
    %v3037 = vunpack.c.h.b16 %v2929
    %v3038 = vunpack.c.l.b16 %v2930
    %v3039 = vunpack.c.l.b16 %v2931
    %v3040 = vunpack.c.h.b16 %v2931
    %v3041 = vunpack.c.l.b16 %v2932
    %v3042 = vunpack.c.l.b16 %v2933
    %v3043 = vunpack.c.h.b16 %v2933
    %v3044 = vunpack.c.l.b16 %v2934
    %v3045 = vpack.c.b16 %v3000, %v2997
    %v3046 = vpack.c.b16 %v3001, %v2998
    %v3047 = vpack.c.b16 %v3002, %v2999
    %v3048 = vpack.c.b16 %v3006, %v3003
    %v3049 = vpack.c.b16 %v3007, %v3004
    %v3050 = vpack.c.b16 %v3008, %v3005
    %v3051 = vpack.c.b16 %v3012, %v3009
    %v3052 = vpack.c.b16 %v3013, %v3010
    %v3053 = vpack.c.b16 %v3014, %v3011
    %v3054 = vpack.c.b16 %v3018, %v3015
    %v3055 = vpack.c.b16 %v3019, %v3016
    %v3056 = vpack.c.b16 %v3020, %v3017
    %v3057 = vpack.c.b16 %v3024, %v3021
    %v3058 = vpack.c.b16 %v3025, %v3022
    %v3059 = vpack.c.b16 %v3026, %v3023
    %v3060 = vpack.c.b16 %v3030, %v3027
    %v3061 = vpack.c.b16 %v3031, %v3028
    %v3062 = vpack.c.b16 %v3032, %v3029
    %v3063 = vpack.c.b16 %v3036, %v3033
    %v3064 = vpack.c.b16 %v3037, %v3034
    %v3065 = vpack.c.b16 %v3038, %v3035
    %v3066 = vpack.c.b16 %v3042, %v3039
    %v3067 = vpack.c.b16 %v3043, %v3040
    %v3068 = vpack.c.b16 %v3044, %v3041
    %3093 = vmatprep.subr.bf16.mxu0 %v3046
    %3094 = vmatpush1.bf16.msra.mxu0 %v3045
    %3095 = vmatprep.subr.bf16.mxu0 %v3049
    %3096 = vmatpush1.bf16.msra.mxu0 %v3048
    %3097 = vmatprep.subr.bf16.mxu0 %v3052
    %3098 = vmatpush1.bf16.msra.mxu0 %v3051
    %3099 = vmatprep.subr.bf16.mxu0 %v3055
    %3100 = vmatpush1.bf16.msra.mxu0 %v3054
    %3101 = vmatprep.subr.bf16.mxu0 %v3058
    %3102 = vmatpush1.bf16.msra.mxu0 %v3057
    %3103 = vmatprep.subr.bf16.mxu0 %v3061
    %3104 = vmatpush1.bf16.msra.mxu0 %v3060
    %3105 = vmatprep.subr.bf16.mxu0 %v3064
    %3106 = vmatpush1.bf16.msra.mxu0 %v3063
    %3107 = vmatprep.subr.bf16.mxu0 %v3067
    %3108 = vmatpush1.bf16.msra.mxu0 %v3066
    %3109 = vmatprep.subr.bf16.mxu0 0
    %3110 = vmatpush1.bf16.msra.mxu0 0
    %3111 = vmatprep.subr.bf16.mxu0 0
    %3112 = vmatpush1.bf16.msra.mxu0 0
    %3113 = vmatprep.subr.bf16.mxu0 0
    %3114 = vmatpush1.bf16.msra.mxu0 0
    %3115 = vmatprep.subr.bf16.mxu0 0
    %3116 = vmatpush1.bf16.msra.mxu0 0
    %3117 = vmatprep.subr.bf16.mxu0 0
    %3118 = vmatpush1.bf16.msra.mxu0 0
    %3119 = vmatprep.subr.bf16.mxu0 0
    %3120 = vmatpush1.bf16.msra.mxu0 0
    %3121 = vmatprep.subr.bf16.mxu0 0
    %3122 = vmatpush1.bf16.msra.mxu0 0
    %3123 = vmatprep.subr.bf16.mxu0 0
    %3124 = vmatpush1.bf16.msra.mxu0 0
    %3125 = vmatprep.mubr.bf16.mxu0 0
    %3126 = vmatmul.mubr.bf16.gmra.mrb[0].mxu0 %v2963
    %v3127 = vpop.f32.mrb[0].mxu0
    %v3128 = vadd.f32 %v2943, %v3127
    %v3129 = vpop.f32.mrb[0].mxu0
    %v3130 = vadd.f32 %v2947, %v3129
    %v3131 = vpop.f32.mrb[0].mxu0
    %v3132 = vpop.f32.mrb[0].mxu0
    %3133 = vdwg.mxu0
    %3134 = vmatprep.subr.bf16.mxu0 0
    %3135 = vmatpush1.bf16.msra.mxu0 %v3047
    %3136 = vmatprep.subr.bf16.mxu0 0
    %3137 = vmatpush1.bf16.msra.mxu0 %v3050
    %3138 = vmatprep.subr.bf16.mxu0 0
    %3139 = vmatpush1.bf16.msra.mxu0 %v3053
    %3140 = vmatprep.subr.bf16.mxu0 0
    %3141 = vmatpush1.bf16.msra.mxu0 %v3056
    %3142 = vmatprep.subr.bf16.mxu0 0
    %3143 = vmatpush1.bf16.msra.mxu0 %v3059
    %3144 = vmatprep.subr.bf16.mxu0 0
    %3145 = vmatpush1.bf16.msra.mxu0 %v3062
    %3146 = vmatprep.subr.bf16.mxu0 0
    %3147 = vmatpush1.bf16.msra.mxu0 %v3065
    %3148 = vmatprep.subr.bf16.mxu0 0
    %3149 = vmatpush1.bf16.msra.mxu0 %v3068
    %3150 = vmatprep.subr.bf16.mxu0 0
    %3151 = vmatpush1.bf16.msra.mxu0 0
    %3152 = vmatprep.subr.bf16.mxu0 0
    %3153 = vmatpush1.bf16.msra.mxu0 0
    %3154 = vmatprep.subr.bf16.mxu0 0
    %3155 = vmatpush1.bf16.msra.mxu0 0
    %3156 = vmatprep.subr.bf16.mxu0 0
    %3157 = vmatpush1.bf16.msra.mxu0 0
    %3158 = vmatprep.subr.bf16.mxu0 0
    %3159 = vmatpush1.bf16.msra.mxu0 0
    %3160 = vmatprep.subr.bf16.mxu0 0
    %3161 = vmatpush1.bf16.msra.mxu0 0
    %3162 = vmatprep.subr.bf16.mxu0 0
    %3163 = vmatpush1.bf16.msra.mxu0 0
    %3164 = vmatprep.subr.bf16.mxu0 0
    %3165 = vmatpush1.bf16.msra.mxu0 0
    %3166 = vmatprep.mubr.bf16.mxu0 0
    %3167 = vmatmul.mubr.bf16.gmra.mrb[0].mxu0 %v2963
    %v3168 = vpop.f32.mrb[0].mxu0
    %v3169 = vadd.f32 %v2951, %v3168
    %v3170 = vpop.f32.mrb[0].mxu0
    %v3171 = vpop.f32.mrb[0].mxu0
    %v3172 = vpop.f32.mrb[0].mxu0
    %3173 = vdwg.mxu0
    %v3176 = vunpack.c.l.s4 1966171168
    %v3177 = vunpack.c.0.s8 %v3176
    %v3178 = vlaneseq
    %v3179 = vshrl.u32 %v3178, 7
    %v3180 = vsub.s32 %v3177, %v3179
    %v3181 = vrot.slane %v3128, %v3180
    %v3182 = vcombine.high %v3181, %v3181
    %v3184 = vunpack.c.l.s4 1966171168
    %v3185 = vunpack.c.0.s8 %v3184
    %v3186 = vlaneseq
    %v3187 = vshrl.u32 %v3186, 7
    %v3188 = vsub.s32 %v3185, %v3187
    %v3189 = vrot.slane %v3181, %v3188
    %v3191 = vunpack.c.l.s4 1966171168
    %v3192 = vunpack.c.0.s8 %v3191
    %v3193 = vlaneseq
    %v3194 = vshrl.u32 %v3193, 7
    %v3195 = vsub.s32 %v3192, %v3194
    %v3196 = vrot.slane %v3182, %v3195
    %v3201 = vunpack.c.l.s4 1966171168
    %v3202 = vunpack.c.0.s8 %v3201
    %v3203 = vlaneseq
    %v3204 = vshrl.u32 %v3203, 7
    %v3205 = vsub.s32 %v3202, %v3204
    %v3206 = vrot.slane %v3130, %v3205
    %v3207 = vcombine.high %v3206, %v3206
    %v3209 = vunpack.c.l.s4 1966171168
    %v3210 = vunpack.c.0.s8 %v3209
    %v3211 = vlaneseq
    %v3212 = vshrl.u32 %v3211, 7
    %v3213 = vsub.s32 %v3210, %v3212
    %v3214 = vrot.slane %v3206, %v3213
    %v3216 = vunpack.c.l.s4 1966171168
    %v3217 = vunpack.c.0.s8 %v3216
    %v3218 = vlaneseq
    %v3219 = vshrl.u32 %v3218, 7
    %v3220 = vsub.s32 %v3217, %v3219
    %v3221 = vrot.slane %v3207, %v3220
    %v3226 = vunpack.c.l.s4 1966171168
    %v3227 = vunpack.c.0.s8 %v3226
    %v3228 = vlaneseq
    %v3229 = vshrl.u32 %v3228, 7
    %v3230 = vsub.s32 %v3227, %v3229
    %v3231 = vrot.slane %v3169, %v3230
    %v3232 = vcombine.high %v3231, %v3231
    %v3234 = vunpack.c.l.s4 1966171168
    %v3235 = vunpack.c.0.s8 %v3234
    %v3236 = vlaneseq
    %v3237 = vshrl.u32 %v3236, 7
    %v3238 = vsub.s32 %v3235, %v3237
    %v3239 = vrot.slane %v3231, %v3238
    %v3241 = vunpack.c.l.s4 1966171168
    %v3242 = vunpack.c.0.s8 %v3241
    %v3243 = vlaneseq
    %v3244 = vshrl.u32 %v3243, 7
    %v3245 = vsub.s32 %v3242, %v3244
    %v3246 = vrot.slane %v3232, %v3245
    %v3249 = vpack.c.bf16 %v3189, %v3189
    %v3250 = vpack.c.bf16 %v3196, %v3196
    %v3251 = vpack.c.bf16 %v3214, %v3214
    %v3252 = vpack.c.bf16 %v3221, %v3221
    %3253 = vmatprep.subr.bf16.mxu0 0
    %3254 = vmatpush1.bf16.xpose.msra.mxu0 %v3251
    %3255 = vmatprep.subr.bf16.mxu0 0
    %3256 = vmatpush1.bf16.xpose.msra.mxu0 0
    %3257 = vmatprep.subr.bf16.mxu0 0
    %3258 = vmatpush1.bf16.xpose.msra.mxu0 0
    %3259 = vmatprep.subr.bf16.mxu0 0
    %3260 = vmatpush1.bf16.xpose.msra.mxu0 0
    %3261 = vmatprep.subr.bf16.mxu0 0
    %3262 = vmatpush1.bf16.xpose.msra.mxu0 0
    %3263 = vmatprep.subr.bf16.mxu0 0
    %3264 = vmatpush1.bf16.xpose.msra.mxu0 0
    %3265 = vmatprep.subr.bf16.mxu0 0
    %3266 = vmatpush1.bf16.xpose.msra.mxu0 0
    %3267 = vmatprep.subr.bf16.mxu0 0
    %3268 = vmatpush1.bf16.xpose.msra.mxu0 0
    %3269 = vmatprep.subr.bf16.mxu0 0
    %3270 = vmatpush1.bf16.xpose.msra.mxu0 0
    %3271 = vmatprep.subr.bf16.mxu0 0
    %3272 = vmatpush1.bf16.xpose.msra.mxu0 0
    %3273 = vmatprep.subr.bf16.mxu0 0
    %3274 = vmatpush1.bf16.xpose.msra.mxu0 0
    %3275 = vmatprep.subr.bf16.mxu0 0
    %3276 = vmatpush1.bf16.xpose.msra.mxu0 0
    %3277 = vmatprep.subr.bf16.mxu0 0
    %3278 = vmatpush1.bf16.xpose.msra.mxu0 0
    %3279 = vmatprep.subr.bf16.mxu0 0
    %3280 = vmatpush1.bf16.xpose.msra.mxu0 0
    %3281 = vmatprep.subr.bf16.mxu0 0
    %3282 = vmatpush1.bf16.xpose.msra.mxu0 0
    %3283 = vmatprep.subr.bf16.mxu0 0
    %3284 = vmatpush1.bf16.xpose.msra.mxu0 0
    %3285 = vmatprep.mubr.bf16.mxu0 0
    %3286 = vmatmul.mubr.bf16.gmra.mrb[0].mxu0 %v3249
    %v3287 = vpop.f32.mrb[0].mxu0
    %v3288 = vadd.f32 0.0, %v3287
    %v3289 = vpop.f32.mrb[0].mxu0
    %v3290 = vpop.f32.mrb[0].mxu0
    %v3291 = vpop.f32.mrb[0].mxu0
    %3292 = vdwg.mxu0
    %3293 = vmatprep.subr.bf16.mxu0 0
    %3294 = vmatpush1.bf16.xpose.msra.mxu0 %v3252
    %3295 = vmatprep.subr.bf16.mxu0 0
    %3296 = vmatpush1.bf16.xpose.msra.mxu0 0
    %3297 = vmatprep.subr.bf16.mxu0 0
    %3298 = vmatpush1.bf16.xpose.msra.mxu0 0
    %3299 = vmatprep.subr.bf16.mxu0 0
    %3300 = vmatpush1.bf16.xpose.msra.mxu0 0
    %3301 = vmatprep.subr.bf16.mxu0 0
    %3302 = vmatpush1.bf16.xpose.msra.mxu0 0
    %3303 = vmatprep.subr.bf16.mxu0 0
    %3304 = vmatpush1.bf16.xpose.msra.mxu0 0
    %3305 = vmatprep.subr.bf16.mxu0 0
    %3306 = vmatpush1.bf16.xpose.msra.mxu0 0
    %3307 = vmatprep.subr.bf16.mxu0 0
    %3308 = vmatpush1.bf16.xpose.msra.mxu0 0
    %3309 = vmatprep.subr.bf16.mxu0 0
    %3310 = vmatpush1.bf16.xpose.msra.mxu0 0
    %3311 = vmatprep.subr.bf16.mxu0 0
    %3312 = vmatpush1.bf16.xpose.msra.mxu0 0
    %3313 = vmatprep.subr.bf16.mxu0 0
    %3314 = vmatpush1.bf16.xpose.msra.mxu0 0
    %3315 = vmatprep.subr.bf16.mxu0 0
    %3316 = vmatpush1.bf16.xpose.msra.mxu0 0
    %3317 = vmatprep.subr.bf16.mxu0 0
    %3318 = vmatpush1.bf16.xpose.msra.mxu0 0
    %3319 = vmatprep.subr.bf16.mxu0 0
    %3320 = vmatpush1.bf16.xpose.msra.mxu0 0
    %3321 = vmatprep.subr.bf16.mxu0 0
    %3322 = vmatpush1.bf16.xpose.msra.mxu0 0
    %3323 = vmatprep.subr.bf16.mxu0 0
    %3324 = vmatpush1.bf16.xpose.msra.mxu0 0
    %3325 = vmatprep.mubr.bf16.mxu0 0
    %3326 = vmatmul.mubr.bf16.gmra.mrb[0].mxu0 %v3250
    %v3327 = vpop.f32.mrb[0].mxu0
    %v3328 = vadd.f32 0.0, %v3327
    %v3329 = vpop.f32.mrb[0].mxu0
    %v3330 = vpop.f32.mrb[0].mxu0
    %v3331 = vpop.f32.mrb[0].mxu0
    %3332 = vdwg.mxu0
    %v3333 = vmul.f32 %v3288, 0.17677669
    %v3334 = vmul.f32 %v3328, 0.17677669
    %v3335 = vsub.f32 %v3333, %v3333
    %v3336 = vsub.f32 %v3334, %v3334
    %v3337 = vmul.f32 %v3335, 1.442695
    %v3338 = vpow.pop %v3337
    %v3339 = vmul.f32 %v3336, 1.442695
    %v3340 = vpow.pop %v3339
    %v3341 = vadd.f32 %v3338, 0.0
    %v3342 = vadd.f32 %v3340, 0.0
    %v3343 = vrcp.pop %v3341
    %v3344 = vrcp.pop %v3342
    %v3345 = vmul.f32 %v3338, %v3343
    %v3346 = vmul.f32 %v3340, %v3344
    %v3347 = vpack.c.bf16 %v3345, %v3345
    %v3348 = vpack.c.bf16 %v3346, %v3346
    %v3349 = vpack.c.bf16 %v3239, %v3239
    %v3350 = vpack.c.bf16 %v3246, %v3246
    %vm3351 = vcmask 7168
    %v3353 = vsel %vm3351, %v3347, 0
    %vm3355 = vcmask 1040384
    %v3356 = vsel 0, 4294967295, 65535
    %v3357 = vsel %vm3355, %v3356, 0
    %v3359 = vand.u32 %v3349, %v3357
    %3361 = vmatprep.subr.bf16.mxu0 0
    %3362 = vmatpush1.bf16.msra.mxu0 %v3359
    %3363 = vmatprep.subr.bf16.mxu0 0
    %3364 = vmatpush1.bf16.msra.mxu0 0
    %3365 = vmatprep.subr.bf16.mxu0 0
    %3366 = vmatpush1.bf16.msra.mxu0 0
    %3367 = vmatprep.subr.bf16.mxu0 0
    %3368 = vmatpush1.bf16.msra.mxu0 0
    %3369 = vmatprep.subr.bf16.mxu0 0
    %3370 = vmatpush1.bf16.msra.mxu0 0
    %3371 = vmatprep.subr.bf16.mxu0 0
    %3372 = vmatpush1.bf16.msra.mxu0 0
    %3373 = vmatprep.subr.bf16.mxu0 0
    %3374 = vmatpush1.bf16.msra.mxu0 0
    %3375 = vmatprep.subr.bf16.mxu0 0
    %3376 = vmatpush1.bf16.msra.mxu0 0
    %3377 = vmatprep.subr.bf16.mxu0 0
    %3378 = vmatpush1.bf16.msra.mxu0 0
    %3379 = vmatprep.subr.bf16.mxu0 0
    %3380 = vmatpush1.bf16.msra.mxu0 0
    %3381 = vmatprep.subr.bf16.mxu0 0
    %3382 = vmatpush1.bf16.msra.mxu0 0
    %3383 = vmatprep.subr.bf16.mxu0 0
    %3384 = vmatpush1.bf16.msra.mxu0 0
    %3385 = vmatprep.subr.bf16.mxu0 0
    %3386 = vmatpush1.bf16.msra.mxu0 0
    %3387 = vmatprep.subr.bf16.mxu0 0
    %3388 = vmatpush1.bf16.msra.mxu0 0
    %3389 = vmatprep.subr.bf16.mxu0 0
    %3390 = vmatpush1.bf16.msra.mxu0 0
    %3391 = vmatprep.subr.bf16.mxu0 0
    %3392 = vmatpush1.bf16.msra.mxu0 0
    %3393 = vmatprep.mubr.bf16.mxu0 0
    %3394 = vmatmul.mubr.bf16.gmra.mrb[0].mxu0 %v3353
    %v3395 = vpop.f32.mrb[0].mxu0
    %v3396 = vadd.f32 0.0, %v3395
    %v3397 = vpop.f32.mrb[0].mxu0
    %v3398 = vpop.f32.mrb[0].mxu0
    %v3399 = vpop.f32.mrb[0].mxu0
    %3400 = vdwg.mxu0
    %v3402 = vsel %vm3351, %v3348, 0
    %v3405 = vand.u32 %v3350, %v3357
    %3407 = vmatprep.subr.bf16.mxu0 0
    %3408 = vmatpush1.bf16.msra.mxu0 %v3405
    %3409 = vmatprep.subr.bf16.mxu0 0
    %3410 = vmatpush1.bf16.msra.mxu0 0
    %3411 = vmatprep.subr.bf16.mxu0 0
    %3412 = vmatpush1.bf16.msra.mxu0 0
    %3413 = vmatprep.subr.bf16.mxu0 0
    %3414 = vmatpush1.bf16.msra.mxu0 0
    %3415 = vmatprep.subr.bf16.mxu0 0
    %3416 = vmatpush1.bf16.msra.mxu0 0
    %3417 = vmatprep.subr.bf16.mxu0 0
    %3418 = vmatpush1.bf16.msra.mxu0 0
    %3419 = vmatprep.subr.bf16.mxu0 0
    %3420 = vmatpush1.bf16.msra.mxu0 0
    %3421 = vmatprep.subr.bf16.mxu0 0
    %3422 = vmatpush1.bf16.msra.mxu0 0
    %3423 = vmatprep.subr.bf16.mxu0 0
    %3424 = vmatpush1.bf16.msra.mxu0 0
    %3425 = vmatprep.subr.bf16.mxu0 0
    %3426 = vmatpush1.bf16.msra.mxu0 0
    %3427 = vmatprep.subr.bf16.mxu0 0
    %3428 = vmatpush1.bf16.msra.mxu0 0
    %3429 = vmatprep.subr.bf16.mxu0 0
    %3430 = vmatpush1.bf16.msra.mxu0 0
    %3431 = vmatprep.subr.bf16.mxu0 0
    %3432 = vmatpush1.bf16.msra.mxu0 0
    %3433 = vmatprep.subr.bf16.mxu0 0
    %3434 = vmatpush1.bf16.msra.mxu0 0
    %3435 = vmatprep.subr.bf16.mxu0 0
    %3436 = vmatpush1.bf16.msra.mxu0 0
    %3437 = vmatprep.subr.bf16.mxu0 0
    %3438 = vmatpush1.bf16.msra.mxu0 0
    %3439 = vmatprep.mubr.bf16.mxu0 0
    %3440 = vmatmul.mubr.bf16.gmra.mrb[0].mxu0 %v3402
    %v3441 = vpop.f32.mrb[0].mxu0
    %v3442 = vadd.f32 0.0, %v3441
    %v3443 = vpop.f32.mrb[0].mxu0
    %v3444 = vpop.f32.mrb[0].mxu0
    %v3445 = vpop.f32.mrb[0].mxu0
    %3446 = vdwg.mxu0
    %s3447 = scalar_lea.vmem [#allocation2], 320
    %v3448 = vld [vmem:[%s3447] sm:$0xf]
    %v3449 = vld [vmem:[%s3447 + $0x4] sm:$0xf]
    %v3450 = vld [vmem:[%s3447 + $0x8] sm:$0xf]
    %v3451 = vld [vmem:[%s3447 + $0xc] sm:$0xf]
    %v3452 = vld [vmem:[%s3447 + $0x10] sm:$0xf]
    %v3453 = vld [vmem:[%s3447 + $0x14] sm:$0xf]
    %v3454 = vld [vmem:[%s3447 + $0x18] sm:$0xf]
    %v3455 = vld [vmem:[%s3447 + $0x1c] sm:$0xf]
    %v3456 = vld [vmem:[%s3447 + $0x20] sm:$0xf]
    %v3457 = vld [vmem:[%s3447 + $0x24] sm:$0xf]
    %v3458 = vld [vmem:[%s3447 + $0x28] sm:$0xf]
    %v3459 = vld [vmem:[%s3447 + $0x2c] sm:$0xf]
    %v3460 = vld [vmem:[%s3447 + $0x30] sm:$0xf]
    %v3461 = vld [vmem:[%s3447 + $0x34] sm:$0xf]
    %v3462 = vld [vmem:[%s3447 + $0x38] sm:$0xf]
    %v3463 = vld [vmem:[%s3447 + $0x3c] sm:$0xf]
    %v3464 = vpack.c.bf16 %v3396, %v3396
    %v3465 = vpack.c.bf16 %v3442, %v3442
    %v3466 = vld [vmem:[#allocation7 + $0x36] ss:$0 sm:$0xff]
    %v3469 = vunpack.c.l.b16 %v3464
    %v3470 = vunpack.c.l.b16 %v3465
    %v3471 = vrot.slane %v3470, 7
    %v3472 = vsel %vm2961, %v3471, %v3469
    %v3473 = vpack.c.b16 %v3472, %v3472
    %v3491 = vunpack.c.l.b16 %v3448
    %v3492 = vunpack.c.l.b16 %v3449
    %v3493 = vunpack.c.l.b16 %v3450
    %v3494 = vunpack.c.l.b16 %v3451
    %v3495 = vunpack.c.l.b16 %v3452
    %v3496 = vunpack.c.l.b16 %v3453
    %v3497 = vunpack.c.l.b16 %v3454
    %v3498 = vunpack.c.l.b16 %v3455
    %v3499 = vunpack.c.l.b16 %v3456
    %v3500 = vunpack.c.l.b16 %v3457
    %v3501 = vunpack.c.l.b16 %v3458
    %v3502 = vunpack.c.l.b16 %v3459
    %v3503 = vunpack.c.l.b16 %v3460
    %v3504 = vunpack.c.l.b16 %v3461
    %v3505 = vunpack.c.l.b16 %v3462
    %v3506 = vunpack.c.l.b16 %v3463
    %v3507 = vpack.c.b16 %v3492, %v3491
    %v3508 = vpack.c.b16 %v3494, %v3493
    %v3509 = vpack.c.b16 %v3496, %v3495
    %v3510 = vpack.c.b16 %v3498, %v3497
    %v3511 = vpack.c.b16 %v3500, %v3499
    %v3512 = vpack.c.b16 %v3502, %v3501
    %v3513 = vpack.c.b16 %v3504, %v3503
    %v3514 = vpack.c.b16 %v3506, %v3505
    %3523 = vmatprep.subr.bf16.mxu0 0
    %3524 = vmatpush1.bf16.msra.mxu0 %v3507
    %3525 = vmatprep.subr.bf16.mxu0 0
    %3526 = vmatpush1.bf16.msra.mxu0 %v3508
    %3527 = vmatprep.subr.bf16.mxu0 0
    %3528 = vmatpush1.bf16.msra.mxu0 %v3509
    %3529 = vmatprep.subr.bf16.mxu0 0
    %3530 = vmatpush1.bf16.msra.mxu0 %v3510
    %3531 = vmatprep.subr.bf16.mxu0 0
    %3532 = vmatpush1.bf16.msra.mxu0 %v3511
    %3533 = vmatprep.subr.bf16.mxu0 0
    %3534 = vmatpush1.bf16.msra.mxu0 %v3512
    %3535 = vmatprep.subr.bf16.mxu0 0
    %3536 = vmatpush1.bf16.msra.mxu0 %v3513
    %3537 = vmatprep.subr.bf16.mxu0 0
    %3538 = vmatpush1.bf16.msra.mxu0 %v3514
    %3539 = vmatprep.subr.bf16.mxu0 0
    %3540 = vmatpush1.bf16.msra.mxu0 0
    %3541 = vmatprep.subr.bf16.mxu0 0
    %3542 = vmatpush1.bf16.msra.mxu0 0
    %3543 = vmatprep.subr.bf16.mxu0 0
    %3544 = vmatpush1.bf16.msra.mxu0 0
    %3545 = vmatprep.subr.bf16.mxu0 0
    %3546 = vmatpush1.bf16.msra.mxu0 0
    %3547 = vmatprep.subr.bf16.mxu0 0
    %3548 = vmatpush1.bf16.msra.mxu0 0
    %3549 = vmatprep.subr.bf16.mxu0 0
    %3550 = vmatpush1.bf16.msra.mxu0 0
    %3551 = vmatprep.subr.bf16.mxu0 0
    %3552 = vmatpush1.bf16.msra.mxu0 0
    %3553 = vmatprep.subr.bf16.mxu0 0
    %3554 = vmatpush1.bf16.msra.mxu0 0
    %3555 = vmatprep.mubr.bf16.mxu0 0
    %3556 = vmatmul.mubr.bf16.gmra.mrb[0].mxu0 %v3473
    %v3557 = vpop.f32.mrb[0].mxu0
    %v3558 = vadd.f32 %v3466, %v3557
    %v3559 = vpop.f32.mrb[0].mxu0
    %v3560 = vpop.f32.mrb[0].mxu0
    %v3561 = vpop.f32.mrb[0].mxu0
    %3562 = vdwg.mxu0
    %v3564 = vrot.slane %v3558, 1
    %v3565 = vrot.slane %v3558, 2
    %v3568 = vadd.f32 %v2900, %v3564
    %v3569 = vadd.f32 %v2901, %v3565
    %v3572 = vrot.slane %v3569, 7
    %vm3575 = vcmask 1047559
    %v3576 = vsel %vm3575, %v3568, 0.0
    %3577 = vadd.xlane.f32.xlu0 %v3576
    %v3578 = vpop.xlane.xlu0 %3577
    %v3579 = vsel %vm3355, %v3572, 0.0
    %3580 = vadd.xlane.f32.xlu0 %v3579
    %v3581 = vpop.xlane.xlu0 %3580
    %v3582 = vmul.f32 %v3578, 0.03125
    %v3583 = vmul.f32 %v3581, 0.03125
    %v3584 = vmul.f32 %v3568, %v3568
    %v3585 = vmul.f32 %v3569, %v3569
    %v3588 = vrot.slane %v3585, 7
    %v3591 = vsel %vm3575, %v3584, 0.0
    %3592 = vadd.xlane.f32.xlu0 %v3591
    %v3593 = vpop.xlane.xlu0 %3592
    %v3594 = vsel %vm3355, %v3588, 0.0
    %3595 = vadd.xlane.f32.xlu0 %v3594
    %v3596 = vpop.xlane.xlu0 %3595
    %v3597 = vmul.f32 %v3593, 0.03125
    %v3598 = vmul.f32 %v3596, 0.03125
    %v3599 = vmul.f32 %v3582, %v3582
    %v3600 = vmul.f32 %v3583, %v3583
    %v3601 = vsub.f32 %v3597, %v3599
    %v3602 = vsub.f32 %v3598, %v3600
    %v3605 = vrot.slane %v3583, 1
    %v3608 = vsub.f32 %v3568, %v3582
    %v3609 = vsub.f32 %v3569, %v3605
    %v3610 = vadd.f32 %v3601, 1e-05
    %v3611 = vadd.f32 %v3602, 1e-05
    %v3612 = vrsqrt.pop %v3610
    %v3613 = vrsqrt.pop %v3611
    %v3616 = vrot.slane %v3613, 1
    %v3619 = vmul.f32 %v3608, %v3612
    %v3620 = vmul.f32 %v3609, %v3616
    %v3621 = vld [vmem:[#allocation7 + $0x37] ss:$0 sm:$0xff]
    %v3622 = vmul.f32 %v3619, %v3621
    %v3623 = vmul.f32 %v3620, %v3621
    %v3624 = vld [vmem:[#allocation7 + $0x48] ss:$0 sm:$0xff]
    %v3625 = vadd.f32 %v3622, %v3624
    %v3626 = vadd.f32 %v3623, %v3624
    %s3627 = scalar_lea.vmem [#allocation2], 384
    %v3628 = vld [vmem:[%s3627] sm:$0xf]
    %v3629 = vld [vmem:[%s3627 + $0x4] sm:$0xf]
    %v3630 = vld [vmem:[%s3627 + $0x8] sm:$0xf]
    %v3631 = vld [vmem:[%s3627 + $0xc] sm:$0xf]
    %v3632 = vld [vmem:[%s3627 + $0x10] sm:$0xf]
    %v3633 = vld [vmem:[%s3627 + $0x14] sm:$0xf]
    %v3634 = vld [vmem:[%s3627 + $0x18] sm:$0xf]
    %v3635 = vld [vmem:[%s3627 + $0x1c] sm:$0xf]
    %v3636 = vld [vmem:[%s3627 + $0x20] sm:$0xf]
    %v3637 = vld [vmem:[%s3627 + $0x24] sm:$0xf]
    %v3638 = vld [vmem:[%s3627 + $0x28] sm:$0xf]
    %v3639 = vld [vmem:[%s3627 + $0x2c] sm:$0xf]
    %v3640 = vld [vmem:[%s3627 + $0x30] sm:$0xf]
    %v3641 = vld [vmem:[%s3627 + $0x34] sm:$0xf]
    %v3642 = vld [vmem:[%s3627 + $0x38] sm:$0xf]
    %v3643 = vld [vmem:[%s3627 + $0x3c] sm:$0xf]
    %v3644 = vpack.c.bf16 %v3625, %v3625
    %v3645 = vpack.c.bf16 %v3626, %v3626
    %v3646 = vld [vmem:[#allocation7 + $0x49] ss:$0 sm:$0xff]
    %v3649 = vunpack.c.l.b16 %v3644
    %v3650 = vunpack.c.l.b16 %v3645
    %v3651 = vrot.slane %v3649, 7
    %v3652 = vrot.slane %v3650, 6
    %v3653 = vsel %vm2961, %v3652, %v3651
    %v3654 = vpack.c.b16 %v3653, %v3653
    %v3672 = vunpack.c.l.b16 %v3628
    %v3673 = vunpack.c.l.b16 %v3629
    %v3674 = vunpack.c.l.b16 %v3630
    %v3675 = vunpack.c.l.b16 %v3631
    %v3676 = vunpack.c.l.b16 %v3632
    %v3677 = vunpack.c.l.b16 %v3633
    %v3678 = vunpack.c.l.b16 %v3634
    %v3679 = vunpack.c.l.b16 %v3635
    %v3680 = vunpack.c.l.b16 %v3636
    %v3681 = vunpack.c.l.b16 %v3637
    %v3682 = vunpack.c.l.b16 %v3638
    %v3683 = vunpack.c.l.b16 %v3639
    %v3684 = vunpack.c.l.b16 %v3640
    %v3685 = vunpack.c.l.b16 %v3641
    %v3686 = vunpack.c.l.b16 %v3642
    %v3687 = vunpack.c.l.b16 %v3643
    %v3688 = vpack.c.b16 %v3673, %v3672
    %v3689 = vpack.c.b16 %v3675, %v3674
    %v3690 = vpack.c.b16 %v3677, %v3676
    %v3691 = vpack.c.b16 %v3679, %v3678
    %v3692 = vpack.c.b16 %v3681, %v3680
    %v3693 = vpack.c.b16 %v3683, %v3682
    %v3694 = vpack.c.b16 %v3685, %v3684
    %v3695 = vpack.c.b16 %v3687, %v3686
    %3704 = vmatprep.subr.bf16.mxu0 0
    %3705 = vmatpush1.bf16.msra.mxu0 %v3688
    %3706 = vmatprep.subr.bf16.mxu0 0
    %3707 = vmatpush1.bf16.msra.mxu0 %v3689
    %3708 = vmatprep.subr.bf16.mxu0 0
    %3709 = vmatpush1.bf16.msra.mxu0 %v3690
    %3710 = vmatprep.subr.bf16.mxu0 0
    %3711 = vmatpush1.bf16.msra.mxu0 %v3691
    %3712 = vmatprep.subr.bf16.mxu0 0
    %3713 = vmatpush1.bf16.msra.mxu0 %v3692
    %3714 = vmatprep.subr.bf16.mxu0 0
    %3715 = vmatpush1.bf16.msra.mxu0 %v3693
    %3716 = vmatprep.subr.bf16.mxu0 0
    %3717 = vmatpush1.bf16.msra.mxu0 %v3694
    %3718 = vmatprep.subr.bf16.mxu0 0
    %3719 = vmatpush1.bf16.msra.mxu0 %v3695
    %3720 = vmatprep.subr.bf16.mxu0 0
    %3721 = vmatpush1.bf16.msra.mxu0 0
    %3722 = vmatprep.subr.bf16.mxu0 0
    %3723 = vmatpush1.bf16.msra.mxu0 0
    %3724 = vmatprep.subr.bf16.mxu0 0
    %3725 = vmatpush1.bf16.msra.mxu0 0
    %3726 = vmatprep.subr.bf16.mxu0 0
    %3727 = vmatpush1.bf16.msra.mxu0 0
    %3728 = vmatprep.subr.bf16.mxu0 0
    %3729 = vmatpush1.bf16.msra.mxu0 0
    %3730 = vmatprep.subr.bf16.mxu0 0
    %3731 = vmatpush1.bf16.msra.mxu0 0
    %3732 = vmatprep.subr.bf16.mxu0 0
    %3733 = vmatpush1.bf16.msra.mxu0 0
    %3734 = vmatprep.subr.bf16.mxu0 0
    %3735 = vmatpush1.bf16.msra.mxu0 0
    %3736 = vmatprep.mubr.bf16.mxu0 0
    %3737 = vmatmul.mubr.bf16.gmra.mrb[0].mxu0 %v3654
    %v3738 = vpop.f32.mrb[0].mxu0
    %v3739 = vadd.f32 %v3646, %v3738
    %v3740 = vpop.f32.mrb[0].mxu0
    %v3741 = vpop.f32.mrb[0].mxu0
    %v3742 = vpop.f32.mrb[0].mxu0
    %3743 = vdwg.mxu0
    %v3746 = vunpack.c.l.s4 1966171168
    %v3747 = vunpack.c.0.s8 %v3746
    %v3748 = vlaneseq
    %v3749 = vshrl.u32 %v3748, 7
    %v3750 = vsub.s32 %v3747, %v3749
    %v3751 = vrot.slane %v3739, %v3750
    %v3752 = vcombine.high %v3751, %v3751
    %v3754 = vunpack.c.l.s4 1966171168
    %v3755 = vunpack.c.0.s8 %v3754
    %v3756 = vlaneseq
    %v3757 = vshrl.u32 %v3756, 7
    %v3758 = vsub.s32 %v3755, %v3757
    %v3759 = vrot.slane %v3751, %v3758
    %v3761 = vunpack.c.l.s4 1966171168
    %v3762 = vunpack.c.0.s8 %v3761
    %v3763 = vlaneseq
    %v3764 = vshrl.u32 %v3763, 7
    %v3765 = vsub.s32 %v3762, %v3764
    %v3766 = vrot.slane %v3752, %v3765
    %s3769 = scalar_lea.vmem [#allocation4], 1344
    %v3770 = vld [vmem:[%s3769] sm:$0xff]
    %v3771 = vld [vmem:[%s3769 + $0xc] sm:$0xff]
    %v3772 = vld [vmem:[%s3769 + $0x18] sm:$0xff]
    %v3773 = vld [vmem:[%s3769 + $0x24] sm:$0xff]
    %v3774 = vld [vmem:[%s3769 + $0x30] sm:$0xff]
    %v3775 = vld [vmem:[%s3769 + $0x3c] sm:$0xff]
    %v3776 = vld [vmem:[%s3769 + $0x48] sm:$0xff]
    %v3777 = vld [vmem:[%s3769 + $0x54] sm:$0xff]
    %v3778 = vld [vmem:[%s3769 + $0x60] sm:$0xff]
    %v3779 = vld [vmem:[%s3769 + $0x6c] sm:$0xff]
    %v3780 = vld [vmem:[%s3769 + $0x78] sm:$0xff]
    %v3781 = vld [vmem:[%s3769 + $0x84] sm:$0xff]
    %v3782 = vld [vmem:[%s3769 + $0x90] sm:$0xff]
    %v3783 = vld [vmem:[%s3769 + $0x9c] sm:$0xff]
    %v3784 = vld [vmem:[%s3769 + $0xa8] sm:$0xff]
    %v3785 = vld [vmem:[%s3769 + $0xb4] sm:$0xff]
    %v3786 = vpack.c.bf16 %v2901, %v2900
    %s3787 = scalar_lea.vmem [#allocation7], 74
    %v3788 = vld [vmem:[%s3787] ss:$8 sm:$0x3]
    %v3790 = vlaneseq
    %v3791 = vshrl.u32 %v3790, 7
    %v3792 = vsub.s32 0, %v3791
    %v3793 = vrot.slane %v3788, %v3792
    %v3794 = vlaneseq
    %v3795 = vshrl.u32 %v3794, 7
    %v3796 = vsub.s32 1, %v3795
    %v3797 = vrot.slane %v3788, %v3796
    %v3816 = vunpack.c.l.b16 %v3770
    %v3817 = vunpack.c.h.b16 %v3770
    %v3818 = vunpack.c.l.b16 %v3771
    %v3819 = vunpack.c.h.b16 %v3771
    %v3820 = vunpack.c.l.b16 %v3772
    %v3821 = vunpack.c.h.b16 %v3772
    %v3822 = vunpack.c.l.b16 %v3773
    %v3823 = vunpack.c.h.b16 %v3773
    %v3824 = vunpack.c.l.b16 %v3774
    %v3825 = vunpack.c.h.b16 %v3774
    %v3826 = vunpack.c.l.b16 %v3775
    %v3827 = vunpack.c.h.b16 %v3775
    %v3828 = vunpack.c.l.b16 %v3776
    %v3829 = vunpack.c.h.b16 %v3776
    %v3830 = vunpack.c.l.b16 %v3777
    %v3831 = vunpack.c.h.b16 %v3777
    %v3832 = vunpack.c.l.b16 %v3778
    %v3833 = vunpack.c.h.b16 %v3778
    %v3834 = vunpack.c.l.b16 %v3779
    %v3835 = vunpack.c.h.b16 %v3779
    %v3836 = vunpack.c.l.b16 %v3780
    %v3837 = vunpack.c.h.b16 %v3780
    %v3838 = vunpack.c.l.b16 %v3781
    %v3839 = vunpack.c.h.b16 %v3781
    %v3840 = vunpack.c.l.b16 %v3782
    %v3841 = vunpack.c.h.b16 %v3782
    %v3842 = vunpack.c.l.b16 %v3783
    %v3843 = vunpack.c.h.b16 %v3783
    %v3844 = vunpack.c.l.b16 %v3784
    %v3845 = vunpack.c.h.b16 %v3784
    %v3846 = vunpack.c.l.b16 %v3785
    %v3847 = vunpack.c.h.b16 %v3785
    %v3848 = vpack.c.b16 %v3818, %v3816
    %v3849 = vpack.c.b16 %v3819, %v3817
    %v3850 = vpack.c.b16 %v3822, %v3820
    %v3851 = vpack.c.b16 %v3823, %v3821
    %v3852 = vpack.c.b16 %v3826, %v3824
    %v3853 = vpack.c.b16 %v3827, %v3825
    %v3854 = vpack.c.b16 %v3830, %v3828
    %v3855 = vpack.c.b16 %v3831, %v3829
    %v3856 = vpack.c.b16 %v3834, %v3832
    %v3857 = vpack.c.b16 %v3835, %v3833
    %v3858 = vpack.c.b16 %v3838, %v3836
    %v3859 = vpack.c.b16 %v3839, %v3837
    %v3860 = vpack.c.b16 %v3842, %v3840
    %v3861 = vpack.c.b16 %v3843, %v3841
    %v3862 = vpack.c.b16 %v3846, %v3844
    %v3863 = vpack.c.b16 %v3847, %v3845
    %3880 = vmatprep.subr.bf16.mxu0 %v3849
    %3881 = vmatpush1.bf16.msra.mxu0 %v3848
    %3882 = vmatprep.subr.bf16.mxu0 %v3851
    %3883 = vmatpush1.bf16.msra.mxu0 %v3850
    %3884 = vmatprep.subr.bf16.mxu0 %v3853
    %3885 = vmatpush1.bf16.msra.mxu0 %v3852
    %3886 = vmatprep.subr.bf16.mxu0 %v3855
    %3887 = vmatpush1.bf16.msra.mxu0 %v3854
    %3888 = vmatprep.subr.bf16.mxu0 %v3857
    %3889 = vmatpush1.bf16.msra.mxu0 %v3856
    %3890 = vmatprep.subr.bf16.mxu0 %v3859
    %3891 = vmatpush1.bf16.msra.mxu0 %v3858
    %3892 = vmatprep.subr.bf16.mxu0 %v3861
    %3893 = vmatpush1.bf16.msra.mxu0 %v3860
    %3894 = vmatprep.subr.bf16.mxu0 %v3863
    %3895 = vmatpush1.bf16.msra.mxu0 %v3862
    %3896 = vmatprep.subr.bf16.mxu0 0
    %3897 = vmatpush1.bf16.msra.mxu0 0
    %3898 = vmatprep.subr.bf16.mxu0 0
    %3899 = vmatpush1.bf16.msra.mxu0 0
    %3900 = vmatprep.subr.bf16.mxu0 0
    %3901 = vmatpush1.bf16.msra.mxu0 0
    %3902 = vmatprep.subr.bf16.mxu0 0
    %3903 = vmatpush1.bf16.msra.mxu0 0
    %3904 = vmatprep.subr.bf16.mxu0 0
    %3905 = vmatpush1.bf16.msra.mxu0 0
    %3906 = vmatprep.subr.bf16.mxu0 0
    %3907 = vmatpush1.bf16.msra.mxu0 0
    %3908 = vmatprep.subr.bf16.mxu0 0
    %3909 = vmatpush1.bf16.msra.mxu0 0
    %3910 = vmatprep.subr.bf16.mxu0 0
    %3911 = vmatpush1.bf16.msra.mxu0 0
    %3912 = vmatprep.mubr.bf16.mxu0 0
    %3913 = vmatmul.mubr.bf16.gmra.mrb[0].mxu0 %v3786
    %v3914 = vpop.f32.mrb[0].mxu0
    %v3915 = vadd.f32 %v3793, %v3914
    %v3916 = vpop.f32.mrb[0].mxu0
    %v3917 = vadd.f32 %v3797, %v3916
    %v3918 = vpop.f32.mrb[0].mxu0
    %v3919 = vadd.f32 %v3793, %v3918
    %v3920 = vpop.f32.mrb[0].mxu0
    %v3921 = vadd.f32 %v3797, %v3920
    %3922 = vdwg.mxu0
    %v3923 = vpack.c.bf16 %v3759, %v3759
    %v3924 = vpack.c.bf16 %v3766, %v3766
    %v3925 = vpack.c.bf16 %v3915, %v3915
    %v3926 = vpack.c.bf16 %v3919, %v3919
    %3927 = vmatprep.subr.bf16.mxu0 0
    %3928 = vmatpush1.bf16.xpose.msra.mxu0 %v3925
    %3929 = vmatprep.subr.bf16.mxu0 0
    %3930 = vmatpush1.bf16.xpose.msra.mxu0 0
    %3931 = vmatprep.subr.bf16.mxu0 0
    %3932 = vmatpush1.bf16.xpose.msra.mxu0 0
    %3933 = vmatprep.subr.bf16.mxu0 0
    %3934 = vmatpush1.bf16.xpose.msra.mxu0 0
    %3935 = vmatprep.subr.bf16.mxu0 0
    %3936 = vmatpush1.bf16.xpose.msra.mxu0 0
    %3937 = vmatprep.subr.bf16.mxu0 0
    %3938 = vmatpush1.bf16.xpose.msra.mxu0 0
    %3939 = vmatprep.subr.bf16.mxu0 0
    %3940 = vmatpush1.bf16.xpose.msra.mxu0 0
    %3941 = vmatprep.subr.bf16.mxu0 0
    %3942 = vmatpush1.bf16.xpose.msra.mxu0 0
    %3943 = vmatprep.subr.bf16.mxu0 0
    %3944 = vmatpush1.bf16.xpose.msra.mxu0 0
    %3945 = vmatprep.subr.bf16.mxu0 0
    %3946 = vmatpush1.bf16.xpose.msra.mxu0 0
    %3947 = vmatprep.subr.bf16.mxu0 0
    %3948 = vmatpush1.bf16.xpose.msra.mxu0 0
    %3949 = vmatprep.subr.bf16.mxu0 0
    %3950 = vmatpush1.bf16.xpose.msra.mxu0 0
    %3951 = vmatprep.subr.bf16.mxu0 0
    %3952 = vmatpush1.bf16.xpose.msra.mxu0 0
    %3953 = vmatprep.subr.bf16.mxu0 0
    %3954 = vmatpush1.bf16.xpose.msra.mxu0 0
    %3955 = vmatprep.subr.bf16.mxu0 0
    %3956 = vmatpush1.bf16.xpose.msra.mxu0 0
    %3957 = vmatprep.subr.bf16.mxu0 0
    %3958 = vmatpush1.bf16.xpose.msra.mxu0 0
    %3959 = vmatprep.mubr.bf16.mxu0 0
    %3960 = vmatmul.mubr.bf16.gmra.mrb[0].mxu0 %v3923
    %v3961 = vpop.f32.mrb[0].mxu0
    %v3962 = vadd.f32 0.0, %v3961
    %v3963 = vpop.f32.mrb[0].mxu0
    %v3964 = vpop.f32.mrb[0].mxu0
    %v3965 = vpop.f32.mrb[0].mxu0
    %3966 = vdwg.mxu0
    %3967 = vmatprep.subr.bf16.mxu0 0
    %3968 = vmatpush1.bf16.xpose.msra.mxu0 %v3926
    %3969 = vmatprep.subr.bf16.mxu0 0
    %3970 = vmatpush1.bf16.xpose.msra.mxu0 0
    %3971 = vmatprep.subr.bf16.mxu0 0
    %3972 = vmatpush1.bf16.xpose.msra.mxu0 0
    %3973 = vmatprep.subr.bf16.mxu0 0
    %3974 = vmatpush1.bf16.xpose.msra.mxu0 0
    %3975 = vmatprep.subr.bf16.mxu0 0
    %3976 = vmatpush1.bf16.xpose.msra.mxu0 0
    %3977 = vmatprep.subr.bf16.mxu0 0
    %3978 = vmatpush1.bf16.xpose.msra.mxu0 0
    %3979 = vmatprep.subr.bf16.mxu0 0
    %3980 = vmatpush1.bf16.xpose.msra.mxu0 0
    %3981 = vmatprep.subr.bf16.mxu0 0
    %3982 = vmatpush1.bf16.xpose.msra.mxu0 0
    %3983 = vmatprep.subr.bf16.mxu0 0
    %3984 = vmatpush1.bf16.xpose.msra.mxu0 0
    %3985 = vmatprep.subr.bf16.mxu0 0
    %3986 = vmatpush1.bf16.xpose.msra.mxu0 0
    %3987 = vmatprep.subr.bf16.mxu0 0
    %3988 = vmatpush1.bf16.xpose.msra.mxu0 0
    %3989 = vmatprep.subr.bf16.mxu0 0
    %3990 = vmatpush1.bf16.xpose.msra.mxu0 0
    %3991 = vmatprep.subr.bf16.mxu0 0
    %3992 = vmatpush1.bf16.xpose.msra.mxu0 0
    %3993 = vmatprep.subr.bf16.mxu0 0
    %3994 = vmatpush1.bf16.xpose.msra.mxu0 0
    %3995 = vmatprep.subr.bf16.mxu0 0
    %3996 = vmatpush1.bf16.xpose.msra.mxu0 0
    %3997 = vmatprep.subr.bf16.mxu0 0
    %3998 = vmatpush1.bf16.xpose.msra.mxu0 0
    %3999 = vmatprep.mubr.bf16.mxu0 0
    %4000 = vmatmul.mubr.bf16.gmra.mrb[0].mxu0 %v3924
    %v4001 = vpop.f32.mrb[0].mxu0
    %v4002 = vadd.f32 0.0, %v4001
    %v4003 = vpop.f32.mrb[0].mxu0
    %v4004 = vpop.f32.mrb[0].mxu0
    %v4005 = vpop.f32.mrb[0].mxu0
    %4006 = vdwg.mxu0
    %v4007 = vmul.f32 %v3962, 0.17677669
    %v4008 = vmul.f32 %v4002, 0.17677669
    %vm4009 = vcmask 57344
    %v4010 = vsel %vm4009, %v4007, -inf
    %4011 = vmax.xlane.f32.xlu0 %v4010
    %v4012 = vpop.xlane.xlu0 %4011
    %v4013 = vsel %vm4009, %v4008, -inf
    %4014 = vmax.xlane.f32.xlu0 %v4013
    %v4015 = vpop.xlane.xlu0 %4014
    %v4016 = vsub.f32 %v4007, %v4012
    %v4017 = vsub.f32 %v4008, %v4015
    %v4018 = vmul.f32 %v4016, 1.442695
    %v4019 = vpow.pop %v4018
    %v4020 = vmul.f32 %v4017, 1.442695
    %v4021 = vpow.pop %v4020
    %v4022 = vsel %vm4009, %v4019, 0.0
    %4023 = vadd.xlane.f32.xlu0 %v4022
    %v4024 = vpop.xlane.xlu0 %4023
    %v4025 = vsel %vm4009, %v4021, 0.0
    %4026 = vadd.xlane.f32.xlu0 %v4025
    %v4027 = vpop.xlane.xlu0 %4026
    %v4028 = vrcp.pop %v4024
    %v4029 = vrcp.pop %v4027
    %v4030 = vmul.f32 %v4019, %v4028
    %v4031 = vmul.f32 %v4021, %v4029
    %v4032 = vpack.c.bf16 %v4030, %v4030
    %v4033 = vpack.c.bf16 %v4031, %v4031
    %v4034 = vpack.c.bf16 %v3917, %v3917
    %v4035 = vpack.c.bf16 %v3921, %v3921
    %v4037 = vsel %vm720, %v4032, 0
    %v4040 = vsel %vm748, %v4034, 0
    %4042 = vmatprep.subr.bf16.mxu0 0
    %4043 = vmatpush1.bf16.msra.mxu0 %v4040
    %4044 = vmatprep.subr.bf16.mxu0 0
    %4045 = vmatpush1.bf16.msra.mxu0 0
    %4046 = vmatprep.subr.bf16.mxu0 0
    %4047 = vmatpush1.bf16.msra.mxu0 0
    %4048 = vmatprep.subr.bf16.mxu0 0
    %4049 = vmatpush1.bf16.msra.mxu0 0
    %4050 = vmatprep.subr.bf16.mxu0 0
    %4051 = vmatpush1.bf16.msra.mxu0 0
    %4052 = vmatprep.subr.bf16.mxu0 0
    %4053 = vmatpush1.bf16.msra.mxu0 0
    %4054 = vmatprep.subr.bf16.mxu0 0
    %4055 = vmatpush1.bf16.msra.mxu0 0
    %4056 = vmatprep.subr.bf16.mxu0 0
    %4057 = vmatpush1.bf16.msra.mxu0 0
    %4058 = vmatprep.subr.bf16.mxu0 0
    %4059 = vmatpush1.bf16.msra.mxu0 0
    %4060 = vmatprep.subr.bf16.mxu0 0
    %4061 = vmatpush1.bf16.msra.mxu0 0
    %4062 = vmatprep.subr.bf16.mxu0 0
    %4063 = vmatpush1.bf16.msra.mxu0 0
    %4064 = vmatprep.subr.bf16.mxu0 0
    %4065 = vmatpush1.bf16.msra.mxu0 0
    %4066 = vmatprep.subr.bf16.mxu0 0
    %4067 = vmatpush1.bf16.msra.mxu0 0
    %4068 = vmatprep.subr.bf16.mxu0 0
    %4069 = vmatpush1.bf16.msra.mxu0 0
    %4070 = vmatprep.subr.bf16.mxu0 0
    %4071 = vmatpush1.bf16.msra.mxu0 0
    %4072 = vmatprep.subr.bf16.mxu0 0
    %4073 = vmatpush1.bf16.msra.mxu0 0
    %4074 = vmatprep.mubr.bf16.mxu0 0
    %4075 = vmatmul.mubr.bf16.gmra.mrb[0].mxu0 %v4037
    %v4076 = vpop.f32.mrb[0].mxu0
    %v4077 = vadd.f32 0.0, %v4076
    %v4078 = vpop.f32.mrb[0].mxu0
    %v4079 = vpop.f32.mrb[0].mxu0
    %v4080 = vpop.f32.mrb[0].mxu0
    %4081 = vdwg.mxu0
    %v4083 = vsel %vm720, %v4033, 0
    %v4086 = vsel %vm748, %v4035, 0
    %4088 = vmatprep.subr.bf16.mxu0 0
    %4089 = vmatpush1.bf16.msra.mxu0 %v4086
    %4090 = vmatprep.subr.bf16.mxu0 0
    %4091 = vmatpush1.bf16.msra.mxu0 0
    %4092 = vmatprep.subr.bf16.mxu0 0
    %4093 = vmatpush1.bf16.msra.mxu0 0
    %4094 = vmatprep.subr.bf16.mxu0 0
    %4095 = vmatpush1.bf16.msra.mxu0 0
    %4096 = vmatprep.subr.bf16.mxu0 0
    %4097 = vmatpush1.bf16.msra.mxu0 0
    %4098 = vmatprep.subr.bf16.mxu0 0
    %4099 = vmatpush1.bf16.msra.mxu0 0
    %4100 = vmatprep.subr.bf16.mxu0 0
    %4101 = vmatpush1.bf16.msra.mxu0 0
    %4102 = vmatprep.subr.bf16.mxu0 0
    %4103 = vmatpush1.bf16.msra.mxu0 0
    %4104 = vmatprep.subr.bf16.mxu0 0
    %4105 = vmatpush1.bf16.msra.mxu0 0
    %4106 = vmatprep.subr.bf16.mxu0 0
    %4107 = vmatpush1.bf16.msra.mxu0 0
    %4108 = vmatprep.subr.bf16.mxu0 0
    %4109 = vmatpush1.bf16.msra.mxu0 0
    %4110 = vmatprep.subr.bf16.mxu0 0
    %4111 = vmatpush1.bf16.msra.mxu0 0
    %4112 = vmatprep.subr.bf16.mxu0 0
    %4113 = vmatpush1.bf16.msra.mxu0 0
    %4114 = vmatprep.subr.bf16.mxu0 0
    %4115 = vmatpush1.bf16.msra.mxu0 0
    %4116 = vmatprep.subr.bf16.mxu0 0
    %4117 = vmatpush1.bf16.msra.mxu0 0
    %4118 = vmatprep.subr.bf16.mxu0 0
    %4119 = vmatpush1.bf16.msra.mxu0 0
    %4120 = vmatprep.mubr.bf16.mxu0 0
    %4121 = vmatmul.mubr.bf16.gmra.mrb[0].mxu0 %v4083
    %v4122 = vpop.f32.mrb[0].mxu0
    %v4123 = vadd.f32 0.0, %v4122
    %v4124 = vpop.f32.mrb[0].mxu0
    %v4125 = vpop.f32.mrb[0].mxu0
    %v4126 = vpop.f32.mrb[0].mxu0
    %4127 = vdwg.mxu0
    %s4128 = scalar_lea.vmem [#allocation2], 448
    %v4129 = vld [vmem:[%s4128] sm:$0xf]
    %v4130 = vld [vmem:[%s4128 + $0x4] sm:$0xf]
    %v4131 = vld [vmem:[%s4128 + $0x8] sm:$0xf]
    %v4132 = vld [vmem:[%s4128 + $0xc] sm:$0xf]
    %v4133 = vld [vmem:[%s4128 + $0x10] sm:$0xf]
    %v4134 = vld [vmem:[%s4128 + $0x14] sm:$0xf]
    %v4135 = vld [vmem:[%s4128 + $0x18] sm:$0xf]
    %v4136 = vld [vmem:[%s4128 + $0x1c] sm:$0xf]
    %v4137 = vld [vmem:[%s4128 + $0x20] sm:$0xf]
    %v4138 = vld [vmem:[%s4128 + $0x24] sm:$0xf]
    %v4139 = vld [vmem:[%s4128 + $0x28] sm:$0xf]
    %v4140 = vld [vmem:[%s4128 + $0x2c] sm:$0xf]
    %v4141 = vld [vmem:[%s4128 + $0x30] sm:$0xf]
    %v4142 = vld [vmem:[%s4128 + $0x34] sm:$0xf]
    %v4143 = vld [vmem:[%s4128 + $0x38] sm:$0xf]
    %v4144 = vld [vmem:[%s4128 + $0x3c] sm:$0xf]
    %v4145 = vpack.c.bf16 %v4077, %v4077
    %v4146 = vpack.c.bf16 %v4123, %v4123
    %v4147 = vld [vmem:[#allocation7 + $0x4b] ss:$0 sm:$0xff]
    %v4150 = vunpack.c.l.b16 %v4145
    %v4151 = vunpack.c.l.b16 %v4146
    %v4152 = vrot.slane %v4151, 7
    %v4153 = vsel %vm2961, %v4152, %v4150
    %v4154 = vpack.c.b16 %v4153, %v4153
    %v4172 = vunpack.c.l.b16 %v4129
    %v4173 = vunpack.c.l.b16 %v4130
    %v4174 = vunpack.c.l.b16 %v4131
    %v4175 = vunpack.c.l.b16 %v4132
    %v4176 = vunpack.c.l.b16 %v4133
    %v4177 = vunpack.c.l.b16 %v4134
    %v4178 = vunpack.c.l.b16 %v4135
    %v4179 = vunpack.c.l.b16 %v4136
    %v4180 = vunpack.c.l.b16 %v4137
    %v4181 = vunpack.c.l.b16 %v4138
    %v4182 = vunpack.c.l.b16 %v4139
    %v4183 = vunpack.c.l.b16 %v4140
    %v4184 = vunpack.c.l.b16 %v4141
    %v4185 = vunpack.c.l.b16 %v4142
    %v4186 = vunpack.c.l.b16 %v4143
    %v4187 = vunpack.c.l.b16 %v4144
    %v4188 = vpack.c.b16 %v4173, %v4172
    %v4189 = vpack.c.b16 %v4175, %v4174
    %v4190 = vpack.c.b16 %v4177, %v4176
    %v4191 = vpack.c.b16 %v4179, %v4178
    %v4192 = vpack.c.b16 %v4181, %v4180
    %v4193 = vpack.c.b16 %v4183, %v4182
    %v4194 = vpack.c.b16 %v4185, %v4184
    %v4195 = vpack.c.b16 %v4187, %v4186
    %4204 = vmatprep.subr.bf16.mxu0 0
    %4205 = vmatpush1.bf16.msra.mxu0 %v4188
    %4206 = vmatprep.subr.bf16.mxu0 0
    %4207 = vmatpush1.bf16.msra.mxu0 %v4189
    %4208 = vmatprep.subr.bf16.mxu0 0
    %4209 = vmatpush1.bf16.msra.mxu0 %v4190
    %4210 = vmatprep.subr.bf16.mxu0 0
    %4211 = vmatpush1.bf16.msra.mxu0 %v4191
    %4212 = vmatprep.subr.bf16.mxu0 0
    %4213 = vmatpush1.bf16.msra.mxu0 %v4192
    %4214 = vmatprep.subr.bf16.mxu0 0
    %4215 = vmatpush1.bf16.msra.mxu0 %v4193
    %4216 = vmatprep.subr.bf16.mxu0 0
    %4217 = vmatpush1.bf16.msra.mxu0 %v4194
    %4218 = vmatprep.subr.bf16.mxu0 0
    %4219 = vmatpush1.bf16.msra.mxu0 %v4195
    %4220 = vmatprep.subr.bf16.mxu0 0
    %4221 = vmatpush1.bf16.msra.mxu0 0
    %4222 = vmatprep.subr.bf16.mxu0 0
    %4223 = vmatpush1.bf16.msra.mxu0 0
    %4224 = vmatprep.subr.bf16.mxu0 0
    %4225 = vmatpush1.bf16.msra.mxu0 0
    %4226 = vmatprep.subr.bf16.mxu0 0
    %4227 = vmatpush1.bf16.msra.mxu0 0
    %4228 = vmatprep.subr.bf16.mxu0 0
    %4229 = vmatpush1.bf16.msra.mxu0 0
    %4230 = vmatprep.subr.bf16.mxu0 0
    %4231 = vmatpush1.bf16.msra.mxu0 0
    %4232 = vmatprep.subr.bf16.mxu0 0
    %4233 = vmatpush1.bf16.msra.mxu0 0
    %4234 = vmatprep.subr.bf16.mxu0 0
    %4235 = vmatpush1.bf16.msra.mxu0 0
    %4236 = vmatprep.mubr.bf16.mxu0 0
    %4237 = vmatmul.mubr.bf16.gmra.mrb[0].mxu0 %v4154
    %v4238 = vpop.f32.mrb[0].mxu0
    %v4239 = vadd.f32 %v4147, %v4238
    %v4240 = vpop.f32.mrb[0].mxu0
    %v4241 = vpop.f32.mrb[0].mxu0
    %v4242 = vpop.f32.mrb[0].mxu0
    %4243 = vdwg.mxu0
    %v4245 = vrot.slane %v4239, 1
    %v4246 = vrot.slane %v4239, 2
    %v4249 = vadd.f32 %v3625, %v4245
    %v4250 = vadd.f32 %v3626, %v4246
    %v4253 = vrot.slane %v4250, 7
    %v4256 = vsel %vm3575, %v4249, 0.0
    %4257 = vadd.xlane.f32.xlu0 %v4256
    %v4258 = vpop.xlane.xlu0 %4257
    %v4259 = vsel %vm3355, %v4253, 0.0
    %4260 = vadd.xlane.f32.xlu0 %v4259
    %v4261 = vpop.xlane.xlu0 %4260
    %v4262 = vmul.f32 %v4258, 0.03125
    %v4263 = vmul.f32 %v4261, 0.03125
    %v4264 = vmul.f32 %v4249, %v4249
    %v4265 = vmul.f32 %v4250, %v4250
    %v4268 = vrot.slane %v4265, 7
    %v4271 = vsel %vm3575, %v4264, 0.0
    %4272 = vadd.xlane.f32.xlu0 %v4271
    %v4273 = vpop.xlane.xlu0 %4272
    %v4274 = vsel %vm3355, %v4268, 0.0
    %4275 = vadd.xlane.f32.xlu0 %v4274
    %v4276 = vpop.xlane.xlu0 %4275
    %v4277 = vmul.f32 %v4273, 0.03125
    %v4278 = vmul.f32 %v4276, 0.03125
    %v4279 = vmul.f32 %v4262, %v4262
    %v4280 = vmul.f32 %v4263, %v4263
    %v4281 = vsub.f32 %v4277, %v4279
    %v4282 = vsub.f32 %v4278, %v4280
    %v4285 = vrot.slane %v4263, 1
    %v4288 = vsub.f32 %v4249, %v4262
    %v4289 = vsub.f32 %v4250, %v4285
    %v4290 = vadd.f32 %v4281, 1e-05
    %v4291 = vadd.f32 %v4282, 1e-05
    %v4292 = vrsqrt.pop %v4290
    %v4293 = vrsqrt.pop %v4291
    %v4296 = vrot.slane %v4293, 1
    %v4299 = vmul.f32 %v4288, %v4292
    %v4300 = vmul.f32 %v4289, %v4296
    %v4301 = vld [vmem:[#allocation7 + $0x4c] ss:$0 sm:$0xff]
    %v4302 = vmul.f32 %v4299, %v4301
    %v4303 = vmul.f32 %v4300, %v4301
    %v4304 = vld [vmem:[#allocation7 + $0x4d] ss:$0 sm:$0xff]
    %v4305 = vadd.f32 %v4302, %v4304
    %v4306 = vadd.f32 %v4303, %v4304
    %s4307 = scalar_lea.vmem [#allocation4], 1536
    %v4308 = vld [vmem:[%s4307] sm:$0xff]
    %v4309 = vld [vmem:[%s4307 + $0xc] sm:$0xff]
    %v4310 = vld [vmem:[%s4307 + $0x18] sm:$0xff]
    %v4311 = vld [vmem:[%s4307 + $0x24] sm:$0xff]
    %v4312 = vld [vmem:[%s4307 + $0x30] sm:$0xff]
    %v4313 = vld [vmem:[%s4307 + $0x3c] sm:$0xff]
    %v4314 = vld [vmem:[%s4307 + $0x48] sm:$0xff]
    %v4315 = vld [vmem:[%s4307 + $0x54] sm:$0xff]
    %v4316 = vld [vmem:[%s4307 + $0x60] sm:$0xff]
    %v4317 = vld [vmem:[%s4307 + $0x6c] sm:$0xff]
    %v4318 = vld [vmem:[%s4307 + $0x78] sm:$0xff]
    %v4319 = vld [vmem:[%s4307 + $0x84] sm:$0xff]
    %v4320 = vld [vmem:[%s4307 + $0x90] sm:$0xff]
    %v4321 = vld [vmem:[%s4307 + $0x9c] sm:$0xff]
    %v4322 = vld [vmem:[%s4307 + $0xa8] sm:$0xff]
    %v4323 = vld [vmem:[%s4307 + $0xb4] sm:$0xff]
    %v4324 = vpack.c.bf16 %v4305, %v4305
    %v4325 = vpack.c.bf16 %v4306, %v4306
    %s4326 = scalar_lea.vmem [#allocation7], 78
    %v4327 = vld [vmem:[%s4326] ss:$8 sm:$0x3]
    %v4329 = vlaneseq
    %v4330 = vshrl.u32 %v4329, 7
    %v4331 = vsub.s32 0, %v4330
    %v4332 = vrot.slane %v4327, %v4331
    %v4333 = vlaneseq
    %v4334 = vshrl.u32 %v4333, 7
    %v4335 = vsub.s32 1, %v4334
    %v4336 = vrot.slane %v4327, %v4335
    %v4341 = vunpack.c.l.b16 %v4324
    %v4342 = vunpack.c.l.b16 %v4325
    %v4343 = vrot.slane %v4341, 7
    %v4344 = vrot.slane %v4342, 6
    %v4345 = vsel %vm2961, %v4344, %v4343
    %v4346 = vpack.c.b16 %v4345, %v4345
    %v4364 = vunpack.c.l.b16 %v4308
    %v4365 = vunpack.c.h.b16 %v4308
    %v4366 = vunpack.c.l.b16 %v4309
    %v4367 = vunpack.c.h.b16 %v4309
    %v4368 = vunpack.c.l.b16 %v4310
    %v4369 = vunpack.c.h.b16 %v4310
    %v4370 = vunpack.c.l.b16 %v4311
    %v4371 = vunpack.c.h.b16 %v4311
    %v4372 = vunpack.c.l.b16 %v4312
    %v4373 = vunpack.c.h.b16 %v4312
    %v4374 = vunpack.c.l.b16 %v4313
    %v4375 = vunpack.c.h.b16 %v4313
    %v4376 = vunpack.c.l.b16 %v4314
    %v4377 = vunpack.c.h.b16 %v4314
    %v4378 = vunpack.c.l.b16 %v4315
    %v4379 = vunpack.c.h.b16 %v4315
    %v4380 = vunpack.c.l.b16 %v4316
    %v4381 = vunpack.c.h.b16 %v4316
    %v4382 = vunpack.c.l.b16 %v4317
    %v4383 = vunpack.c.h.b16 %v4317
    %v4384 = vunpack.c.l.b16 %v4318
    %v4385 = vunpack.c.h.b16 %v4318
    %v4386 = vunpack.c.l.b16 %v4319
    %v4387 = vunpack.c.h.b16 %v4319
    %v4388 = vunpack.c.l.b16 %v4320
    %v4389 = vunpack.c.h.b16 %v4320
    %v4390 = vunpack.c.l.b16 %v4321
    %v4391 = vunpack.c.h.b16 %v4321
    %v4392 = vunpack.c.l.b16 %v4322
    %v4393 = vunpack.c.h.b16 %v4322
    %v4394 = vunpack.c.l.b16 %v4323
    %v4395 = vunpack.c.h.b16 %v4323
    %v4396 = vpack.c.b16 %v4366, %v4364
    %v4397 = vpack.c.b16 %v4367, %v4365
    %v4398 = vpack.c.b16 %v4370, %v4368
    %v4399 = vpack.c.b16 %v4371, %v4369
    %v4400 = vpack.c.b16 %v4374, %v4372
    %v4401 = vpack.c.b16 %v4375, %v4373
    %v4402 = vpack.c.b16 %v4378, %v4376
    %v4403 = vpack.c.b16 %v4379, %v4377
    %v4404 = vpack.c.b16 %v4382, %v4380
    %v4405 = vpack.c.b16 %v4383, %v4381
    %v4406 = vpack.c.b16 %v4386, %v4384
    %v4407 = vpack.c.b16 %v4387, %v4385
    %v4408 = vpack.c.b16 %v4390, %v4388
    %v4409 = vpack.c.b16 %v4391, %v4389
    %v4410 = vpack.c.b16 %v4394, %v4392
    %v4411 = vpack.c.b16 %v4395, %v4393
    %4428 = vmatprep.subr.bf16.mxu0 %v4397
    %4429 = vmatpush1.bf16.msra.mxu0 %v4396
    %4430 = vmatprep.subr.bf16.mxu0 %v4399
    %4431 = vmatpush1.bf16.msra.mxu0 %v4398
    %4432 = vmatprep.subr.bf16.mxu0 %v4401
    %4433 = vmatpush1.bf16.msra.mxu0 %v4400
    %4434 = vmatprep.subr.bf16.mxu0 %v4403
    %4435 = vmatpush1.bf16.msra.mxu0 %v4402
    %4436 = vmatprep.subr.bf16.mxu0 %v4405
    %4437 = vmatpush1.bf16.msra.mxu0 %v4404
    %4438 = vmatprep.subr.bf16.mxu0 %v4407
    %4439 = vmatpush1.bf16.msra.mxu0 %v4406
    %4440 = vmatprep.subr.bf16.mxu0 %v4409
    %4441 = vmatpush1.bf16.msra.mxu0 %v4408
    %4442 = vmatprep.subr.bf16.mxu0 %v4411
    %4443 = vmatpush1.bf16.msra.mxu0 %v4410
    %4444 = vmatprep.subr.bf16.mxu0 0
    %4445 = vmatpush1.bf16.msra.mxu0 0
    %4446 = vmatprep.subr.bf16.mxu0 0
    %4447 = vmatpush1.bf16.msra.mxu0 0
    %4448 = vmatprep.subr.bf16.mxu0 0
    %4449 = vmatpush1.bf16.msra.mxu0 0
    %4450 = vmatprep.subr.bf16.mxu0 0
    %4451 = vmatpush1.bf16.msra.mxu0 0
    %4452 = vmatprep.subr.bf16.mxu0 0
    %4453 = vmatpush1.bf16.msra.mxu0 0
    %4454 = vmatprep.subr.bf16.mxu0 0
    %4455 = vmatpush1.bf16.msra.mxu0 0
    %4456 = vmatprep.subr.bf16.mxu0 0
    %4457 = vmatpush1.bf16.msra.mxu0 0
    %4458 = vmatprep.subr.bf16.mxu0 0
    %4459 = vmatpush1.bf16.msra.mxu0 0
    %4460 = vmatprep.mubr.bf16.mxu0 0
    %4461 = vmatmul.mubr.bf16.gmra.mrb[0].mxu0 %v4346
    %v4462 = vpop.f32.mrb[0].mxu0
    %v4463 = vadd.f32 %v4332, %v4462
    %v4464 = vpop.f32.mrb[0].mxu0
    %v4465 = vadd.f32 %v4336, %v4464
    %v4466 = vpop.f32.mrb[0].mxu0
    %v4467 = vpop.f32.mrb[0].mxu0
    %4468 = vdwg.mxu0
    %v4469 = vmax.f32 %v4463, 0.0
    %v4470 = vmax.f32 %v4465, 0.0
    %s4471 = scalar_lea.vmem [#allocation6], 256
    %v4472 = vld [vmem:[%s4471] sm:$0xf]
    %v4473 = vld [vmem:[%s4471 + $0x4] sm:$0xf]
    %v4474 = vld [vmem:[%s4471 + $0x8] sm:$0xf]
    %v4475 = vld [vmem:[%s4471 + $0xc] sm:$0xf]
    %v4476 = vld [vmem:[%s4471 + $0x10] sm:$0xf]
    %v4477 = vld [vmem:[%s4471 + $0x14] sm:$0xf]
    %v4478 = vld [vmem:[%s4471 + $0x18] sm:$0xf]
    %v4479 = vld [vmem:[%s4471 + $0x1c] sm:$0xf]
    %v4480 = vld [vmem:[%s4471 + $0x20] sm:$0xf]
    %v4481 = vld [vmem:[%s4471 + $0x24] sm:$0xf]
    %v4482 = vld [vmem:[%s4471 + $0x28] sm:$0xf]
    %v4483 = vld [vmem:[%s4471 + $0x2c] sm:$0xf]
    %v4484 = vld [vmem:[%s4471 + $0x30] sm:$0xf]
    %v4485 = vld [vmem:[%s4471 + $0x34] sm:$0xf]
    %v4486 = vld [vmem:[%s4471 + $0x38] sm:$0xf]
    %v4487 = vld [vmem:[%s4471 + $0x3c] sm:$0xf]
    %v4488 = vld [vmem:[%s4471 + $0x40] sm:$0xf]
    %v4489 = vld [vmem:[%s4471 + $0x44] sm:$0xf]
    %v4490 = vld [vmem:[%s4471 + $0x48] sm:$0xf]
    %v4491 = vld [vmem:[%s4471 + $0x4c] sm:$0xf]
    %v4492 = vld [vmem:[%s4471 + $0x50] sm:$0xf]
    %v4493 = vld [vmem:[%s4471 + $0x54] sm:$0xf]
    %v4494 = vld [vmem:[%s4471 + $0x58] sm:$0xf]
    %v4495 = vld [vmem:[%s4471 + $0x5c] sm:$0xf]
    %v4496 = vld [vmem:[%s4471 + $0x60] sm:$0xf]
    %v4497 = vld [vmem:[%s4471 + $0x64] sm:$0xf]
    %v4498 = vld [vmem:[%s4471 + $0x68] sm:$0xf]
    %v4499 = vld [vmem:[%s4471 + $0x6c] sm:$0xf]
    %v4500 = vld [vmem:[%s4471 + $0x70] sm:$0xf]
    %v4501 = vld [vmem:[%s4471 + $0x74] sm:$0xf]
    %v4502 = vld [vmem:[%s4471 + $0x78] sm:$0xf]
    %v4503 = vld [vmem:[%s4471 + $0x7c] sm:$0xf]
    %v4504 = vpack.c.bf16 %v4469, %v4469
    %v4505 = vpack.c.bf16 %v4470, %v4470
    %v4506 = vld [vmem:[#allocation7 + $0x4f] ss:$0 sm:$0xff]
    %v4539 = vunpack.c.l.b16 %v4472
    %v4540 = vunpack.c.l.b16 %v4473
    %v4541 = vunpack.c.l.b16 %v4474
    %v4542 = vunpack.c.l.b16 %v4475
    %v4543 = vunpack.c.l.b16 %v4476
    %v4544 = vunpack.c.l.b16 %v4477
    %v4545 = vunpack.c.l.b16 %v4478
    %v4546 = vunpack.c.l.b16 %v4479
    %v4547 = vunpack.c.l.b16 %v4480
    %v4548 = vunpack.c.l.b16 %v4481
    %v4549 = vunpack.c.l.b16 %v4482
    %v4550 = vunpack.c.l.b16 %v4483
    %v4551 = vunpack.c.l.b16 %v4484
    %v4552 = vunpack.c.l.b16 %v4485
    %v4553 = vunpack.c.l.b16 %v4486
    %v4554 = vunpack.c.l.b16 %v4487
    %v4555 = vunpack.c.l.b16 %v4488
    %v4556 = vunpack.c.l.b16 %v4489
    %v4557 = vunpack.c.l.b16 %v4490
    %v4558 = vunpack.c.l.b16 %v4491
    %v4559 = vunpack.c.l.b16 %v4492
    %v4560 = vunpack.c.l.b16 %v4493
    %v4561 = vunpack.c.l.b16 %v4494
    %v4562 = vunpack.c.l.b16 %v4495
    %v4563 = vunpack.c.l.b16 %v4496
    %v4564 = vunpack.c.l.b16 %v4497
    %v4565 = vunpack.c.l.b16 %v4498
    %v4566 = vunpack.c.l.b16 %v4499
    %v4567 = vunpack.c.l.b16 %v4500
    %v4568 = vunpack.c.l.b16 %v4501
    %v4569 = vunpack.c.l.b16 %v4502
    %v4570 = vunpack.c.l.b16 %v4503
    %v4571 = vpack.c.b16 %v4540, %v4539
    %v4572 = vpack.c.b16 %v4542, %v4541
    %v4573 = vpack.c.b16 %v4544, %v4543
    %v4574 = vpack.c.b16 %v4546, %v4545
    %v4575 = vpack.c.b16 %v4548, %v4547
    %v4576 = vpack.c.b16 %v4550, %v4549
    %v4577 = vpack.c.b16 %v4552, %v4551
    %v4578 = vpack.c.b16 %v4554, %v4553
    %v4579 = vpack.c.b16 %v4556, %v4555
    %v4580 = vpack.c.b16 %v4558, %v4557
    %v4581 = vpack.c.b16 %v4560, %v4559
    %v4582 = vpack.c.b16 %v4562, %v4561
    %v4583 = vpack.c.b16 %v4564, %v4563
    %v4584 = vpack.c.b16 %v4566, %v4565
    %v4585 = vpack.c.b16 %v4568, %v4567
    %v4586 = vpack.c.b16 %v4570, %v4569
    %4603 = vmatprep.subr.bf16.mxu0 0
    %4604 = vmatpush1.bf16.msra.mxu0 %v4571
    %4605 = vmatprep.subr.bf16.mxu0 0
    %4606 = vmatpush1.bf16.msra.mxu0 %v4572
    %4607 = vmatprep.subr.bf16.mxu0 0
    %4608 = vmatpush1.bf16.msra.mxu0 %v4573
    %4609 = vmatprep.subr.bf16.mxu0 0
    %4610 = vmatpush1.bf16.msra.mxu0 %v4574
    %4611 = vmatprep.subr.bf16.mxu0 0
    %4612 = vmatpush1.bf16.msra.mxu0 %v4575
    %4613 = vmatprep.subr.bf16.mxu0 0
    %4614 = vmatpush1.bf16.msra.mxu0 %v4576
    %4615 = vmatprep.subr.bf16.mxu0 0
    %4616 = vmatpush1.bf16.msra.mxu0 %v4577
    %4617 = vmatprep.subr.bf16.mxu0 0
    %4618 = vmatpush1.bf16.msra.mxu0 %v4578
    %4619 = vmatprep.subr.bf16.mxu0 0
    %4620 = vmatpush1.bf16.msra.mxu0 %v4579
    %4621 = vmatprep.subr.bf16.mxu0 0
    %4622 = vmatpush1.bf16.msra.mxu0 %v4580
    %4623 = vmatprep.subr.bf16.mxu0 0
    %4624 = vmatpush1.bf16.msra.mxu0 %v4581
    %4625 = vmatprep.subr.bf16.mxu0 0
    %4626 = vmatpush1.bf16.msra.mxu0 %v4582
    %4627 = vmatprep.subr.bf16.mxu0 0
    %4628 = vmatpush1.bf16.msra.mxu0 %v4583
    %4629 = vmatprep.subr.bf16.mxu0 0
    %4630 = vmatpush1.bf16.msra.mxu0 %v4584
    %4631 = vmatprep.subr.bf16.mxu0 0
    %4632 = vmatpush1.bf16.msra.mxu0 %v4585
    %4633 = vmatprep.subr.bf16.mxu0 0
    %4634 = vmatpush1.bf16.msra.mxu0 %v4586
    %4635 = vmatprep.mubr.bf16.mxu0 %v4505
    %4636 = vmatmul.mubr.bf16.gmra.mrb[0].mxu0 %v4504
    %v4637 = vpop.f32.mrb[0].mxu0
    %v4638 = vadd.f32 %v4506, %v4637
    %v4639 = vpop.f32.mrb[0].mxu0
    %v4640 = vpop.f32.mrb[0].mxu0
    %v4641 = vpop.f32.mrb[0].mxu0
    %4642 = vdwg.mxu0
    %v4644 = vrot.slane %v4638, 1
    %v4645 = vrot.slane %v4638, 2
    %v4648 = vadd.f32 %v4305, %v4644
    %v4649 = vadd.f32 %v4306, %v4645
    %v4652 = vrot.slane %v4649, 7
    %v4655 = vsel %vm3575, %v4648, 0.0
    %4656 = vadd.xlane.f32.xlu0 %v4655
    %v4657 = vpop.xlane.xlu0 %4656
    %v4658 = vsel %vm3355, %v4652, 0.0
    %4659 = vadd.xlane.f32.xlu0 %v4658
    %v4660 = vpop.xlane.xlu0 %4659
    %v4661 = vmul.f32 %v4657, 0.03125
    %v4662 = vmul.f32 %v4660, 0.03125
    %v4663 = vmul.f32 %v4648, %v4648
    %v4664 = vmul.f32 %v4649, %v4649
    %v4667 = vrot.slane %v4664, 7
    %v4670 = vsel %vm3575, %v4663, 0.0
    %4671 = vadd.xlane.f32.xlu0 %v4670
    %v4672 = vpop.xlane.xlu0 %4671
    %v4673 = vsel %vm3355, %v4667, 0.0
    %4674 = vadd.xlane.f32.xlu0 %v4673
    %v4675 = vpop.xlane.xlu0 %4674
    %v4676 = vmul.f32 %v4672, 0.03125
    %v4677 = vmul.f32 %v4675, 0.03125
    %v4678 = vmul.f32 %v4661, %v4661
    %v4679 = vmul.f32 %v4662, %v4662
    %v4680 = vsub.f32 %v4676, %v4678
    %v4681 = vsub.f32 %v4677, %v4679
    %v4684 = vrot.slane %v4662, 1
    %v4687 = vsub.f32 %v4648, %v4661
    %v4688 = vsub.f32 %v4649, %v4684
    %v4689 = vadd.f32 %v4680, 1e-05
    %v4690 = vadd.f32 %v4681, 1e-05
    %v4691 = vrsqrt.pop %v4689
    %v4692 = vrsqrt.pop %v4690
    %v4695 = vrot.slane %v4692, 1
    %v4698 = vmul.f32 %v4687, %v4691
    %v4699 = vmul.f32 %v4688, %v4695
    %v4700 = vld [vmem:[#allocation7 + $0x60] ss:$0 sm:$0xff]
    %v4701 = vmul.f32 %v4698, %v4700
    %v4702 = vmul.f32 %v4699, %v4700
    %v4703 = vld [vmem:[#allocation7 + $0x61] ss:$0 sm:$0xff]
    %v4704 = vadd.f32 %v4701, %v4703
    %v4705 = vadd.f32 %v4702, %v4703
    %s4706 = scalar_lea.vmem [#allocation4], 1728
    %v4707 = vld [vmem:[%s4706] sm:$0xff]
    %v4708 = vld [vmem:[%s4706 + $0xc] sm:$0xff]
    %v4709 = vld [vmem:[%s4706 + $0x18] sm:$0xff]
    %v4710 = vld [vmem:[%s4706 + $0x24] sm:$0xff]
    %v4711 = vld [vmem:[%s4706 + $0x30] sm:$0xff]
    %v4712 = vld [vmem:[%s4706 + $0x3c] sm:$0xff]
    %v4713 = vld [vmem:[%s4706 + $0x48] sm:$0xff]
    %v4714 = vld [vmem:[%s4706 + $0x54] sm:$0xff]
    %v4715 = vld [vmem:[%s4706 + $0x60] sm:$0xff]
    %v4716 = vld [vmem:[%s4706 + $0x6c] sm:$0xff]
    %v4717 = vld [vmem:[%s4706 + $0x78] sm:$0xff]
    %v4718 = vld [vmem:[%s4706 + $0x84] sm:$0xff]
    %v4719 = vld [vmem:[%s4706 + $0x90] sm:$0xff]
    %v4720 = vld [vmem:[%s4706 + $0x9c] sm:$0xff]
    %v4721 = vld [vmem:[%s4706 + $0xa8] sm:$0xff]
    %v4722 = vld [vmem:[%s4706 + $0xb4] sm:$0xff]
    %v4723 = vpack.c.bf16 %v4704, %v4704
    %v4724 = vpack.c.bf16 %v4705, %v4705
    %s4725 = scalar_lea.vmem [#allocation7], 98
    %v4726 = vld [vmem:[%s4725] ss:$8 sm:$0x3]
    %v4728 = vlaneseq
    %v4729 = vshrl.u32 %v4728, 7
    %v4730 = vsub.s32 0, %v4729
    %v4731 = vrot.slane %v4726, %v4730
    %v4732 = vlaneseq
    %v4733 = vshrl.u32 %v4732, 7
    %v4734 = vsub.s32 1, %v4733
    %v4735 = vrot.slane %v4726, %v4734
    %v4740 = vunpack.c.l.b16 %v4723
    %v4741 = vunpack.c.l.b16 %v4724
    %v4742 = vrot.slane %v4740, 7
    %v4743 = vrot.slane %v4741, 6
    %v4744 = vsel %vm2961, %v4743, %v4742
    %v4745 = vpack.c.b16 %v4744, %v4744
    %v4763 = vunpack.c.l.b16 %v4707
    %v4764 = vunpack.c.h.b16 %v4707
    %v4765 = vunpack.c.l.b16 %v4708
    %v4766 = vunpack.c.h.b16 %v4708
    %v4767 = vunpack.c.l.b16 %v4709
    %v4768 = vunpack.c.h.b16 %v4709
    %v4769 = vunpack.c.l.b16 %v4710
    %v4770 = vunpack.c.h.b16 %v4710
    %v4771 = vunpack.c.l.b16 %v4711
    %v4772 = vunpack.c.h.b16 %v4711
    %v4773 = vunpack.c.l.b16 %v4712
    %v4774 = vunpack.c.h.b16 %v4712
    %v4775 = vunpack.c.l.b16 %v4713
    %v4776 = vunpack.c.h.b16 %v4713
    %v4777 = vunpack.c.l.b16 %v4714
    %v4778 = vunpack.c.h.b16 %v4714
    %v4779 = vunpack.c.l.b16 %v4715
    %v4780 = vunpack.c.h.b16 %v4715
    %v4781 = vunpack.c.l.b16 %v4716
    %v4782 = vunpack.c.h.b16 %v4716
    %v4783 = vunpack.c.l.b16 %v4717
    %v4784 = vunpack.c.h.b16 %v4717
    %v4785 = vunpack.c.l.b16 %v4718
    %v4786 = vunpack.c.h.b16 %v4718
    %v4787 = vunpack.c.l.b16 %v4719
    %v4788 = vunpack.c.h.b16 %v4719
    %v4789 = vunpack.c.l.b16 %v4720
    %v4790 = vunpack.c.h.b16 %v4720
    %v4791 = vunpack.c.l.b16 %v4721
    %v4792 = vunpack.c.h.b16 %v4721
    %v4793 = vunpack.c.l.b16 %v4722
    %v4794 = vunpack.c.h.b16 %v4722
    %v4795 = vpack.c.b16 %v4765, %v4763
    %v4796 = vpack.c.b16 %v4766, %v4764
    %v4797 = vpack.c.b16 %v4769, %v4767
    %v4798 = vpack.c.b16 %v4770, %v4768
    %v4799 = vpack.c.b16 %v4773, %v4771
    %v4800 = vpack.c.b16 %v4774, %v4772
    %v4801 = vpack.c.b16 %v4777, %v4775
    %v4802 = vpack.c.b16 %v4778, %v4776
    %v4803 = vpack.c.b16 %v4781, %v4779
    %v4804 = vpack.c.b16 %v4782, %v4780
    %v4805 = vpack.c.b16 %v4785, %v4783
    %v4806 = vpack.c.b16 %v4786, %v4784
    %v4807 = vpack.c.b16 %v4789, %v4787
    %v4808 = vpack.c.b16 %v4790, %v4788
    %v4809 = vpack.c.b16 %v4793, %v4791
    %v4810 = vpack.c.b16 %v4794, %v4792
    %4827 = vmatprep.subr.bf16.mxu0 %v4796
    %4828 = vmatpush1.bf16.msra.mxu0 %v4795
    %4829 = vmatprep.subr.bf16.mxu0 %v4798
    %4830 = vmatpush1.bf16.msra.mxu0 %v4797
    %4831 = vmatprep.subr.bf16.mxu0 %v4800
    %4832 = vmatpush1.bf16.msra.mxu0 %v4799
    %4833 = vmatprep.subr.bf16.mxu0 %v4802
    %4834 = vmatpush1.bf16.msra.mxu0 %v4801
    %4835 = vmatprep.subr.bf16.mxu0 %v4804
    %4836 = vmatpush1.bf16.msra.mxu0 %v4803
    %4837 = vmatprep.subr.bf16.mxu0 %v4806
    %4838 = vmatpush1.bf16.msra.mxu0 %v4805
    %4839 = vmatprep.subr.bf16.mxu0 %v4808
    %4840 = vmatpush1.bf16.msra.mxu0 %v4807
    %4841 = vmatprep.subr.bf16.mxu0 %v4810
    %4842 = vmatpush1.bf16.msra.mxu0 %v4809
    %4843 = vmatprep.subr.bf16.mxu0 0
    %4844 = vmatpush1.bf16.msra.mxu0 0
    %4845 = vmatprep.subr.bf16.mxu0 0
    %4846 = vmatpush1.bf16.msra.mxu0 0
    %4847 = vmatprep.subr.bf16.mxu0 0
    %4848 = vmatpush1.bf16.msra.mxu0 0
    %4849 = vmatprep.subr.bf16.mxu0 0
    %4850 = vmatpush1.bf16.msra.mxu0 0
    %4851 = vmatprep.subr.bf16.mxu0 0
    %4852 = vmatpush1.bf16.msra.mxu0 0
    %4853 = vmatprep.subr.bf16.mxu0 0
    %4854 = vmatpush1.bf16.msra.mxu0 0
    %4855 = vmatprep.subr.bf16.mxu0 0
    %4856 = vmatpush1.bf16.msra.mxu0 0
    %4857 = vmatprep.subr.bf16.mxu0 0
    %4858 = vmatpush1.bf16.msra.mxu0 0
    %4859 = vmatprep.mubr.bf16.mxu0 0
    %4860 = vmatmul.mubr.bf16.gmra.mrb[0].mxu0 %v4745
    %v4861 = vpop.f32.mrb[0].mxu0
    %v4862 = vadd.f32 %v4731, %v4861
    %v4863 = vpop.f32.mrb[0].mxu0
    %v4864 = vadd.f32 %v4735, %v4863
    %v4865 = vpop.f32.mrb[0].mxu0
    %v4866 = vpop.f32.mrb[0].mxu0
    %4867 = vdwg.mxu0
    %v4868 = vld [vmem:[%s2] sm:$0x3]
    %v4869 = vmul.f32 %v4864, 0.5
    %v4870 = vmul.f32 %v4869, 1.442695
    %v4871 = vpow.pop %v4870
    %v4872 = vmul.f32 %v4868, %v4871
    %v4873 = vadd.f32 %v4862, %v4872
    %s4874 = scalar_lea.vmem [#allocation2], 512
    %v4875 = vld [vmem:[%s4874] sm:$0xf]
    %v4876 = vld [vmem:[%s4874 + $0x4] sm:$0xf]
    %v4877 = vld [vmem:[%s4874 + $0x8] sm:$0xf]
    %v4878 = vld [vmem:[%s4874 + $0xc] sm:$0xf]
    %v4879 = vld [vmem:[%s4874 + $0x10] sm:$0xf]
    %v4880 = vld [vmem:[%s4874 + $0x14] sm:$0xf]
    %v4881 = vld [vmem:[%s4874 + $0x18] sm:$0xf]
    %v4882 = vld [vmem:[%s4874 + $0x1c] sm:$0xf]
    %v4883 = vld [vmem:[%s4874 + $0x20] sm:$0xf]
    %v4884 = vld [vmem:[%s4874 + $0x24] sm:$0xf]
    %v4885 = vld [vmem:[%s4874 + $0x28] sm:$0xf]
    %v4886 = vld [vmem:[%s4874 + $0x2c] sm:$0xf]
    %v4887 = vld [vmem:[%s4874 + $0x30] sm:$0xf]
    %v4888 = vld [vmem:[%s4874 + $0x34] sm:$0xf]
    %v4889 = vld [vmem:[%s4874 + $0x38] sm:$0xf]
    %v4890 = vld [vmem:[%s4874 + $0x3c] sm:$0xf]
    %v4891 = vpack.c.bf16 %v4873, %v4873
    %v4892 = vld [vmem:[#allocation7 + $0x63] ss:$0 sm:$0xff]
    %v4909 = vunpack.c.l.b16 %v4875
    %v4910 = vunpack.c.l.b16 %v4876
    %v4911 = vunpack.c.l.b16 %v4877
    %v4912 = vunpack.c.l.b16 %v4878
    %v4913 = vunpack.c.l.b16 %v4879
    %v4914 = vunpack.c.l.b16 %v4880
    %v4915 = vunpack.c.l.b16 %v4881
    %v4916 = vunpack.c.l.b16 %v4882
    %v4917 = vunpack.c.l.b16 %v4883
    %v4918 = vunpack.c.l.b16 %v4884
    %v4919 = vunpack.c.l.b16 %v4885
    %v4920 = vunpack.c.l.b16 %v4886
    %v4921 = vunpack.c.l.b16 %v4887
    %v4922 = vunpack.c.l.b16 %v4888
    %v4923 = vunpack.c.l.b16 %v4889
    %v4924 = vunpack.c.l.b16 %v4890
    %v4925 = vpack.c.b16 %v4910, %v4909
    %v4926 = vpack.c.b16 %v4912, %v4911
    %v4927 = vpack.c.b16 %v4914, %v4913
    %v4928 = vpack.c.b16 %v4916, %v4915
    %v4929 = vpack.c.b16 %v4918, %v4917
    %v4930 = vpack.c.b16 %v4920, %v4919
    %v4931 = vpack.c.b16 %v4922, %v4921
    %v4932 = vpack.c.b16 %v4924, %v4923
    %4941 = vmatprep.subr.bf16.mxu0 0
    %4942 = vmatpush1.bf16.msra.mxu0 %v4925
    %4943 = vmatprep.subr.bf16.mxu0 0
    %4944 = vmatpush1.bf16.msra.mxu0 %v4926
    %4945 = vmatprep.subr.bf16.mxu0 0
    %4946 = vmatpush1.bf16.msra.mxu0 %v4927
    %4947 = vmatprep.subr.bf16.mxu0 0
    %4948 = vmatpush1.bf16.msra.mxu0 %v4928
    %4949 = vmatprep.subr.bf16.mxu0 0
    %4950 = vmatpush1.bf16.msra.mxu0 %v4929
    %4951 = vmatprep.subr.bf16.mxu0 0
    %4952 = vmatpush1.bf16.msra.mxu0 %v4930
    %4953 = vmatprep.subr.bf16.mxu0 0
    %4954 = vmatpush1.bf16.msra.mxu0 %v4931
    %4955 = vmatprep.subr.bf16.mxu0 0
    %4956 = vmatpush1.bf16.msra.mxu0 %v4932
    %4957 = vmatprep.subr.bf16.mxu0 0
    %4958 = vmatpush1.bf16.msra.mxu0 0
    %4959 = vmatprep.subr.bf16.mxu0 0
    %4960 = vmatpush1.bf16.msra.mxu0 0
    %4961 = vmatprep.subr.bf16.mxu0 0
    %4962 = vmatpush1.bf16.msra.mxu0 0
    %4963 = vmatprep.subr.bf16.mxu0 0
    %4964 = vmatpush1.bf16.msra.mxu0 0
    %4965 = vmatprep.subr.bf16.mxu0 0
    %4966 = vmatpush1.bf16.msra.mxu0 0
    %4967 = vmatprep.subr.bf16.mxu0 0
    %4968 = vmatpush1.bf16.msra.mxu0 0
    %4969 = vmatprep.subr.bf16.mxu0 0
    %4970 = vmatpush1.bf16.msra.mxu0 0
    %4971 = vmatprep.subr.bf16.mxu0 0
    %4972 = vmatpush1.bf16.msra.mxu0 0
    %4973 = vmatprep.mubr.bf16.mxu0 0
    %4974 = vmatmul.mubr.bf16.gmra.mrb[0].mxu0 %v4891
    %v4975 = vpop.f32.mrb[0].mxu0
    %v4976 = vadd.f32 %v4892, %v4975
    %v4977 = vpop.f32.mrb[0].mxu0
    %v4978 = vpop.f32.mrb[0].mxu0
    %v4979 = vpop.f32.mrb[0].mxu0
    %4980 = vdwg.mxu0
    %v4981 = vxor.u32 %v4976, 2147483648
    %v4982 = vmul.f32 %v4981, 1.442695
    %v4983 = vpow.pop %v4982
    %v4984 = vadd.f32 %v4983, 1.0
    %v4985 = vrcp.pop %v4984
    %v4986 = vmul.f32 1.0, %v4985
    %4987 = vst [vmem:[%s7] sm:$0x3] %v4986
    %4988 = vst [vmem:[%s7 + $0x2] sm:$0x3] %v4862
    %4989 = vst [vmem:[%s7 + $0x4] sm:$0x3] %v4864
    %4990 = vst [vmem:[%s7 + $0x6] sm:$0x3] 0.0
    // Predicated region
    $region46: #{stad_forward.1} parent=1 // pred_check
      _
    $region47: #{stad_forward.1} parent=1 // pred_check_branch
      %4992 = sbr.rel (0) target = $region49
    $region48: #{stad_forward.1} parent=1 // pred_region
      _
    $region49: #{stad_forward.1} parent=1 // pred_fallthru
      _
    // Predicated region
    $region50: #{stad_forward.1} parent=1 // pred_check
      _
    $region51: #{stad_forward.1} parent=1 // pred_check_branch
      %4994 = sbr.rel (0) target = $region53
    $region52: #{stad_forward.1} parent=1 // pred_region
      _
    $region53: #{stad_forward.1} parent=1 // pred_fallthru
      _
    %4995 = vsyncpa [#allocation3], 1
    %4996 = vsyncpa [#allocation5], 1
    %4997 = vsyncpa [#allocation8], 1

</llo_original>
